<compile_context>
chip_gen: v5e
topology: v5e:2x2
jax: 0.10.0
libtpu: 0.0.40
codegen_flags: <defaults>
</compile_context>

<pallas_src>
import jax
import jax.numpy as jnp
from jax.experimental import pallas as pl
from jax.experimental.pallas import tpu as pltpu

# ----------------------------- model hyper-params ---------------------------
VOCAB_SIZE = 31          # -> vocab_size + 1 = 32 logits
INPUT_ENCODING = 32      # input_encoding_size
RNN_SIZE = 32
ATT_HID = 32             # att_hid_size
FC_FEAT = 64             # fc_feat_size
ATT_FEAT = 64            # att_feat_size
NUM_ATT = 8              # number of attention regions (L)
SEQ_LEN = 8              # seq.shape[1]
BATCH = 2


def _sigmoid_eup(x):
    # EUP-only sigmoid: one tanh per gate instead of exp + add + divide on the VPU.
    return 0.5 * (jnp.tanh(0.5 * x) + 1.0)


# ------------------------------ fused decode kernel -------------------------
def _fused_decode_kernel(
    # SMEM
    act_ref,                                   # (T-1,) int32 per-step active flag
    # VMEM inputs (whole arrays, resident for the entire kernel)
    tok_ref,                                   # ((T-1)*B, 1) int32 tokens
    fc_ref, attf_ref, emb_ref,
    w_fc_ref, b_fc_ref, w_att_ref, b_att_ref,
    w_ctx_ref, b_ctx_ref, w_h2a_ref, b_h2a_ref, w_alpha_ref,
    w_ihx_ref, w_ihfc_ref, w_ihatt_ref, w_hh_ref, b_lstm_ref,
    w_log_ref, b_log_ref,
    # output: (T-1, B, V1) log-prob slab (VMEM resident, written back once)
    out_ref,
):
    f32 = jnp.float32
    nsteps, B, V1 = out_ref.shape
    BL = attf_ref.shape[0]
    L = BL // B
    R = w_fc_ref.shape[1]
    A = w_ctx_ref.shape[1]

    # ---------------- one-time prologue (all former "linear" launches) -------
    # Embedding lookup for every step at once: one-hot (no per-step where chain)
    # followed by a single ((T-1)*B, V1) @ (V1, E) matmul + ReLU.
    lane_iota = jax.lax.broadcasted_iota(jnp.int32, (nsteps * B, V1), 1)
    onehot = (lane_iota == tok_ref[...]).astype(f32)                    # (T-1)*B, V1
    xt_all = jnp.maximum(
        jnp.dot(onehot, emb_ref[...], preferred_element_type=f32), 0.0)  # (T-1)*B, E
    # Gate contribution of xt for every step, hoisted off the recurrent chain.
    gx_all = jnp.dot(xt_all, w_ihx_ref[...], preferred_element_type=f32)  # (T-1)*B, 4R

    # fc_embed + its (step-constant) gate contribution.
    fc_emb = jnp.maximum(
        jnp.dot(fc_ref[...], w_fc_ref[...], preferred_element_type=f32)
        + b_fc_ref[...], 0.0)                                            # (B, R)
    g_base = (jnp.dot(fc_emb, w_ihfc_ref[...], preferred_element_type=f32)
              + b_lstm_ref[...])                                         # (B, 4R)

    # att_embed / ctx2att as flat (B*L, .) matmuls (no per-batch loop).
    att_emb_flat = jnp.maximum(
        jnp.dot(attf_ref[...], w_att_ref[...], preferred_element_type=f32)
        + b_att_ref[...], 0.0)                                           # (B*L, R)
    p_att_flat = (jnp.dot(att_emb_flat, w_ctx_ref[...],
                          preferred_element_type=f32) + b_ctx_ref[...])  # (B*L, A)
    att_emb = att_emb_flat.reshape(B, L, R)
    p_att = p_att_flat.reshape(B, L, A)
    w_alpha = w_alpha_ref[...]                                           # (1, A)

    h = jnp.zeros((B, R), f32)
    c = jnp.zeros((B, R), f32)

    # ---------------- statically unrolled decode loop ------------------------
    for t in range(nsteps):
        # Additive attention over p_att (all operands vreg/VMEM resident).
        att_h = (jnp.dot(h, w_h2a_ref[...], preferred_element_type=f32)
                 + b_h2a_ref[...])                                       # (B, A)
        dot = jnp.tanh(p_att + att_h[:, None, :])                        # (B, L, A)
        e = jnp.sum(dot * w_alpha, axis=-1)                              # (B, L)
        e = e - jnp.max(e, axis=-1, keepdims=True)
        w = jnp.exp(e)
        alpha = w * pl.reciprocal(jnp.sum(w, axis=-1, keepdims=True), approx=True)
        att_res = jnp.sum(alpha[:, :, None] * att_emb, axis=1)           # (B, R)

        # LSTM cell (PyTorch gate order i, f, g, o).  Only the att_res and h
        # matmuls remain on the recurrent critical path; xt / fc_emb gate
        # contributions were precomputed above.
        gates = (gx_all[t * B:(t + 1) * B]
                 + g_base
                 + jnp.dot(att_res, w_ihatt_ref[...], preferred_element_type=f32)
                 + jnp.dot(h, w_hh_ref[...], preferred_element_type=f32))  # (B, 4R)
        i_g = _sigmoid_eup(gates[:, 0:R])
        f_g = _sigmoid_eup(gates[:, R:2 * R])
        g_g = jnp.tanh(gates[:, 2 * R:3 * R])
        o_g = _sigmoid_eup(gates[:, 3 * R:4 * R])
        c = f_g * c + i_g * g_g
        h = o_g * jnp.tanh(c)

        # logit + exact log_softmax over the vocab axis.
        logits = (jnp.dot(h, w_log_ref[...], preferred_element_type=f32)
                  + b_log_ref[...])                                      # (B, V1)
        m = jnp.max(logits, axis=-1, keepdims=True)
        z = logits - m
        logp = z - jnp.log(jnp.sum(jnp.exp(z), axis=-1, keepdims=True))

        # Torch early-exit: zero rows from the first all-zero token step (i>=1).
        active = act_ref[t] != 0
        out_ref[t] = jnp.where(active, logp, jnp.zeros_like(logp))


# ------------------------------- model driver -------------------------------
def init_params(key):
    ks = jax.random.split(key, 12)
    s = 0.02
    V1 = VOCAB_SIZE + 1
    E = INPUT_ENCODING
    R = RNN_SIZE
    A = ATT_HID
    return {
        # nn.Embedding(vocab+1, input_encoding_size)
        "emb": s * jax.random.normal(ks[0], (V1, E), jnp.float32),
        # fc_embed / att_embed / ctx2att / logit (weights stored as (in, out))
        "w_fc": s * jax.random.normal(ks[1], (FC_FEAT, R), jnp.float32),
        "b_fc": jnp.zeros((1, R), jnp.float32),
        "w_att": s * jax.random.normal(ks[2], (ATT_FEAT, R), jnp.float32),
        "b_att": jnp.zeros((1, R), jnp.float32),
        "w_ctx2att": s * jax.random.normal(ks[3], (R, A), jnp.float32),
        "b_ctx2att": jnp.zeros((1, A), jnp.float32),
        "w_logit": s * jax.random.normal(ks[4], (R, V1), jnp.float32),
        "b_logit": jnp.zeros((1, V1), jnp.float32),
        # core (attention + LSTMCell stand-in; see TODO(synk) above)
        "w_h2att": s * jax.random.normal(ks[5], (R, A), jnp.float32),
        "b_h2att": jnp.zeros((1, A), jnp.float32),
        "w_alpha": s * jax.random.normal(ks[6], (1, A), jnp.float32),
        # LSTM input weights pre-split by source (xt / fc_emb / att_res);
        # when importing real LSTMCell weights, these are column slices of
        # weight_ih in the [xt | fc_emb | att_res] concat order and
        # b_lstm = b_ih + b_hh.
        "w_ih_x": s * jax.random.normal(ks[7], (E, 4 * R), jnp.float32),
        "w_ih_fc": s * jax.random.normal(ks[8], (R, 4 * R), jnp.float32),
        "w_ih_att": s * jax.random.normal(ks[9], (R, 4 * R), jnp.float32),
        "w_hh": s * jax.random.normal(ks[10], (R, 4 * R), jnp.float32),
        "b_lstm": jnp.zeros((1, 4 * R), jnp.float32),
    }


@jax.jit
def att_model_forward(params, fc_feats, att_feats, seq):
    """Mirrors AttModel.forward (eval mode). Returns (B, T-1, vocab+1) log-probs."""
    B, _ = fc_feats.shape
    _, L, AF = att_feats.shape
    T = seq.shape[1]
    nsteps = T - 1
    V1 = params["emb"].shape[0]

    # Per-step tokens as a (nsteps*B, 1) column (one-hot built once in-kernel)
    # and per-step active flags reproducing the torch early-exit.
    seq_steps = seq[:, :nsteps].astype(jnp.int32)                    # (B, T-1)
    tok_col = jnp.transpose(seq_steps).reshape(nsteps * B, 1)        # ((T-1)*B, 1)
    tok_sums = jnp.sum(seq_steps, axis=0)                            # (T-1,)
    zero_at = (tok_sums == 0) & (jnp.arange(nsteps) >= 1)
    active = (jnp.cumsum(zero_at.astype(jnp.int32)) == 0).astype(jnp.int32)

    attf_flat = att_feats.reshape(B * L, AF)

    vmem = pl.BlockSpec(memory_space=pltpu.MemorySpace.VMEM)
    smem = pl.BlockSpec(memory_space=pltpu.MemorySpace.SMEM)

    out_tbv = pl.pallas_call(
        _fused_decode_kernel,
        out_shape=jax.ShapeDtypeStruct((nsteps, B, V1), jnp.float32),
        in_specs=[smem] + [vmem] * 20,
        out_specs=vmem,
    )(active, tok_col, fc_feats, attf_flat,
      params["emb"],
      params["w_fc"], params["b_fc"],
      params["w_att"], params["b_att"],
      params["w_ctx2att"], params["b_ctx2att"],
      params["w_h2att"], params["b_h2att"],
      params["w_alpha"],
      params["w_ih_x"], params["w_ih_fc"], params["w_ih_att"],
      params["w_hh"], params["b_lstm"],
      params["w_logit"], params["b_logit"])

    return jnp.transpose(out_tbv, (1, 0, 2))       # (B, T-1, vocab+1)


# ----------------------- pure-JAX reference (eager) --------------------------
def _reference_forward(params, fc_feats, att_feats, seq):
    B = fc_feats.shape[0]
    L = att_feats.shape[1]
    T = seq.shape[1]
    V1 = params["emb"].shape[0]
    R = params["w_fc"].shape[1]
    sig = jax.nn.sigmoid
    fc_emb = jax.nn.relu(fc_feats @ params["w_fc"] + params["b_fc"])
    att_emb = jax.nn.relu(att_feats.reshape(-1, att_feats.shape[-1]) @ params["w_att"]
                          + params["b_att"]).reshape(B, L, R)
    p_att = (att_emb.reshape(-1, R) @ params["w_ctx2att"]
             + params["b_ctx2att"]).reshape(B, L, -1)
    h = jnp.zeros((B, R), jnp.float32)
    c = jnp.zeros((B, R), jnp.float32)
    outs, broke = [], False
    for i in range(T - 1):
        it = seq[:, i]
        if i >= 1 and int(jnp.sum(it)) == 0:
            broke = True
        if broke:
            outs.append(jnp.zeros((B, V1), jnp.float32))
            continue
        xt = jax.nn.relu(params["emb"][it])
        att_h = h @ params["w_h2att"] + params["b_h2att"]
        dot = jnp.tanh(p_att + att_h[:, None, :])
        e = jnp.sum(dot * params["w_alpha"], axis=-1)
        alpha = jax.nn.softmax(e, axis=-1)
        att_res = jnp.sum(alpha[:, :, None] * att_emb, axis=1)
        gates = (xt @ params["w_ih_x"] + fc_emb @ params["w_ih_fc"]
                 + att_res @ params["w_ih_att"] + h @ params["w_hh"]
                 + params["b_lstm"])
        i_g, f_g = sig(gates[:, :R]), sig(gates[:, R:2 * R])
        g_g, o_g = jnp.tanh(gates[:, 2 * R:3 * R]), sig(gates[:, 3 * R:])
        c = f_g * c + i_g * g_g
        h = o_g * jnp.tanh(c)
        logits = h @ params["w_logit"] + params["b_logit"]
        outs.append(jax.nn.log_softmax(logits, axis=-1))
    return jnp.stack(outs, axis=1)


if __name__ == "__main__":
    key = jax.random.PRNGKey(0)
    k_param, k_fc, k_att, k_seq = jax.random.split(key, 4)

    params = init_params(k_param)
    fc_feats = jax.random.normal(k_fc, (BATCH, FC_FEAT), jnp.float32)
    att_feats = jax.random.normal(k_att, (BATCH, NUM_ATT, ATT_FEAT), jnp.float32)
    seq = jax.random.randint(k_seq, (BATCH, SEQ_LEN), 1, VOCAB_SIZE + 1, jnp.int32)

    out = att_model_forward(params, fc_feats, att_feats, seq)
    out = jax.block_until_ready(out)

    assert out.shape == (BATCH, SEQ_LEN - 1, VOCAB_SIZE + 1), out.shape
    assert bool(jnp.all(jnp.isfinite(out)))
    # log_softmax rows must (approximately) sum to 1 in prob space
    row_sums = jnp.sum(jnp.exp(out), axis=-1)
    assert bool(jnp.all(jnp.abs(row_sums - 1.0) < 1e-4))
    # match the pure-JAX reference (approx reciprocal in the attention softmax
    # causes tiny, bounded deviations)
    ref = _reference_forward(params, fc_feats, att_feats, seq)
    assert bool(jnp.allclose(out, ref, atol=1e-2, rtol=1e-2))
    print("KERNEL_OK")
</pallas_src>

<mosaic_0001>
module attributes {stable_mosaic.version = 11 : i64} {
  func.func @_fused_decode_kernel(%arg0: memref<7xi32, #tpu.memory_space<smem>>, %arg1: memref<14x1xi32, #tpu.memory_space<vmem>>, %arg2: memref<2x64xf32, #tpu.memory_space<vmem>>, %arg3: memref<16x64xf32, #tpu.memory_space<vmem>>, %arg4: memref<32x32xf32, #tpu.memory_space<vmem>>, %arg5: memref<64x32xf32, #tpu.memory_space<vmem>>, %arg6: memref<1x32xf32, #tpu.memory_space<vmem>>, %arg7: memref<64x32xf32, #tpu.memory_space<vmem>>, %arg8: memref<1x32xf32, #tpu.memory_space<vmem>>, %arg9: memref<32x32xf32, #tpu.memory_space<vmem>>, %arg10: memref<1x32xf32, #tpu.memory_space<vmem>>, %arg11: memref<32x32xf32, #tpu.memory_space<vmem>>, %arg12: memref<1x32xf32, #tpu.memory_space<vmem>>, %arg13: memref<1x32xf32, #tpu.memory_space<vmem>>, %arg14: memref<32x128xf32, #tpu.memory_space<vmem>>, %arg15: memref<32x128xf32, #tpu.memory_space<vmem>>, %arg16: memref<32x128xf32, #tpu.memory_space<vmem>>, %arg17: memref<32x128xf32, #tpu.memory_space<vmem>>, %arg18: memref<1x128xf32, #tpu.memory_space<vmem>>, %arg19: memref<32x32xf32, #tpu.memory_space<vmem>>, %arg20: memref<1x32xf32, #tpu.memory_space<vmem>>, %arg21: memref<7x2x32xf32, #tpu.memory_space<vmem>>) attributes {dimension_semantics = [], scalar_prefetch = 0 : i64, scratch_operands = 0 : i64, tpu.core_type = #tpu.core_type<tc>} {
    %0 = tpu.iota {dimensions = array<i32: 1>} : vector<14x32xi32>
    %c0 = arith.constant 0 : index
    %c0_0 = arith.constant 0 : index
    %1 = vector.load %arg1[%c0, %c0_0] : memref<14x1xi32, #tpu.memory_space<vmem>>, vector<14x1xi32>
    %2 = vector.broadcast %1 : vector<14x1xi32> to vector<14x32xi32>
    %3 = arith.cmpi eq, %0, %2 : vector<14x32xi32>
    %4 = arith.extui %3 : vector<14x32xi1> to vector<14x32xi32>
    %5 = arith.sitofp %4 : vector<14x32xi32> to vector<14x32xf32>
    %c0_1 = arith.constant 0 : index
    %c0_2 = arith.constant 0 : index
    %6 = vector.load %arg4[%c0_1, %c0_2] : memref<32x32xf32, #tpu.memory_space<vmem>>, vector<32x32xf32>
    %cst = arith.constant dense<0.000000e+00> : vector<14x32xf32>
    %7 = tpu.matmul %5, %6, %cst {dimension_numbers = #tpu.dot_dimension_numbers<[1], [0], [0], [1], [0, 0, 1, 1], [], []>} : vector<14x32xf32>, vector<32x32xf32>, vector<14x32xf32> -> vector<14x32xf32>
    %cst_3 = arith.constant 0.000000e+00 : f32
    %8 = vector.broadcast %cst_3 : f32 to vector<14x32xf32>
    %9 = arith.maximumf %7, %8 : vector<14x32xf32>
    %c0_4 = arith.constant 0 : index
    %c0_5 = arith.constant 0 : index
    %10 = vector.load %arg14[%c0_4, %c0_5] : memref<32x128xf32, #tpu.memory_space<vmem>>, vector<32x128xf32>
    %cst_6 = arith.constant dense<0.000000e+00> : vector<14x128xf32>
    %11 = tpu.matmul %9, %10, %cst_6 {dimension_numbers = #tpu.dot_dimension_numbers<[1], [0], [0], [1], [0, 0, 1, 1], [], []>} : vector<14x32xf32>, vector<32x128xf32>, vector<14x128xf32> -> vector<14x128xf32>
    %c0_7 = arith.constant 0 : index
    %c0_8 = arith.constant 0 : index
    %12 = vector.load %arg2[%c0_7, %c0_8] : memref<2x64xf32, #tpu.memory_space<vmem>>, vector<2x64xf32>
    %c0_9 = arith.constant 0 : index
    %c0_10 = arith.constant 0 : index
    %13 = vector.load %arg5[%c0_9, %c0_10] : memref<64x32xf32, #tpu.memory_space<vmem>>, vector<64x32xf32>
    %cst_11 = arith.constant dense<0.000000e+00> : vector<2x32xf32>
    %14 = tpu.matmul %12, %13, %cst_11 {dimension_numbers = #tpu.dot_dimension_numbers<[1], [0], [0], [1], [0, 0, 1, 1], [], []>} : vector<2x64xf32>, vector<64x32xf32>, vector<2x32xf32> -> vector<2x32xf32>
    %c0_12 = arith.constant 0 : index
    %c0_13 = arith.constant 0 : index
    %15 = vector.load %arg6[%c0_12, %c0_13] : memref<1x32xf32, #tpu.memory_space<vmem>>, vector<1x32xf32>
    %16 = vector.broadcast %15 : vector<1x32xf32> to vector<2x32xf32>
    %17 = arith.addf %14, %16 : vector<2x32xf32>
    %cst_14 = arith.constant 0.000000e+00 : f32
    %18 = vector.broadcast %cst_14 : f32 to vector<2x32xf32>
    %19 = arith.maximumf %17, %18 : vector<2x32xf32>
    %c0_15 = arith.constant 0 : index
    %c0_16 = arith.constant 0 : index
    %20 = vector.load %arg15[%c0_15, %c0_16] : memref<32x128xf32, #tpu.memory_space<vmem>>, vector<32x128xf32>
    %cst_17 = arith.constant dense<0.000000e+00> : vector<2x128xf32>
    %21 = tpu.matmul %19, %20, %cst_17 {dimension_numbers = #tpu.dot_dimension_numbers<[1], [0], [0], [1], [0, 0, 1, 1], [], []>} : vector<2x32xf32>, vector<32x128xf32>, vector<2x128xf32> -> vector<2x128xf32>
    %c0_18 = arith.constant 0 : index
    %c0_19 = arith.constant 0 : index
    %22 = vector.load %arg18[%c0_18, %c0_19] : memref<1x128xf32, #tpu.memory_space<vmem>>, vector<1x128xf32>
    %23 = vector.broadcast %22 : vector<1x128xf32> to vector<2x128xf32>
    %24 = arith.addf %21, %23 : vector<2x128xf32>
    %c0_20 = arith.constant 0 : index
    %c0_21 = arith.constant 0 : index
    %25 = vector.load %arg3[%c0_20, %c0_21] : memref<16x64xf32, #tpu.memory_space<vmem>>, vector<16x64xf32>
    %c0_22 = arith.constant 0 : index
    %c0_23 = arith.constant 0 : index
    %26 = vector.load %arg7[%c0_22, %c0_23] : memref<64x32xf32, #tpu.memory_space<vmem>>, vector<64x32xf32>
    %cst_24 = arith.constant dense<0.000000e+00> : vector<16x32xf32>
    %27 = tpu.matmul %25, %26, %cst_24 {dimension_numbers = #tpu.dot_dimension_numbers<[1], [0], [0], [1], [0, 0, 1, 1], [], []>} : vector<16x64xf32>, vector<64x32xf32>, vector<16x32xf32> -> vector<16x32xf32>
    %c0_25 = arith.constant 0 : index
    %c0_26 = arith.constant 0 : index
    %28 = vector.load %arg8[%c0_25, %c0_26] : memref<1x32xf32, #tpu.memory_space<vmem>>, vector<1x32xf32>
    %29 = vector.broadcast %28 : vector<1x32xf32> to vector<16x32xf32>
    %30 = arith.addf %27, %29 : vector<16x32xf32>
    %cst_27 = arith.constant 0.000000e+00 : f32
    %31 = vector.broadcast %cst_27 : f32 to vector<16x32xf32>
    %32 = arith.maximumf %30, %31 : vector<16x32xf32>
    %c0_28 = arith.constant 0 : index
    %c0_29 = arith.constant 0 : index
    %33 = vector.load %arg9[%c0_28, %c0_29] : memref<32x32xf32, #tpu.memory_space<vmem>>, vector<32x32xf32>
    %cst_30 = arith.constant dense<0.000000e+00> : vector<16x32xf32>
    %34 = tpu.matmul %32, %33, %cst_30 {dimension_numbers = #tpu.dot_dimension_numbers<[1], [0], [0], [1], [0, 0, 1, 1], [], []>} : vector<16x32xf32>, vector<32x32xf32>, vector<16x32xf32> -> vector<16x32xf32>
    %c0_31 = arith.constant 0 : index
    %c0_32 = arith.constant 0 : index
    %35 = vector.load %arg10[%c0_31, %c0_32] : memref<1x32xf32, #tpu.memory_space<vmem>>, vector<1x32xf32>
    %36 = vector.broadcast %35 : vector<1x32xf32> to vector<16x32xf32>
    %37 = arith.addf %34, %36 : vector<16x32xf32>
    %38 = vector.shape_cast %32 : vector<16x32xf32> to vector<2x8x32xf32>
    %39 = vector.shape_cast %37 : vector<16x32xf32> to vector<2x8x32xf32>
    %c0_33 = arith.constant 0 : index
    %c0_34 = arith.constant 0 : index
    %40 = vector.load %arg13[%c0_33, %c0_34] : memref<1x32xf32, #tpu.memory_space<vmem>>, vector<1x32xf32>
    %cst_35 = arith.constant 0.000000e+00 : f32
    %41 = vector.broadcast %cst_35 : f32 to vector<2x32xf32>
    %cst_36 = arith.constant 0.000000e+00 : f32
    %42 = vector.broadcast %cst_36 : f32 to vector<2x32xf32>
    %c0_37 = arith.constant 0 : index
    %c0_38 = arith.constant 0 : index
    %43 = vector.load %arg11[%c0_37, %c0_38] : memref<32x32xf32, #tpu.memory_space<vmem>>, vector<32x32xf32>
    %cst_39 = arith.constant dense<0.000000e+00> : vector<2x32xf32>
    %44 = tpu.matmul %41, %43, %cst_39 {dimension_numbers = #tpu.dot_dimension_numbers<[1], [0], [0], [1], [0, 0, 1, 1], [], []>} : vector<2x32xf32>, vector<32x32xf32>, vector<2x32xf32> -> vector<2x32xf32>
    %c0_40 = arith.constant 0 : index
    %c0_41 = arith.constant 0 : index
    %45 = vector.load %arg12[%c0_40, %c0_41] : memref<1x32xf32, #tpu.memory_space<vmem>>, vector<1x32xf32>
    %46 = vector.broadcast %45 : vector<1x32xf32> to vector<2x32xf32>
    %47 = arith.addf %44, %46 : vector<2x32xf32>
    %48 = vector.shape_cast %47 : vector<2x32xf32> to vector<2x1x32xf32>
    %49 = vector.broadcast %48 : vector<2x1x32xf32> to vector<2x8x32xf32>
    %50 = arith.addf %39, %49 : vector<2x8x32xf32>
    %51 = math.tanh %50 : vector<2x8x32xf32>
    %52 = vector.shape_cast %40 : vector<1x32xf32> to vector<1x1x32xf32>
    %53 = vector.broadcast %52 : vector<1x1x32xf32> to vector<2x8x32xf32>
    %54 = arith.mulf %51, %53 : vector<2x8x32xf32>
    %cst_42 = arith.constant dense<0.000000e+00> : vector<2x8xf32>
    %55 = vector.multi_reduction <add>, %54, %cst_42 [2] : vector<2x8x32xf32> to vector<2x8xf32>
    %cst_43 = arith.constant dense<0xFF800000> : vector<2xf32>
    %56 = vector.multi_reduction <maximumf>, %55, %cst_43 [1] : vector<2x8xf32> to vector<2xf32>
    %57 = vector.shape_cast %56 : vector<2xf32> to vector<2x1xf32>
    %58 = vector.broadcast %57 : vector<2x1xf32> to vector<2x8xf32>
    %59 = arith.subf %55, %58 : vector<2x8xf32>
    %60 = math.exp %59 : vector<2x8xf32>
    %cst_44 = arith.constant dense<0.000000e+00> : vector<2xf32>
    %61 = vector.multi_reduction <add>, %60, %cst_44 [1] : vector<2x8xf32> to vector<2xf32>
    %62 = vector.shape_cast %61 : vector<2xf32> to vector<2x1xf32>
    %63 = tpu.reciprocal %62 {approx = true} : vector<2x1xf32> -> vector<2x1xf32>
    %64 = vector.broadcast %63 : vector<2x1xf32> to vector<2x8xf32>
    %65 = arith.mulf %60, %64 : vector<2x8xf32>
    %66 = vector.shape_cast %65 : vector<2x8xf32> to vector<2x8x1xf32>
    %67 = vector.broadcast %66 : vector<2x8x1xf32> to vector<2x8x32xf32>
    %68 = arith.mulf %67, %38 : vector<2x8x32xf32>
    %cst_45 = arith.constant dense<0.000000e+00> : vector<2x32xf32>
    %69 = vector.multi_reduction <add>, %68, %cst_45 [1] : vector<2x8x32xf32> to vector<2x32xf32>
    %70 = vector.extract_strided_slice %11 {offsets = [0, 0], sizes = [2, 128], strides = [1, 1]} : vector<14x128xf32> to vector<2x128xf32>
    %71 = arith.addf %70, %24 : vector<2x128xf32>
    %c0_46 = arith.constant 0 : index
    %c0_47 = arith.constant 0 : index
    %72 = vector.load %arg16[%c0_46, %c0_47] : memref<32x128xf32, #tpu.memory_space<vmem>>, vector<32x128xf32>
    %cst_48 = arith.constant dense<0.000000e+00> : vector<2x128xf32>
    %73 = tpu.matmul %69, %72, %cst_48 {dimension_numbers = #tpu.dot_dimension_numbers<[1], [0], [0], [1], [0, 0, 1, 1], [], []>} : vector<2x32xf32>, vector<32x128xf32>, vector<2x128xf32> -> vector<2x128xf32>
    %74 = arith.addf %71, %73 : vector<2x128xf32>
    %c0_49 = arith.constant 0 : index
    %c0_50 = arith.constant 0 : index
    %75 = vector.load %arg17[%c0_49, %c0_50] : memref<32x128xf32, #tpu.memory_space<vmem>>, vector<32x128xf32>
    %cst_51 = arith.constant dense<0.000000e+00> : vector<2x128xf32>
    %76 = tpu.matmul %41, %75, %cst_51 {dimension_numbers = #tpu.dot_dimension_numbers<[1], [0], [0], [1], [0, 0, 1, 1], [], []>} : vector<2x32xf32>, vector<32x128xf32>, vector<2x128xf32> -> vector<2x128xf32>
    %77 = arith.addf %74, %76 : vector<2x128xf32>
    %78 = vector.extract_strided_slice %77 {offsets = [0, 0], sizes = [2, 32], strides = [1, 1]} : vector<2x128xf32> to vector<2x32xf32>
    %cst_52 = arith.constant 5.000000e-01 : f32
    %79 = vector.broadcast %cst_52 : f32 to vector<2x32xf32>
    %80 = arith.mulf %79, %78 : vector<2x32xf32>
    %81 = math.tanh %80 : vector<2x32xf32>
    %cst_53 = arith.constant 1.000000e+00 : f32
    %82 = vector.broadcast %cst_53 : f32 to vector<2x32xf32>
    %83 = arith.addf %81, %82 : vector<2x32xf32>
    %cst_54 = arith.constant 5.000000e-01 : f32
    %84 = vector.broadcast %cst_54 : f32 to vector<2x32xf32>
    %85 = arith.mulf %84, %83 : vector<2x32xf32>
    %86 = vector.extract_strided_slice %77 {offsets = [0, 32], sizes = [2, 32], strides = [1, 1]} : vector<2x128xf32> to vector<2x32xf32>
    %cst_55 = arith.constant 5.000000e-01 : f32
    %87 = vector.broadcast %cst_55 : f32 to vector<2x32xf32>
    %88 = arith.mulf %87, %86 : vector<2x32xf32>
    %89 = math.tanh %88 : vector<2x32xf32>
    %cst_56 = arith.constant 1.000000e+00 : f32
    %90 = vector.broadcast %cst_56 : f32 to vector<2x32xf32>
    %91 = arith.addf %89, %90 : vector<2x32xf32>
    %cst_57 = arith.constant 5.000000e-01 : f32
    %92 = vector.broadcast %cst_57 : f32 to vector<2x32xf32>
    %93 = arith.mulf %92, %91 : vector<2x32xf32>
    %94 = vector.extract_strided_slice %77 {offsets = [0, 64], sizes = [2, 32], strides = [1, 1]} : vector<2x128xf32> to vector<2x32xf32>
    %95 = math.tanh %94 : vector<2x32xf32>
    %96 = vector.extract_strided_slice %77 {offsets = [0, 96], sizes = [2, 32], strides = [1, 1]} : vector<2x128xf32> to vector<2x32xf32>
    %cst_58 = arith.constant 5.000000e-01 : f32
    %97 = vector.broadcast %cst_58 : f32 to vector<2x32xf32>
    %98 = arith.mulf %97, %96 : vector<2x32xf32>
    %99 = math.tanh %98 : vector<2x32xf32>
    %cst_59 = arith.constant 1.000000e+00 : f32
    %100 = vector.broadcast %cst_59 : f32 to vector<2x32xf32>
    %101 = arith.addf %99, %100 : vector<2x32xf32>
    %cst_60 = arith.constant 5.000000e-01 : f32
    %102 = vector.broadcast %cst_60 : f32 to vector<2x32xf32>
    %103 = arith.mulf %102, %101 : vector<2x32xf32>
    %104 = arith.mulf %93, %42 : vector<2x32xf32>
    %105 = arith.mulf %85, %95 : vector<2x32xf32>
    %106 = arith.addf %104, %105 : vector<2x32xf32>
    %107 = math.tanh %106 : vector<2x32xf32>
    %108 = arith.mulf %103, %107 : vector<2x32xf32>
    %c0_61 = arith.constant 0 : index
    %c0_62 = arith.constant 0 : index
    %109 = vector.load %arg19[%c0_61, %c0_62] : memref<32x32xf32, #tpu.memory_space<vmem>>, vector<32x32xf32>
    %cst_63 = arith.constant dense<0.000000e+00> : vector<2x32xf32>
    %110 = tpu.matmul %108, %109, %cst_63 {dimension_numbers = #tpu.dot_dimension_numbers<[1], [0], [0], [1], [0, 0, 1, 1], [], []>} : vector<2x32xf32>, vector<32x32xf32>, vector<2x32xf32> -> vector<2x32xf32>
    %c0_64 = arith.constant 0 : index
    %c0_65 = arith.constant 0 : index
    %111 = vector.load %arg20[%c0_64, %c0_65] : memref<1x32xf32, #tpu.memory_space<vmem>>, vector<1x32xf32>
    %112 = vector.broadcast %111 : vector<1x32xf32> to vector<2x32xf32>
    %113 = arith.addf %110, %112 : vector<2x32xf32>
    %cst_66 = arith.constant dense<0xFF800000> : vector<2xf32>
    %114 = vector.multi_reduction <maximumf>, %113, %cst_66 [1] : vector<2x32xf32> to vector<2xf32>
    %115 = vector.shape_cast %114 : vector<2xf32> to vector<2x1xf32>
    %116 = vector.broadcast %115 : vector<2x1xf32> to vector<2x32xf32>
    %117 = arith.subf %113, %116 : vector<2x32xf32>
    %118 = math.exp %117 : vector<2x32xf32>
    %cst_67 = arith.constant dense<0.000000e+00> : vector<2xf32>
    %119 = vector.multi_reduction <add>, %118, %cst_67 [1] : vector<2x32xf32> to vector<2xf32>
    %120 = vector.shape_cast %119 : vector<2xf32> to vector<2x1xf32>
    %121 = math.log %120 : vector<2x1xf32>
    %122 = vector.broadcast %121 : vector<2x1xf32> to vector<2x32xf32>
    %123 = arith.subf %117, %122 : vector<2x32xf32>
    %c0_68 = arith.constant 0 : index
    %124 = memref.load %arg0[%c0_68] : memref<7xi32, #tpu.memory_space<smem>>
    %c0_i32 = arith.constant 0 : i32
    %125 = arith.cmpi ne, %124, %c0_i32 : i32
    %cst_69 = arith.constant 0.000000e+00 : f32
    %126 = vector.broadcast %cst_69 : f32 to vector<2x32xf32>
    %127 = arith.select %125, %123, %126 : vector<2x32xf32>
    %c0_70 = arith.constant 0 : index
    %c0_71 = arith.constant 0 : index
    %c0_72 = arith.constant 0 : index
    %128 = vector.load %arg21[%c0_70, %c0_71, %c0_72] : memref<7x2x32xf32, #tpu.memory_space<vmem>>, vector<1x2x32xf32>
    %129 = vector.shape_cast %128 : vector<1x2x32xf32> to vector<2x32xf32>
    %130 = vector.shape_cast %127 : vector<2x32xf32> to vector<1x2x32xf32>
    tpu.vector_store %arg21[%c0_70, %c0_71, %c0_72], %130 {strides = array<i32>} : memref<7x2x32xf32, #tpu.memory_space<vmem>>, vector<1x2x32xf32>,
    %c0_73 = arith.constant 0 : index
    %c0_74 = arith.constant 0 : index
    %131 = vector.load %arg11[%c0_73, %c0_74] : memref<32x32xf32, #tpu.memory_space<vmem>>, vector<32x32xf32>
    %cst_75 = arith.constant dense<0.000000e+00> : vector<2x32xf32>
    %132 = tpu.matmul %108, %131, %cst_75 {dimension_numbers = #tpu.dot_dimension_numbers<[1], [0], [0], [1], [0, 0, 1, 1], [], []>} : vector<2x32xf32>, vector<32x32xf32>, vector<2x32xf32> -> vector<2x32xf32>
    %c0_76 = arith.constant 0 : index
    %c0_77 = arith.constant 0 : index
    %133 = vector.load %arg12[%c0_76, %c0_77] : memref<1x32xf32, #tpu.memory_space<vmem>>, vector<1x32xf32>
    %134 = vector.broadcast %133 : vector<1x32xf32> to vector<2x32xf32>
    %135 = arith.addf %132, %134 : vector<2x32xf32>
    %136 = vector.shape_cast %135 : vector<2x32xf32> to vector<2x1x32xf32>
    %137 = vector.broadcast %136 : vector<2x1x32xf32> to vector<2x8x32xf32>
    %138 = arith.addf %39, %137 : vector<2x8x32xf32>
    %139 = math.tanh %138 : vector<2x8x32xf32>
    %140 = vector.shape_cast %40 : vector<1x32xf32> to vector<1x1x32xf32>
    %141 = vector.broadcast %140 : vector<1x1x32xf32> to vector<2x8x32xf32>
    %142 = arith.mulf %139, %141 : vector<2x8x32xf32>
    %cst_78 = arith.constant dense<0.000000e+00> : vector<2x8xf32>
    %143 = vector.multi_reduction <add>, %142, %cst_78 [2] : vector<2x8x32xf32> to vector<2x8xf32>
    %cst_79 = arith.constant dense<0xFF800000> : vector<2xf32>
    %144 = vector.multi_reduction <maximumf>, %143, %cst_79 [1] : vector<2x8xf32> to vector<2xf32>
    %145 = vector.shape_cast %144 : vector<2xf32> to vector<2x1xf32>
    %146 = vector.broadcast %145 : vector<2x1xf32> to vector<2x8xf32>
    %147 = arith.subf %143, %146 : vector<2x8xf32>
    %148 = math.exp %147 : vector<2x8xf32>
    %cst_80 = arith.constant dense<0.000000e+00> : vector<2xf32>
    %149 = vector.multi_reduction <add>, %148, %cst_80 [1] : vector<2x8xf32> to vector<2xf32>
    %150 = vector.shape_cast %149 : vector<2xf32> to vector<2x1xf32>
    %151 = tpu.reciprocal %150 {approx = true} : vector<2x1xf32> -> vector<2x1xf32>
    %152 = vector.broadcast %151 : vector<2x1xf32> to vector<2x8xf32>
    %153 = arith.mulf %148, %152 : vector<2x8xf32>
    %154 = vector.shape_cast %153 : vector<2x8xf32> to vector<2x8x1xf32>
    %155 = vector.broadcast %154 : vector<2x8x1xf32> to vector<2x8x32xf32>
    %156 = arith.mulf %155, %38 : vector<2x8x32xf32>
    %cst_81 = arith.constant dense<0.000000e+00> : vector<2x32xf32>
    %157 = vector.multi_reduction <add>, %156, %cst_81 [1] : vector<2x8x32xf32> to vector<2x32xf32>
    %158 = vector.extract_strided_slice %11 {offsets = [2, 0], sizes = [2, 128], strides = [1, 1]} : vector<14x128xf32> to vector<2x128xf32>
    %159 = arith.addf %158, %24 : vector<2x128xf32>
    %c0_82 = arith.constant 0 : index
    %c0_83 = arith.constant 0 : index
    %160 = vector.load %arg16[%c0_82, %c0_83] : memref<32x128xf32, #tpu.memory_space<vmem>>, vector<32x128xf32>
    %cst_84 = arith.constant dense<0.000000e+00> : vector<2x128xf32>
    %161 = tpu.matmul %157, %160, %cst_84 {dimension_numbers = #tpu.dot_dimension_numbers<[1], [0], [0], [1], [0, 0, 1, 1], [], []>} : vector<2x32xf32>, vector<32x128xf32>, vector<2x128xf32> -> vector<2x128xf32>
    %162 = arith.addf %159, %161 : vector<2x128xf32>
    %c0_85 = arith.constant 0 : index
    %c0_86 = arith.constant 0 : index
    %163 = vector.load %arg17[%c0_85, %c0_86] : memref<32x128xf32, #tpu.memory_space<vmem>>, vector<32x128xf32>
    %cst_87 = arith.constant dense<0.000000e+00> : vector<2x128xf32>
    %164 = tpu.matmul %108, %163, %cst_87 {dimension_numbers = #tpu.dot_dimension_numbers<[1], [0], [0], [1], [0, 0, 1, 1], [], []>} : vector<2x32xf32>, vector<32x128xf32>, vector<2x128xf32> -> vector<2x128xf32>
    %165 = arith.addf %162, %164 : vector<2x128xf32>
    %166 = vector.extract_strided_slice %165 {offsets = [0, 0], sizes = [2, 32], strides = [1, 1]} : vector<2x128xf32> to vector<2x32xf32>
    %cst_88 = arith.constant 5.000000e-01 : f32
    %167 = vector.broadcast %cst_88 : f32 to vector<2x32xf32>
    %168 = arith.mulf %167, %166 : vector<2x32xf32>
    %169 = math.tanh %168 : vector<2x32xf32>
    %cst_89 = arith.constant 1.000000e+00 : f32
    %170 = vector.broadcast %cst_89 : f32 to vector<2x32xf32>
    %171 = arith.addf %169, %170 : vector<2x32xf32>
    %cst_90 = arith.constant 5.000000e-01 : f32
    %172 = vector.broadcast %cst_90 : f32 to vector<2x32xf32>
    %173 = arith.mulf %172, %171 : vector<2x32xf32>
    %174 = vector.extract_strided_slice %165 {offsets = [0, 32], sizes = [2, 32], strides = [1, 1]} : vector<2x128xf32> to vector<2x32xf32>
    %cst_91 = arith.constant 5.000000e-01 : f32
    %175 = vector.broadcast %cst_91 : f32 to vector<2x32xf32>
    %176 = arith.mulf %175, %174 : vector<2x32xf32>
    %177 = math.tanh %176 : vector<2x32xf32>
    %cst_92 = arith.constant 1.000000e+00 : f32
    %178 = vector.broadcast %cst_92 : f32 to vector<2x32xf32>
    %179 = arith.addf %177, %178 : vector<2x32xf32>
    %cst_93 = arith.constant 5.000000e-01 : f32
    %180 = vector.broadcast %cst_93 : f32 to vector<2x32xf32>
    %181 = arith.mulf %180, %179 : vector<2x32xf32>
    %182 = vector.extract_strided_slice %165 {offsets = [0, 64], sizes = [2, 32], strides = [1, 1]} : vector<2x128xf32> to vector<2x32xf32>
    %183 = math.tanh %182 : vector<2x32xf32>
    %184 = vector.extract_strided_slice %165 {offsets = [0, 96], sizes = [2, 32], strides = [1, 1]} : vector<2x128xf32> to vector<2x32xf32>
    %cst_94 = arith.constant 5.000000e-01 : f32
    %185 = vector.broadcast %cst_94 : f32 to vector<2x32xf32>
    %186 = arith.mulf %185, %184 : vector<2x32xf32>
    %187 = math.tanh %186 : vector<2x32xf32>
    %cst_95 = arith.constant 1.000000e+00 : f32
    %188 = vector.broadcast %cst_95 : f32 to vector<2x32xf32>
    %189 = arith.addf %187, %188 : vector<2x32xf32>
    %cst_96 = arith.constant 5.000000e-01 : f32
    %190 = vector.broadcast %cst_96 : f32 to vector<2x32xf32>
    %191 = arith.mulf %190, %189 : vector<2x32xf32>
    %192 = arith.mulf %181, %106 : vector<2x32xf32>
    %193 = arith.mulf %173, %183 : vector<2x32xf32>
    %194 = arith.addf %192, %193 : vector<2x32xf32>
    %195 = math.tanh %194 : vector<2x32xf32>
    %196 = arith.mulf %191, %195 : vector<2x32xf32>
    %c0_97 = arith.constant 0 : index
    %c0_98 = arith.constant 0 : index
    %197 = vector.load %arg19[%c0_97, %c0_98] : memref<32x32xf32, #tpu.memory_space<vmem>>, vector<32x32xf32>
    %cst_99 = arith.constant dense<0.000000e+00> : vector<2x32xf32>
    %198 = tpu.matmul %196, %197, %cst_99 {dimension_numbers = #tpu.dot_dimension_numbers<[1], [0], [0], [1], [0, 0, 1, 1], [], []>} : vector<2x32xf32>, vector<32x32xf32>, vector<2x32xf32> -> vector<2x32xf32>
    %c0_100 = arith.constant 0 : index
    %c0_101 = arith.constant 0 : index
    %199 = vector.load %arg20[%c0_100, %c0_101] : memref<1x32xf32, #tpu.memory_space<vmem>>, vector<1x32xf32>
    %200 = vector.broadcast %199 : vector<1x32xf32> to vector<2x32xf32>
    %201 = arith.addf %198, %200 : vector<2x32xf32>
    %cst_102 = arith.constant dense<0xFF800000> : vector<2xf32>
    %202 = vector.multi_reduction <maximumf>, %201, %cst_102 [1] : vector<2x32xf32> to vector<2xf32>
    %203 = vector.shape_cast %202 : vector<2xf32> to vector<2x1xf32>
    %204 = vector.broadcast %203 : vector<2x1xf32> to vector<2x32xf32>
    %205 = arith.subf %201, %204 : vector<2x32xf32>
    %206 = math.exp %205 : vector<2x32xf32>
    %cst_103 = arith.constant dense<0.000000e+00> : vector<2xf32>
    %207 = vector.multi_reduction <add>, %206, %cst_103 [1] : vector<2x32xf32> to vector<2xf32>
    %208 = vector.shape_cast %207 : vector<2xf32> to vector<2x1xf32>
    %209 = math.log %208 : vector<2x1xf32>
    %210 = vector.broadcast %209 : vector<2x1xf32> to vector<2x32xf32>
    %211 = arith.subf %205, %210 : vector<2x32xf32>
    %c1 = arith.constant 1 : index
    %212 = memref.load %arg0[%c1] : memref<7xi32, #tpu.memory_space<smem>>
    %c0_i32_104 = arith.constant 0 : i32
    %213 = arith.cmpi ne, %212, %c0_i32_104 : i32
    %cst_105 = arith.constant 0.000000e+00 : f32
    %214 = vector.broadcast %cst_105 : f32 to vector<2x32xf32>
    %215 = arith.select %213, %211, %214 : vector<2x32xf32>
    %c1_106 = arith.constant 1 : index
    %c0_107 = arith.constant 0 : index
    %c0_108 = arith.constant 0 : index
    %216 = vector.load %arg21[%c1_106, %c0_107, %c0_108] : memref<7x2x32xf32, #tpu.memory_space<vmem>>, vector<1x2x32xf32>
    %217 = vector.shape_cast %216 : vector<1x2x32xf32> to vector<2x32xf32>
    %218 = vector.shape_cast %215 : vector<2x32xf32> to vector<1x2x32xf32>
    tpu.vector_store %arg21[%c1_106, %c0_107, %c0_108], %218 {strides = array<i32>} : memref<7x2x32xf32, #tpu.memory_space<vmem>>, vector<1x2x32xf32>,
    %c0_109 = arith.constant 0 : index
    %c0_110 = arith.constant 0 : index
    %219 = vector.load %arg11[%c0_109, %c0_110] : memref<32x32xf32, #tpu.memory_space<vmem>>, vector<32x32xf32>
    %cst_111 = arith.constant dense<0.000000e+00> : vector<2x32xf32>
    %220 = tpu.matmul %196, %219, %cst_111 {dimension_numbers = #tpu.dot_dimension_numbers<[1], [0], [0], [1], [0, 0, 1, 1], [], []>} : vector<2x32xf32>, vector<32x32xf32>, vector<2x32xf32> -> vector<2x32xf32>
    %c0_112 = arith.constant 0 : index
    %c0_113 = arith.constant 0 : index
    %221 = vector.load %arg12[%c0_112, %c0_113] : memref<1x32xf32, #tpu.memory_space<vmem>>, vector<1x32xf32>
    %222 = vector.broadcast %221 : vector<1x32xf32> to vector<2x32xf32>
    %223 = arith.addf %220, %222 : vector<2x32xf32>
    %224 = vector.shape_cast %223 : vector<2x32xf32> to vector<2x1x32xf32>
    %225 = vector.broadcast %224 : vector<2x1x32xf32> to vector<2x8x32xf32>
    %226 = arith.addf %39, %225 : vector<2x8x32xf32>
    %227 = math.tanh %226 : vector<2x8x32xf32>
    %228 = vector.shape_cast %40 : vector<1x32xf32> to vector<1x1x32xf32>
    %229 = vector.broadcast %228 : vector<1x1x32xf32> to vector<2x8x32xf32>
    %230 = arith.mulf %227, %229 : vector<2x8x32xf32>
    %cst_114 = arith.constant dense<0.000000e+00> : vector<2x8xf32>
    %231 = vector.multi_reduction <add>, %230, %cst_114 [2] : vector<2x8x32xf32> to vector<2x8xf32>
    %cst_115 = arith.constant dense<0xFF800000> : vector<2xf32>
    %232 = vector.multi_reduction <maximumf>, %231, %cst_115 [1] : vector<2x8xf32> to vector<2xf32>
    %233 = vector.shape_cast %232 : vector<2xf32> to vector<2x1xf32>
    %234 = vector.broadcast %233 : vector<2x1xf32> to vector<2x8xf32>
    %235 = arith.subf %231, %234 : vector<2x8xf32>
    %236 = math.exp %235 : vector<2x8xf32>
    %cst_116 = arith.constant dense<0.000000e+00> : vector<2xf32>
    %237 = vector.multi_reduction <add>, %236, %cst_116 [1] : vector<2x8xf32> to vector<2xf32>
    %238 = vector.shape_cast %237 : vector<2xf32> to vector<2x1xf32>
    %239 = tpu.reciprocal %238 {approx = true} : vector<2x1xf32> -> vector<2x1xf32>
    %240 = vector.broadcast %239 : vector<2x1xf32> to vector<2x8xf32>
    %241 = arith.mulf %236, %240 : vector<2x8xf32>
    %242 = vector.shape_cast %241 : vector<2x8xf32> to vector<2x8x1xf32>
    %243 = vector.broadcast %242 : vector<2x8x1xf32> to vector<2x8x32xf32>
    %244 = arith.mulf %243, %38 : vector<2x8x32xf32>
    %cst_117 = arith.constant dense<0.000000e+00> : vector<2x32xf32>
    %245 = vector.multi_reduction <add>, %244, %cst_117 [1] : vector<2x8x32xf32> to vector<2x32xf32>
    %246 = vector.extract_strided_slice %11 {offsets = [4, 0], sizes = [2, 128], strides = [1, 1]} : vector<14x128xf32> to vector<2x128xf32>
    %247 = arith.addf %246, %24 : vector<2x128xf32>
    %c0_118 = arith.constant 0 : index
    %c0_119 = arith.constant 0 : index
    %248 = vector.load %arg16[%c0_118, %c0_119] : memref<32x128xf32, #tpu.memory_space<vmem>>, vector<32x128xf32>
    %cst_120 = arith.constant dense<0.000000e+00> : vector<2x128xf32>
    %249 = tpu.matmul %245, %248, %cst_120 {dimension_numbers = #tpu.dot_dimension_numbers<[1], [0], [0], [1], [0, 0, 1, 1], [], []>} : vector<2x32xf32>, vector<32x128xf32>, vector<2x128xf32> -> vector<2x128xf32>
    %250 = arith.addf %247, %249 : vector<2x128xf32>
    %c0_121 = arith.constant 0 : index
    %c0_122 = arith.constant 0 : index
    %251 = vector.load %arg17[%c0_121, %c0_122] : memref<32x128xf32, #tpu.memory_space<vmem>>, vector<32x128xf32>
    %cst_123 = arith.constant dense<0.000000e+00> : vector<2x128xf32>
    %252 = tpu.matmul %196, %251, %cst_123 {dimension_numbers = #tpu.dot_dimension_numbers<[1], [0], [0], [1], [0, 0, 1, 1], [], []>} : vector<2x32xf32>, vector<32x128xf32>, vector<2x128xf32> -> vector<2x128xf32>
    %253 = arith.addf %250, %252 : vector<2x128xf32>
    %254 = vector.extract_strided_slice %253 {offsets = [0, 0], sizes = [2, 32], strides = [1, 1]} : vector<2x128xf32> to vector<2x32xf32>
    %cst_124 = arith.constant 5.000000e-01 : f32
    %255 = vector.broadcast %cst_124 : f32 to vector<2x32xf32>
    %256 = arith.mulf %255, %254 : vector<2x32xf32>
    %257 = math.tanh %256 : vector<2x32xf32>
    %cst_125 = arith.constant 1.000000e+00 : f32
    %258 = vector.broadcast %cst_125 : f32 to vector<2x32xf32>
    %259 = arith.addf %257, %258 : vector<2x32xf32>
    %cst_126 = arith.constant 5.000000e-01 : f32
    %260 = vector.broadcast %cst_126 : f32 to vector<2x32xf32>
    %261 = arith.mulf %260, %259 : vector<2x32xf32>
    %262 = vector.extract_strided_slice %253 {offsets = [0, 32], sizes = [2, 32], strides = [1, 1]} : vector<2x128xf32> to vector<2x32xf32>
    %cst_127 = arith.constant 5.000000e-01 : f32
    %263 = vector.broadcast %cst_127 : f32 to vector<2x32xf32>
    %264 = arith.mulf %263, %262 : vector<2x32xf32>
    %265 = math.tanh %264 : vector<2x32xf32>
    %cst_128 = arith.constant 1.000000e+00 : f32
    %266 = vector.broadcast %cst_128 : f32 to vector<2x32xf32>
    %267 = arith.addf %265, %266 : vector<2x32xf32>
    %cst_129 = arith.constant 5.000000e-01 : f32
    %268 = vector.broadcast %cst_129 : f32 to vector<2x32xf32>
    %269 = arith.mulf %268, %267 : vector<2x32xf32>
    %270 = vector.extract_strided_slice %253 {offsets = [0, 64], sizes = [2, 32], strides = [1, 1]} : vector<2x128xf32> to vector<2x32xf32>
    %271 = math.tanh %270 : vector<2x32xf32>
    %272 = vector.extract_strided_slice %253 {offsets = [0, 96], sizes = [2, 32], strides = [1, 1]} : vector<2x128xf32> to vector<2x32xf32>
    %cst_130 = arith.constant 5.000000e-01 : f32
    %273 = vector.broadcast %cst_130 : f32 to vector<2x32xf32>
    %274 = arith.mulf %273, %272 : vector<2x32xf32>
    %275 = math.tanh %274 : vector<2x32xf32>
    %cst_131 = arith.constant 1.000000e+00 : f32
    %276 = vector.broadcast %cst_131 : f32 to vector<2x32xf32>
    %277 = arith.addf %275, %276 : vector<2x32xf32>
    %cst_132 = arith.constant 5.000000e-01 : f32
    %278 = vector.broadcast %cst_132 : f32 to vector<2x32xf32>
    %279 = arith.mulf %278, %277 : vector<2x32xf32>
    %280 = arith.mulf %269, %194 : vector<2x32xf32>
    %281 = arith.mulf %261, %271 : vector<2x32xf32>
    %282 = arith.addf %280, %281 : vector<2x32xf32>
    %283 = math.tanh %282 : vector<2x32xf32>
    %284 = arith.mulf %279, %283 : vector<2x32xf32>
    %c0_133 = arith.constant 0 : index
    %c0_134 = arith.constant 0 : index
    %285 = vector.load %arg19[%c0_133, %c0_134] : memref<32x32xf32, #tpu.memory_space<vmem>>, vector<32x32xf32>
    %cst_135 = arith.constant dense<0.000000e+00> : vector<2x32xf32>
    %286 = tpu.matmul %284, %285, %cst_135 {dimension_numbers = #tpu.dot_dimension_numbers<[1], [0], [0], [1], [0, 0, 1, 1], [], []>} : vector<2x32xf32>, vector<32x32xf32>, vector<2x32xf32> -> vector<2x32xf32>
    %c0_136 = arith.constant 0 : index
    %c0_137 = arith.constant 0 : index
    %287 = vector.load %arg20[%c0_136, %c0_137] : memref<1x32xf32, #tpu.memory_space<vmem>>, vector<1x32xf32>
    %288 = vector.broadcast %287 : vector<1x32xf32> to vector<2x32xf32>
    %289 = arith.addf %286, %288 : vector<2x32xf32>
    %cst_138 = arith.constant dense<0xFF800000> : vector<2xf32>
    %290 = vector.multi_reduction <maximumf>, %289, %cst_138 [1] : vector<2x32xf32> to vector<2xf32>
    %291 = vector.shape_cast %290 : vector<2xf32> to vector<2x1xf32>
    %292 = vector.broadcast %291 : vector<2x1xf32> to vector<2x32xf32>
    %293 = arith.subf %289, %292 : vector<2x32xf32>
    %294 = math.exp %293 : vector<2x32xf32>
    %cst_139 = arith.constant dense<0.000000e+00> : vector<2xf32>
    %295 = vector.multi_reduction <add>, %294, %cst_139 [1] : vector<2x32xf32> to vector<2xf32>
    %296 = vector.shape_cast %295 : vector<2xf32> to vector<2x1xf32>
    %297 = math.log %296 : vector<2x1xf32>
    %298 = vector.broadcast %297 : vector<2x1xf32> to vector<2x32xf32>
    %299 = arith.subf %293, %298 : vector<2x32xf32>
    %c2 = arith.constant 2 : index
    %300 = memref.load %arg0[%c2] : memref<7xi32, #tpu.memory_space<smem>>
    %c0_i32_140 = arith.constant 0 : i32
    %301 = arith.cmpi ne, %300, %c0_i32_140 : i32
    %cst_141 = arith.constant 0.000000e+00 : f32
    %302 = vector.broadcast %cst_141 : f32 to vector<2x32xf32>
    %303 = arith.select %301, %299, %302 : vector<2x32xf32>
    %c2_142 = arith.constant 2 : index
    %c0_143 = arith.constant 0 : index
    %c0_144 = arith.constant 0 : index
    %304 = vector.load %arg21[%c2_142, %c0_143, %c0_144] : memref<7x2x32xf32, #tpu.memory_space<vmem>>, vector<1x2x32xf32>
    %305 = vector.shape_cast %304 : vector<1x2x32xf32> to vector<2x32xf32>
    %306 = vector.shape_cast %303 : vector<2x32xf32> to vector<1x2x32xf32>
    tpu.vector_store %arg21[%c2_142, %c0_143, %c0_144], %306 {strides = array<i32>} : memref<7x2x32xf32, #tpu.memory_space<vmem>>, vector<1x2x32xf32>,
    %c0_145 = arith.constant 0 : index
    %c0_146 = arith.constant 0 : index
    %307 = vector.load %arg11[%c0_145, %c0_146] : memref<32x32xf32, #tpu.memory_space<vmem>>, vector<32x32xf32>
    %cst_147 = arith.constant dense<0.000000e+00> : vector<2x32xf32>
    %308 = tpu.matmul %284, %307, %cst_147 {dimension_numbers = #tpu.dot_dimension_numbers<[1], [0], [0], [1], [0, 0, 1, 1], [], []>} : vector<2x32xf32>, vector<32x32xf32>, vector<2x32xf32> -> vector<2x32xf32>
    %c0_148 = arith.constant 0 : index
    %c0_149 = arith.constant 0 : index
    %309 = vector.load %arg12[%c0_148, %c0_149] : memref<1x32xf32, #tpu.memory_space<vmem>>, vector<1x32xf32>
    %310 = vector.broadcast %309 : vector<1x32xf32> to vector<2x32xf32>
    %311 = arith.addf %308, %310 : vector<2x32xf32>
    %312 = vector.shape_cast %311 : vector<2x32xf32> to vector<2x1x32xf32>
    %313 = vector.broadcast %312 : vector<2x1x32xf32> to vector<2x8x32xf32>
    %314 = arith.addf %39, %313 : vector<2x8x32xf32>
    %315 = math.tanh %314 : vector<2x8x32xf32>
    %316 = vector.shape_cast %40 : vector<1x32xf32> to vector<1x1x32xf32>
    %317 = vector.broadcast %316 : vector<1x1x32xf32> to vector<2x8x32xf32>
    %318 = arith.mulf %315, %317 : vector<2x8x32xf32>
    %cst_150 = arith.constant dense<0.000000e+00> : vector<2x8xf32>
    %319 = vector.multi_reduction <add>, %318, %cst_150 [2] : vector<2x8x32xf32> to vector<2x8xf32>
    %cst_151 = arith.constant dense<0xFF800000> : vector<2xf32>
    %320 = vector.multi_reduction <maximumf>, %319, %cst_151 [1] : vector<2x8xf32> to vector<2xf32>
    %321 = vector.shape_cast %320 : vector<2xf32> to vector<2x1xf32>
    %322 = vector.broadcast %321 : vector<2x1xf32> to vector<2x8xf32>
    %323 = arith.subf %319, %322 : vector<2x8xf32>
    %324 = math.exp %323 : vector<2x8xf32>
    %cst_152 = arith.constant dense<0.000000e+00> : vector<2xf32>
    %325 = vector.multi_reduction <add>, %324, %cst_152 [1] : vector<2x8xf32> to vector<2xf32>
    %326 = vector.shape_cast %325 : vector<2xf32> to vector<2x1xf32>
    %327 = tpu.reciprocal %326 {approx = true} : vector<2x1xf32> -> vector<2x1xf32>
    %328 = vector.broadcast %327 : vector<2x1xf32> to vector<2x8xf32>
    %329 = arith.mulf %324, %328 : vector<2x8xf32>
    %330 = vector.shape_cast %329 : vector<2x8xf32> to vector<2x8x1xf32>
    %331 = vector.broadcast %330 : vector<2x8x1xf32> to vector<2x8x32xf32>
    %332 = arith.mulf %331, %38 : vector<2x8x32xf32>
    %cst_153 = arith.constant dense<0.000000e+00> : vector<2x32xf32>
    %333 = vector.multi_reduction <add>, %332, %cst_153 [1] : vector<2x8x32xf32> to vector<2x32xf32>
    %334 = vector.extract_strided_slice %11 {offsets = [6, 0], sizes = [2, 128], strides = [1, 1]} : vector<14x128xf32> to vector<2x128xf32>
    %335 = arith.addf %334, %24 : vector<2x128xf32>
    %c0_154 = arith.constant 0 : index
    %c0_155 = arith.constant 0 : index
    %336 = vector.load %arg16[%c0_154, %c0_155] : memref<32x128xf32, #tpu.memory_space<vmem>>, vector<32x128xf32>
    %cst_156 = arith.constant dense<0.000000e+00> : vector<2x128xf32>
    %337 = tpu.matmul %333, %336, %cst_156 {dimension_numbers = #tpu.dot_dimension_numbers<[1], [0], [0], [1], [0, 0, 1, 1], [], []>} : vector<2x32xf32>, vector<32x128xf32>, vector<2x128xf32> -> vector<2x128xf32>
    %338 = arith.addf %335, %337 : vector<2x128xf32>
    %c0_157 = arith.constant 0 : index
    %c0_158 = arith.constant 0 : index
    %339 = vector.load %arg17[%c0_157, %c0_158] : memref<32x128xf32, #tpu.memory_space<vmem>>, vector<32x128xf32>
    %cst_159 = arith.constant dense<0.000000e+00> : vector<2x128xf32>
    %340 = tpu.matmul %284, %339, %cst_159 {dimension_numbers = #tpu.dot_dimension_numbers<[1], [0], [0], [1], [0, 0, 1, 1], [], []>} : vector<2x32xf32>, vector<32x128xf32>, vector<2x128xf32> -> vector<2x128xf32>
    %341 = arith.addf %338, %340 : vector<2x128xf32>
    %342 = vector.extract_strided_slice %341 {offsets = [0, 0], sizes = [2, 32], strides = [1, 1]} : vector<2x128xf32> to vector<2x32xf32>
    %cst_160 = arith.constant 5.000000e-01 : f32
    %343 = vector.broadcast %cst_160 : f32 to vector<2x32xf32>
    %344 = arith.mulf %343, %342 : vector<2x32xf32>
    %345 = math.tanh %344 : vector<2x32xf32>
    %cst_161 = arith.constant 1.000000e+00 : f32
    %346 = vector.broadcast %cst_161 : f32 to vector<2x32xf32>
    %347 = arith.addf %345, %346 : vector<2x32xf32>
    %cst_162 = arith.constant 5.000000e-01 : f32
    %348 = vector.broadcast %cst_162 : f32 to vector<2x32xf32>
    %349 = arith.mulf %348, %347 : vector<2x32xf32>
    %350 = vector.extract_strided_slice %341 {offsets = [0, 32], sizes = [2, 32], strides = [1, 1]} : vector<2x128xf32> to vector<2x32xf32>
    %cst_163 = arith.constant 5.000000e-01 : f32
    %351 = vector.broadcast %cst_163 : f32 to vector<2x32xf32>
    %352 = arith.mulf %351, %350 : vector<2x32xf32>
    %353 = math.tanh %352 : vector<2x32xf32>
    %cst_164 = arith.constant 1.000000e+00 : f32
    %354 = vector.broadcast %cst_164 : f32 to vector<2x32xf32>
    %355 = arith.addf %353, %354 : vector<2x32xf32>
    %cst_165 = arith.constant 5.000000e-01 : f32
    %356 = vector.broadcast %cst_165 : f32 to vector<2x32xf32>
    %357 = arith.mulf %356, %355 : vector<2x32xf32>
    %358 = vector.extract_strided_slice %341 {offsets = [0, 64], sizes = [2, 32], strides = [1, 1]} : vector<2x128xf32> to vector<2x32xf32>
    %359 = math.tanh %358 : vector<2x32xf32>
    %360 = vector.extract_strided_slice %341 {offsets = [0, 96], sizes = [2, 32], strides = [1, 1]} : vector<2x128xf32> to vector<2x32xf32>
    %cst_166 = arith.constant 5.000000e-01 : f32
    %361 = vector.broadcast %cst_166 : f32 to vector<2x32xf32>
    %362 = arith.mulf %361, %360 : vector<2x32xf32>
    %363 = math.tanh %362 : vector<2x32xf32>
    %cst_167 = arith.constant 1.000000e+00 : f32
    %364 = vector.broadcast %cst_167 : f32 to vector<2x32xf32>
    %365 = arith.addf %363, %364 : vector<2x32xf32>
    %cst_168 = arith.constant 5.000000e-01 : f32
    %366 = vector.broadcast %cst_168 : f32 to vector<2x32xf32>
    %367 = arith.mulf %366, %365 : vector<2x32xf32>
    %368 = arith.mulf %357, %282 : vector<2x32xf32>
    %369 = arith.mulf %349, %359 : vector<2x32xf32>
    %370 = arith.addf %368, %369 : vector<2x32xf32>
    %371 = math.tanh %370 : vector<2x32xf32>
    %372 = arith.mulf %367, %371 : vector<2x32xf32>
    %c0_169 = arith.constant 0 : index
    %c0_170 = arith.constant 0 : index
    %373 = vector.load %arg19[%c0_169, %c0_170] : memref<32x32xf32, #tpu.memory_space<vmem>>, vector<32x32xf32>
    %cst_171 = arith.constant dense<0.000000e+00> : vector<2x32xf32>
    %374 = tpu.matmul %372, %373, %cst_171 {dimension_numbers = #tpu.dot_dimension_numbers<[1], [0], [0], [1], [0, 0, 1, 1], [], []>} : vector<2x32xf32>, vector<32x32xf32>, vector<2x32xf32> -> vector<2x32xf32>
    %c0_172 = arith.constant 0 : index
    %c0_173 = arith.constant 0 : index
    %375 = vector.load %arg20[%c0_172, %c0_173] : memref<1x32xf32, #tpu.memory_space<vmem>>, vector<1x32xf32>
    %376 = vector.broadcast %375 : vector<1x32xf32> to vector<2x32xf32>
    %377 = arith.addf %374, %376 : vector<2x32xf32>
    %cst_174 = arith.constant dense<0xFF800000> : vector<2xf32>
    %378 = vector.multi_reduction <maximumf>, %377, %cst_174 [1] : vector<2x32xf32> to vector<2xf32>
    %379 = vector.shape_cast %378 : vector<2xf32> to vector<2x1xf32>
    %380 = vector.broadcast %379 : vector<2x1xf32> to vector<2x32xf32>
    %381 = arith.subf %377, %380 : vector<2x32xf32>
    %382 = math.exp %381 : vector<2x32xf32>
    %cst_175 = arith.constant dense<0.000000e+00> : vector<2xf32>
    %383 = vector.multi_reduction <add>, %382, %cst_175 [1] : vector<2x32xf32> to vector<2xf32>
    %384 = vector.shape_cast %383 : vector<2xf32> to vector<2x1xf32>
    %385 = math.log %384 : vector<2x1xf32>
    %386 = vector.broadcast %385 : vector<2x1xf32> to vector<2x32xf32>
    %387 = arith.subf %381, %386 : vector<2x32xf32>
    %c3 = arith.constant 3 : index
    %388 = memref.load %arg0[%c3] : memref<7xi32, #tpu.memory_space<smem>>
    %c0_i32_176 = arith.constant 0 : i32
    %389 = arith.cmpi ne, %388, %c0_i32_176 : i32
    %cst_177 = arith.constant 0.000000e+00 : f32
    %390 = vector.broadcast %cst_177 : f32 to vector<2x32xf32>
    %391 = arith.select %389, %387, %390 : vector<2x32xf32>
    %c3_178 = arith.constant 3 : index
    %c0_179 = arith.constant 0 : index
    %c0_180 = arith.constant 0 : index
    %392 = vector.load %arg21[%c3_178, %c0_179, %c0_180] : memref<7x2x32xf32, #tpu.memory_space<vmem>>, vector<1x2x32xf32>
    %393 = vector.shape_cast %392 : vector<1x2x32xf32> to vector<2x32xf32>
    %394 = vector.shape_cast %391 : vector<2x32xf32> to vector<1x2x32xf32>
    tpu.vector_store %arg21[%c3_178, %c0_179, %c0_180], %394 {strides = array<i32>} : memref<7x2x32xf32, #tpu.memory_space<vmem>>, vector<1x2x32xf32>,
    %c0_181 = arith.constant 0 : index
    %c0_182 = arith.constant 0 : index
    %395 = vector.load %arg11[%c0_181, %c0_182] : memref<32x32xf32, #tpu.memory_space<vmem>>, vector<32x32xf32>
    %cst_183 = arith.constant dense<0.000000e+00> : vector<2x32xf32>
    %396 = tpu.matmul %372, %395, %cst_183 {dimension_numbers = #tpu.dot_dimension_numbers<[1], [0], [0], [1], [0, 0, 1, 1], [], []>} : vector<2x32xf32>, vector<32x32xf32>, vector<2x32xf32> -> vector<2x32xf32>
    %c0_184 = arith.constant 0 : index
    %c0_185 = arith.constant 0 : index
    %397 = vector.load %arg12[%c0_184, %c0_185] : memref<1x32xf32, #tpu.memory_space<vmem>>, vector<1x32xf32>
    %398 = vector.broadcast %397 : vector<1x32xf32> to vector<2x32xf32>
    %399 = arith.addf %396, %398 : vector<2x32xf32>
    %400 = vector.shape_cast %399 : vector<2x32xf32> to vector<2x1x32xf32>
    %401 = vector.broadcast %400 : vector<2x1x32xf32> to vector<2x8x32xf32>
    %402 = arith.addf %39, %401 : vector<2x8x32xf32>
    %403 = math.tanh %402 : vector<2x8x32xf32>
    %404 = vector.shape_cast %40 : vector<1x32xf32> to vector<1x1x32xf32>
    %405 = vector.broadcast %404 : vector<1x1x32xf32> to vector<2x8x32xf32>
    %406 = arith.mulf %403, %405 : vector<2x8x32xf32>
    %cst_186 = arith.constant dense<0.000000e+00> : vector<2x8xf32>
    %407 = vector.multi_reduction <add>, %406, %cst_186 [2] : vector<2x8x32xf32> to vector<2x8xf32>
    %cst_187 = arith.constant dense<0xFF800000> : vector<2xf32>
    %408 = vector.multi_reduction <maximumf>, %407, %cst_187 [1] : vector<2x8xf32> to vector<2xf32>
    %409 = vector.shape_cast %408 : vector<2xf32> to vector<2x1xf32>
    %410 = vector.broadcast %409 : vector<2x1xf32> to vector<2x8xf32>
    %411 = arith.subf %407, %410 : vector<2x8xf32>
    %412 = math.exp %411 : vector<2x8xf32>
    %cst_188 = arith.constant dense<0.000000e+00> : vector<2xf32>
    %413 = vector.multi_reduction <add>, %412, %cst_188 [1] : vector<2x8xf32> to vector<2xf32>
    %414 = vector.shape_cast %413 : vector<2xf32> to vector<2x1xf32>
    %415 = tpu.reciprocal %414 {approx = true} : vector<2x1xf32> -> vector<2x1xf32>
    %416 = vector.broadcast %415 : vector<2x1xf32> to vector<2x8xf32>
    %417 = arith.mulf %412, %416 : vector<2x8xf32>
    %418 = vector.shape_cast %417 : vector<2x8xf32> to vector<2x8x1xf32>
    %419 = vector.broadcast %418 : vector<2x8x1xf32> to vector<2x8x32xf32>
    %420 = arith.mulf %419, %38 : vector<2x8x32xf32>
    %cst_189 = arith.constant dense<0.000000e+00> : vector<2x32xf32>
    %421 = vector.multi_reduction <add>, %420, %cst_189 [1] : vector<2x8x32xf32> to vector<2x32xf32>
    %422 = vector.extract_strided_slice %11 {offsets = [8, 0], sizes = [2, 128], strides = [1, 1]} : vector<14x128xf32> to vector<2x128xf32>
    %423 = arith.addf %422, %24 : vector<2x128xf32>
    %c0_190 = arith.constant 0 : index
    %c0_191 = arith.constant 0 : index
    %424 = vector.load %arg16[%c0_190, %c0_191] : memref<32x128xf32, #tpu.memory_space<vmem>>, vector<32x128xf32>
    %cst_192 = arith.constant dense<0.000000e+00> : vector<2x128xf32>
    %425 = tpu.matmul %421, %424, %cst_192 {dimension_numbers = #tpu.dot_dimension_numbers<[1], [0], [0], [1], [0, 0, 1, 1], [], []>} : vector<2x32xf32>, vector<32x128xf32>, vector<2x128xf32> -> vector<2x128xf32>
    %426 = arith.addf %423, %425 : vector<2x128xf32>
    %c0_193 = arith.constant 0 : index
    %c0_194 = arith.constant 0 : index
    %427 = vector.load %arg17[%c0_193, %c0_194] : memref<32x128xf32, #tpu.memory_space<vmem>>, vector<32x128xf32>
    %cst_195 = arith.constant dense<0.000000e+00> : vector<2x128xf32>
    %428 = tpu.matmul %372, %427, %cst_195 {dimension_numbers = #tpu.dot_dimension_numbers<[1], [0], [0], [1], [0, 0, 1, 1], [], []>} : vector<2x32xf32>, vector<32x128xf32>, vector<2x128xf32> -> vector<2x128xf32>
    %429 = arith.addf %426, %428 : vector<2x128xf32>
    %430 = vector.extract_strided_slice %429 {offsets = [0, 0], sizes = [2, 32], strides = [1, 1]} : vector<2x128xf32> to vector<2x32xf32>
    %cst_196 = arith.constant 5.000000e-01 : f32
    %431 = vector.broadcast %cst_196 : f32 to vector<2x32xf32>
    %432 = arith.mulf %431, %430 : vector<2x32xf32>
    %433 = math.tanh %432 : vector<2x32xf32>
    %cst_197 = arith.constant 1.000000e+00 : f32
    %434 = vector.broadcast %cst_197 : f32 to vector<2x32xf32>
    %435 = arith.addf %433, %434 : vector<2x32xf32>
    %cst_198 = arith.constant 5.000000e-01 : f32
    %436 = vector.broadcast %cst_198 : f32 to vector<2x32xf32>
    %437 = arith.mulf %436, %435 : vector<2x32xf32>
    %438 = vector.extract_strided_slice %429 {offsets = [0, 32], sizes = [2, 32], strides = [1, 1]} : vector<2x128xf32> to vector<2x32xf32>
    %cst_199 = arith.constant 5.000000e-01 : f32
    %439 = vector.broadcast %cst_199 : f32 to vector<2x32xf32>
    %440 = arith.mulf %439, %438 : vector<2x32xf32>
    %441 = math.tanh %440 : vector<2x32xf32>
    %cst_200 = arith.constant 1.000000e+00 : f32
    %442 = vector.broadcast %cst_200 : f32 to vector<2x32xf32>
    %443 = arith.addf %441, %442 : vector<2x32xf32>
    %cst_201 = arith.constant 5.000000e-01 : f32
    %444 = vector.broadcast %cst_201 : f32 to vector<2x32xf32>
    %445 = arith.mulf %444, %443 : vector<2x32xf32>
    %446 = vector.extract_strided_slice %429 {offsets = [0, 64], sizes = [2, 32], strides = [1, 1]} : vector<2x128xf32> to vector<2x32xf32>
    %447 = math.tanh %446 : vector<2x32xf32>
    %448 = vector.extract_strided_slice %429 {offsets = [0, 96], sizes = [2, 32], strides = [1, 1]} : vector<2x128xf32> to vector<2x32xf32>
    %cst_202 = arith.constant 5.000000e-01 : f32
    %449 = vector.broadcast %cst_202 : f32 to vector<2x32xf32>
    %450 = arith.mulf %449, %448 : vector<2x32xf32>
    %451 = math.tanh %450 : vector<2x32xf32>
    %cst_203 = arith.constant 1.000000e+00 : f32
    %452 = vector.broadcast %cst_203 : f32 to vector<2x32xf32>
    %453 = arith.addf %451, %452 : vector<2x32xf32>
    %cst_204 = arith.constant 5.000000e-01 : f32
    %454 = vector.broadcast %cst_204 : f32 to vector<2x32xf32>
    %455 = arith.mulf %454, %453 : vector<2x32xf32>
    %456 = arith.mulf %445, %370 : vector<2x32xf32>
    %457 = arith.mulf %437, %447 : vector<2x32xf32>
    %458 = arith.addf %456, %457 : vector<2x32xf32>
    %459 = math.tanh %458 : vector<2x32xf32>
    %460 = arith.mulf %455, %459 : vector<2x32xf32>
    %c0_205 = arith.constant 0 : index
    %c0_206 = arith.constant 0 : index
    %461 = vector.load %arg19[%c0_205, %c0_206] : memref<32x32xf32, #tpu.memory_space<vmem>>, vector<32x32xf32>
    %cst_207 = arith.constant dense<0.000000e+00> : vector<2x32xf32>
    %462 = tpu.matmul %460, %461, %cst_207 {dimension_numbers = #tpu.dot_dimension_numbers<[1], [0], [0], [1], [0, 0, 1, 1], [], []>} : vector<2x32xf32>, vector<32x32xf32>, vector<2x32xf32> -> vector<2x32xf32>
    %c0_208 = arith.constant 0 : index
    %c0_209 = arith.constant 0 : index
    %463 = vector.load %arg20[%c0_208, %c0_209] : memref<1x32xf32, #tpu.memory_space<vmem>>, vector<1x32xf32>
    %464 = vector.broadcast %463 : vector<1x32xf32> to vector<2x32xf32>
    %465 = arith.addf %462, %464 : vector<2x32xf32>
    %cst_210 = arith.constant dense<0xFF800000> : vector<2xf32>
    %466 = vector.multi_reduction <maximumf>, %465, %cst_210 [1] : vector<2x32xf32> to vector<2xf32>
    %467 = vector.shape_cast %466 : vector<2xf32> to vector<2x1xf32>
    %468 = vector.broadcast %467 : vector<2x1xf32> to vector<2x32xf32>
    %469 = arith.subf %465, %468 : vector<2x32xf32>
    %470 = math.exp %469 : vector<2x32xf32>
    %cst_211 = arith.constant dense<0.000000e+00> : vector<2xf32>
    %471 = vector.multi_reduction <add>, %470, %cst_211 [1] : vector<2x32xf32> to vector<2xf32>
    %472 = vector.shape_cast %471 : vector<2xf32> to vector<2x1xf32>
    %473 = math.log %472 : vector<2x1xf32>
    %474 = vector.broadcast %473 : vector<2x1xf32> to vector<2x32xf32>
    %475 = arith.subf %469, %474 : vector<2x32xf32>
    %c4 = arith.constant 4 : index
    %476 = memref.load %arg0[%c4] : memref<7xi32, #tpu.memory_space<smem>>
    %c0_i32_212 = arith.constant 0 : i32
    %477 = arith.cmpi ne, %476, %c0_i32_212 : i32
    %cst_213 = arith.constant 0.000000e+00 : f32
    %478 = vector.broadcast %cst_213 : f32 to vector<2x32xf32>
    %479 = arith.select %477, %475, %478 : vector<2x32xf32>
    %c4_214 = arith.constant 4 : index
    %c0_215 = arith.constant 0 : index
    %c0_216 = arith.constant 0 : index
    %480 = vector.load %arg21[%c4_214, %c0_215, %c0_216] : memref<7x2x32xf32, #tpu.memory_space<vmem>>, vector<1x2x32xf32>
    %481 = vector.shape_cast %480 : vector<1x2x32xf32> to vector<2x32xf32>
    %482 = vector.shape_cast %479 : vector<2x32xf32> to vector<1x2x32xf32>
    tpu.vector_store %arg21[%c4_214, %c0_215, %c0_216], %482 {strides = array<i32>} : memref<7x2x32xf32, #tpu.memory_space<vmem>>, vector<1x2x32xf32>,
    %c0_217 = arith.constant 0 : index
    %c0_218 = arith.constant 0 : index
    %483 = vector.load %arg11[%c0_217, %c0_218] : memref<32x32xf32, #tpu.memory_space<vmem>>, vector<32x32xf32>
    %cst_219 = arith.constant dense<0.000000e+00> : vector<2x32xf32>
    %484 = tpu.matmul %460, %483, %cst_219 {dimension_numbers = #tpu.dot_dimension_numbers<[1], [0], [0], [1], [0, 0, 1, 1], [], []>} : vector<2x32xf32>, vector<32x32xf32>, vector<2x32xf32> -> vector<2x32xf32>
    %c0_220 = arith.constant 0 : index
    %c0_221 = arith.constant 0 : index
    %485 = vector.load %arg12[%c0_220, %c0_221] : memref<1x32xf32, #tpu.memory_space<vmem>>, vector<1x32xf32>
    %486 = vector.broadcast %485 : vector<1x32xf32> to vector<2x32xf32>
    %487 = arith.addf %484, %486 : vector<2x32xf32>
    %488 = vector.shape_cast %487 : vector<2x32xf32> to vector<2x1x32xf32>
    %489 = vector.broadcast %488 : vector<2x1x32xf32> to vector<2x8x32xf32>
    %490 = arith.addf %39, %489 : vector<2x8x32xf32>
    %491 = math.tanh %490 : vector<2x8x32xf32>
    %492 = vector.shape_cast %40 : vector<1x32xf32> to vector<1x1x32xf32>
    %493 = vector.broadcast %492 : vector<1x1x32xf32> to vector<2x8x32xf32>
    %494 = arith.mulf %491, %493 : vector<2x8x32xf32>
    %cst_222 = arith.constant dense<0.000000e+00> : vector<2x8xf32>
    %495 = vector.multi_reduction <add>, %494, %cst_222 [2] : vector<2x8x32xf32> to vector<2x8xf32>
    %cst_223 = arith.constant dense<0xFF800000> : vector<2xf32>
    %496 = vector.multi_reduction <maximumf>, %495, %cst_223 [1] : vector<2x8xf32> to vector<2xf32>
    %497 = vector.shape_cast %496 : vector<2xf32> to vector<2x1xf32>
    %498 = vector.broadcast %497 : vector<2x1xf32> to vector<2x8xf32>
    %499 = arith.subf %495, %498 : vector<2x8xf32>
    %500 = math.exp %499 : vector<2x8xf32>
    %cst_224 = arith.constant dense<0.000000e+00> : vector<2xf32>
    %501 = vector.multi_reduction <add>, %500, %cst_224 [1] : vector<2x8xf32> to vector<2xf32>
    %502 = vector.shape_cast %501 : vector<2xf32> to vector<2x1xf32>
    %503 = tpu.reciprocal %502 {approx = true} : vector<2x1xf32> -> vector<2x1xf32>
    %504 = vector.broadcast %503 : vector<2x1xf32> to vector<2x8xf32>
    %505 = arith.mulf %500, %504 : vector<2x8xf32>
    %506 = vector.shape_cast %505 : vector<2x8xf32> to vector<2x8x1xf32>
    %507 = vector.broadcast %506 : vector<2x8x1xf32> to vector<2x8x32xf32>
    %508 = arith.mulf %507, %38 : vector<2x8x32xf32>
    %cst_225 = arith.constant dense<0.000000e+00> : vector<2x32xf32>
    %509 = vector.multi_reduction <add>, %508, %cst_225 [1] : vector<2x8x32xf32> to vector<2x32xf32>
    %510 = vector.extract_strided_slice %11 {offsets = [10, 0], sizes = [2, 128], strides = [1, 1]} : vector<14x128xf32> to vector<2x128xf32>
    %511 = arith.addf %510, %24 : vector<2x128xf32>
    %c0_226 = arith.constant 0 : index
    %c0_227 = arith.constant 0 : index
    %512 = vector.load %arg16[%c0_226, %c0_227] : memref<32x128xf32, #tpu.memory_space<vmem>>, vector<32x128xf32>
    %cst_228 = arith.constant dense<0.000000e+00> : vector<2x128xf32>
    %513 = tpu.matmul %509, %512, %cst_228 {dimension_numbers = #tpu.dot_dimension_numbers<[1], [0], [0], [1], [0, 0, 1, 1], [], []>} : vector<2x32xf32>, vector<32x128xf32>, vector<2x128xf32> -> vector<2x128xf32>
    %514 = arith.addf %511, %513 : vector<2x128xf32>
    %c0_229 = arith.constant 0 : index
    %c0_230 = arith.constant 0 : index
    %515 = vector.load %arg17[%c0_229, %c0_230] : memref<32x128xf32, #tpu.memory_space<vmem>>, vector<32x128xf32>
    %cst_231 = arith.constant dense<0.000000e+00> : vector<2x128xf32>
    %516 = tpu.matmul %460, %515, %cst_231 {dimension_numbers = #tpu.dot_dimension_numbers<[1], [0], [0], [1], [0, 0, 1, 1], [], []>} : vector<2x32xf32>, vector<32x128xf32>, vector<2x128xf32> -> vector<2x128xf32>
    %517 = arith.addf %514, %516 : vector<2x128xf32>
    %518 = vector.extract_strided_slice %517 {offsets = [0, 0], sizes = [2, 32], strides = [1, 1]} : vector<2x128xf32> to vector<2x32xf32>
    %cst_232 = arith.constant 5.000000e-01 : f32
    %519 = vector.broadcast %cst_232 : f32 to vector<2x32xf32>
    %520 = arith.mulf %519, %518 : vector<2x32xf32>
    %521 = math.tanh %520 : vector<2x32xf32>
    %cst_233 = arith.constant 1.000000e+00 : f32
    %522 = vector.broadcast %cst_233 : f32 to vector<2x32xf32>
    %523 = arith.addf %521, %522 : vector<2x32xf32>
    %cst_234 = arith.constant 5.000000e-01 : f32
    %524 = vector.broadcast %cst_234 : f32 to vector<2x32xf32>
    %525 = arith.mulf %524, %523 : vector<2x32xf32>
    %526 = vector.extract_strided_slice %517 {offsets = [0, 32], sizes = [2, 32], strides = [1, 1]} : vector<2x128xf32> to vector<2x32xf32>
    %cst_235 = arith.constant 5.000000e-01 : f32
    %527 = vector.broadcast %cst_235 : f32 to vector<2x32xf32>
    %528 = arith.mulf %527, %526 : vector<2x32xf32>
    %529 = math.tanh %528 : vector<2x32xf32>
    %cst_236 = arith.constant 1.000000e+00 : f32
    %530 = vector.broadcast %cst_236 : f32 to vector<2x32xf32>
    %531 = arith.addf %529, %530 : vector<2x32xf32>
    %cst_237 = arith.constant 5.000000e-01 : f32
    %532 = vector.broadcast %cst_237 : f32 to vector<2x32xf32>
    %533 = arith.mulf %532, %531 : vector<2x32xf32>
    %534 = vector.extract_strided_slice %517 {offsets = [0, 64], sizes = [2, 32], strides = [1, 1]} : vector<2x128xf32> to vector<2x32xf32>
    %535 = math.tanh %534 : vector<2x32xf32>
    %536 = vector.extract_strided_slice %517 {offsets = [0, 96], sizes = [2, 32], strides = [1, 1]} : vector<2x128xf32> to vector<2x32xf32>
    %cst_238 = arith.constant 5.000000e-01 : f32
    %537 = vector.broadcast %cst_238 : f32 to vector<2x32xf32>
    %538 = arith.mulf %537, %536 : vector<2x32xf32>
    %539 = math.tanh %538 : vector<2x32xf32>
    %cst_239 = arith.constant 1.000000e+00 : f32
    %540 = vector.broadcast %cst_239 : f32 to vector<2x32xf32>
    %541 = arith.addf %539, %540 : vector<2x32xf32>
    %cst_240 = arith.constant 5.000000e-01 : f32
    %542 = vector.broadcast %cst_240 : f32 to vector<2x32xf32>
    %543 = arith.mulf %542, %541 : vector<2x32xf32>
    %544 = arith.mulf %533, %458 : vector<2x32xf32>
    %545 = arith.mulf %525, %535 : vector<2x32xf32>
    %546 = arith.addf %544, %545 : vector<2x32xf32>
    %547 = math.tanh %546 : vector<2x32xf32>
    %548 = arith.mulf %543, %547 : vector<2x32xf32>
    %c0_241 = arith.constant 0 : index
    %c0_242 = arith.constant 0 : index
    %549 = vector.load %arg19[%c0_241, %c0_242] : memref<32x32xf32, #tpu.memory_space<vmem>>, vector<32x32xf32>
    %cst_243 = arith.constant dense<0.000000e+00> : vector<2x32xf32>
    %550 = tpu.matmul %548, %549, %cst_243 {dimension_numbers = #tpu.dot_dimension_numbers<[1], [0], [0], [1], [0, 0, 1, 1], [], []>} : vector<2x32xf32>, vector<32x32xf32>, vector<2x32xf32> -> vector<2x32xf32>
    %c0_244 = arith.constant 0 : index
    %c0_245 = arith.constant 0 : index
    %551 = vector.load %arg20[%c0_244, %c0_245] : memref<1x32xf32, #tpu.memory_space<vmem>>, vector<1x32xf32>
    %552 = vector.broadcast %551 : vector<1x32xf32> to vector<2x32xf32>
    %553 = arith.addf %550, %552 : vector<2x32xf32>
    %cst_246 = arith.constant dense<0xFF800000> : vector<2xf32>
    %554 = vector.multi_reduction <maximumf>, %553, %cst_246 [1] : vector<2x32xf32> to vector<2xf32>
    %555 = vector.shape_cast %554 : vector<2xf32> to vector<2x1xf32>
    %556 = vector.broadcast %555 : vector<2x1xf32> to vector<2x32xf32>
    %557 = arith.subf %553, %556 : vector<2x32xf32>
    %558 = math.exp %557 : vector<2x32xf32>
    %cst_247 = arith.constant dense<0.000000e+00> : vector<2xf32>
    %559 = vector.multi_reduction <add>, %558, %cst_247 [1] : vector<2x32xf32> to vector<2xf32>
    %560 = vector.shape_cast %559 : vector<2xf32> to vector<2x1xf32>
    %561 = math.log %560 : vector<2x1xf32>
    %562 = vector.broadcast %561 : vector<2x1xf32> to vector<2x32xf32>
    %563 = arith.subf %557, %562 : vector<2x32xf32>
    %c5 = arith.constant 5 : index
    %564 = memref.load %arg0[%c5] : memref<7xi32, #tpu.memory_space<smem>>
    %c0_i32_248 = arith.constant 0 : i32
    %565 = arith.cmpi ne, %564, %c0_i32_248 : i32
    %cst_249 = arith.constant 0.000000e+00 : f32
    %566 = vector.broadcast %cst_249 : f32 to vector<2x32xf32>
    %567 = arith.select %565, %563, %566 : vector<2x32xf32>
    %c5_250 = arith.constant 5 : index
    %c0_251 = arith.constant 0 : index
    %c0_252 = arith.constant 0 : index
    %568 = vector.load %arg21[%c5_250, %c0_251, %c0_252] : memref<7x2x32xf32, #tpu.memory_space<vmem>>, vector<1x2x32xf32>
    %569 = vector.shape_cast %568 : vector<1x2x32xf32> to vector<2x32xf32>
    %570 = vector.shape_cast %567 : vector<2x32xf32> to vector<1x2x32xf32>
    tpu.vector_store %arg21[%c5_250, %c0_251, %c0_252], %570 {strides = array<i32>} : memref<7x2x32xf32, #tpu.memory_space<vmem>>, vector<1x2x32xf32>,
    %c0_253 = arith.constant 0 : index
    %c0_254 = arith.constant 0 : index
    %571 = vector.load %arg11[%c0_253, %c0_254] : memref<32x32xf32, #tpu.memory_space<vmem>>, vector<32x32xf32>
    %cst_255 = arith.constant dense<0.000000e+00> : vector<2x32xf32>
    %572 = tpu.matmul %548, %571, %cst_255 {dimension_numbers = #tpu.dot_dimension_numbers<[1], [0], [0], [1], [0, 0, 1, 1], [], []>} : vector<2x32xf32>, vector<32x32xf32>, vector<2x32xf32> -> vector<2x32xf32>
    %c0_256 = arith.constant 0 : index
    %c0_257 = arith.constant 0 : index
    %573 = vector.load %arg12[%c0_256, %c0_257] : memref<1x32xf32, #tpu.memory_space<vmem>>, vector<1x32xf32>
    %574 = vector.broadcast %573 : vector<1x32xf32> to vector<2x32xf32>
    %575 = arith.addf %572, %574 : vector<2x32xf32>
    %576 = vector.shape_cast %575 : vector<2x32xf32> to vector<2x1x32xf32>
    %577 = vector.broadcast %576 : vector<2x1x32xf32> to vector<2x8x32xf32>
    %578 = arith.addf %39, %577 : vector<2x8x32xf32>
    %579 = math.tanh %578 : vector<2x8x32xf32>
    %580 = vector.shape_cast %40 : vector<1x32xf32> to vector<1x1x32xf32>
    %581 = vector.broadcast %580 : vector<1x1x32xf32> to vector<2x8x32xf32>
    %582 = arith.mulf %579, %581 : vector<2x8x32xf32>
    %cst_258 = arith.constant dense<0.000000e+00> : vector<2x8xf32>
    %583 = vector.multi_reduction <add>, %582, %cst_258 [2] : vector<2x8x32xf32> to vector<2x8xf32>
    %cst_259 = arith.constant dense<0xFF800000> : vector<2xf32>
    %584 = vector.multi_reduction <maximumf>, %583, %cst_259 [1] : vector<2x8xf32> to vector<2xf32>
    %585 = vector.shape_cast %584 : vector<2xf32> to vector<2x1xf32>
    %586 = vector.broadcast %585 : vector<2x1xf32> to vector<2x8xf32>
    %587 = arith.subf %583, %586 : vector<2x8xf32>
    %588 = math.exp %587 : vector<2x8xf32>
    %cst_260 = arith.constant dense<0.000000e+00> : vector<2xf32>
    %589 = vector.multi_reduction <add>, %588, %cst_260 [1] : vector<2x8xf32> to vector<2xf32>
    %590 = vector.shape_cast %589 : vector<2xf32> to vector<2x1xf32>
    %591 = tpu.reciprocal %590 {approx = true} : vector<2x1xf32> -> vector<2x1xf32>
    %592 = vector.broadcast %591 : vector<2x1xf32> to vector<2x8xf32>
    %593 = arith.mulf %588, %592 : vector<2x8xf32>
    %594 = vector.shape_cast %593 : vector<2x8xf32> to vector<2x8x1xf32>
    %595 = vector.broadcast %594 : vector<2x8x1xf32> to vector<2x8x32xf32>
    %596 = arith.mulf %595, %38 : vector<2x8x32xf32>
    %cst_261 = arith.constant dense<0.000000e+00> : vector<2x32xf32>
    %597 = vector.multi_reduction <add>, %596, %cst_261 [1] : vector<2x8x32xf32> to vector<2x32xf32>
    %598 = vector.extract_strided_slice %11 {offsets = [12, 0], sizes = [2, 128], strides = [1, 1]} : vector<14x128xf32> to vector<2x128xf32>
    %599 = arith.addf %598, %24 : vector<2x128xf32>
    %c0_262 = arith.constant 0 : index
    %c0_263 = arith.constant 0 : index
    %600 = vector.load %arg16[%c0_262, %c0_263] : memref<32x128xf32, #tpu.memory_space<vmem>>, vector<32x128xf32>
    %cst_264 = arith.constant dense<0.000000e+00> : vector<2x128xf32>
    %601 = tpu.matmul %597, %600, %cst_264 {dimension_numbers = #tpu.dot_dimension_numbers<[1], [0], [0], [1], [0, 0, 1, 1], [], []>} : vector<2x32xf32>, vector<32x128xf32>, vector<2x128xf32> -> vector<2x128xf32>
    %602 = arith.addf %599, %601 : vector<2x128xf32>
    %c0_265 = arith.constant 0 : index
    %c0_266 = arith.constant 0 : index
    %603 = vector.load %arg17[%c0_265, %c0_266] : memref<32x128xf32, #tpu.memory_space<vmem>>, vector<32x128xf32>
    %cst_267 = arith.constant dense<0.000000e+00> : vector<2x128xf32>
    %604 = tpu.matmul %548, %603, %cst_267 {dimension_numbers = #tpu.dot_dimension_numbers<[1], [0], [0], [1], [0, 0, 1, 1], [], []>} : vector<2x32xf32>, vector<32x128xf32>, vector<2x128xf32> -> vector<2x128xf32>
    %605 = arith.addf %602, %604 : vector<2x128xf32>
    %606 = vector.extract_strided_slice %605 {offsets = [0, 0], sizes = [2, 32], strides = [1, 1]} : vector<2x128xf32> to vector<2x32xf32>
    %cst_268 = arith.constant 5.000000e-01 : f32
    %607 = vector.broadcast %cst_268 : f32 to vector<2x32xf32>
    %608 = arith.mulf %607, %606 : vector<2x32xf32>
    %609 = math.tanh %608 : vector<2x32xf32>
    %cst_269 = arith.constant 1.000000e+00 : f32
    %610 = vector.broadcast %cst_269 : f32 to vector<2x32xf32>
    %611 = arith.addf %609, %610 : vector<2x32xf32>
    %cst_270 = arith.constant 5.000000e-01 : f32
    %612 = vector.broadcast %cst_270 : f32 to vector<2x32xf32>
    %613 = arith.mulf %612, %611 : vector<2x32xf32>
    %614 = vector.extract_strided_slice %605 {offsets = [0, 32], sizes = [2, 32], strides = [1, 1]} : vector<2x128xf32> to vector<2x32xf32>
    %cst_271 = arith.constant 5.000000e-01 : f32
    %615 = vector.broadcast %cst_271 : f32 to vector<2x32xf32>
    %616 = arith.mulf %615, %614 : vector<2x32xf32>
    %617 = math.tanh %616 : vector<2x32xf32>
    %cst_272 = arith.constant 1.000000e+00 : f32
    %618 = vector.broadcast %cst_272 : f32 to vector<2x32xf32>
    %619 = arith.addf %617, %618 : vector<2x32xf32>
    %cst_273 = arith.constant 5.000000e-01 : f32
    %620 = vector.broadcast %cst_273 : f32 to vector<2x32xf32>
    %621 = arith.mulf %620, %619 : vector<2x32xf32>
    %622 = vector.extract_strided_slice %605 {offsets = [0, 64], sizes = [2, 32], strides = [1, 1]} : vector<2x128xf32> to vector<2x32xf32>
    %623 = math.tanh %622 : vector<2x32xf32>
    %624 = vector.extract_strided_slice %605 {offsets = [0, 96], sizes = [2, 32], strides = [1, 1]} : vector<2x128xf32> to vector<2x32xf32>
    %cst_274 = arith.constant 5.000000e-01 : f32
    %625 = vector.broadcast %cst_274 : f32 to vector<2x32xf32>
    %626 = arith.mulf %625, %624 : vector<2x32xf32>
    %627 = math.tanh %626 : vector<2x32xf32>
    %cst_275 = arith.constant 1.000000e+00 : f32
    %628 = vector.broadcast %cst_275 : f32 to vector<2x32xf32>
    %629 = arith.addf %627, %628 : vector<2x32xf32>
    %cst_276 = arith.constant 5.000000e-01 : f32
    %630 = vector.broadcast %cst_276 : f32 to vector<2x32xf32>
    %631 = arith.mulf %630, %629 : vector<2x32xf32>
    %632 = arith.mulf %621, %546 : vector<2x32xf32>
    %633 = arith.mulf %613, %623 : vector<2x32xf32>
    %634 = arith.addf %632, %633 : vector<2x32xf32>
    %635 = math.tanh %634 : vector<2x32xf32>
    %636 = arith.mulf %631, %635 : vector<2x32xf32>
    %c0_277 = arith.constant 0 : index
    %c0_278 = arith.constant 0 : index
    %637 = vector.load %arg19[%c0_277, %c0_278] : memref<32x32xf32, #tpu.memory_space<vmem>>, vector<32x32xf32>
    %cst_279 = arith.constant dense<0.000000e+00> : vector<2x32xf32>
    %638 = tpu.matmul %636, %637, %cst_279 {dimension_numbers = #tpu.dot_dimension_numbers<[1], [0], [0], [1], [0, 0, 1, 1], [], []>} : vector<2x32xf32>, vector<32x32xf32>, vector<2x32xf32> -> vector<2x32xf32>
    %c0_280 = arith.constant 0 : index
    %c0_281 = arith.constant 0 : index
    %639 = vector.load %arg20[%c0_280, %c0_281] : memref<1x32xf32, #tpu.memory_space<vmem>>, vector<1x32xf32>
    %640 = vector.broadcast %639 : vector<1x32xf32> to vector<2x32xf32>
    %641 = arith.addf %638, %640 : vector<2x32xf32>
    %cst_282 = arith.constant dense<0xFF800000> : vector<2xf32>
    %642 = vector.multi_reduction <maximumf>, %641, %cst_282 [1] : vector<2x32xf32> to vector<2xf32>
    %643 = vector.shape_cast %642 : vector<2xf32> to vector<2x1xf32>
    %644 = vector.broadcast %643 : vector<2x1xf32> to vector<2x32xf32>
    %645 = arith.subf %641, %644 : vector<2x32xf32>
    %646 = math.exp %645 : vector<2x32xf32>
    %cst_283 = arith.constant dense<0.000000e+00> : vector<2xf32>
    %647 = vector.multi_reduction <add>, %646, %cst_283 [1] : vector<2x32xf32> to vector<2xf32>
    %648 = vector.shape_cast %647 : vector<2xf32> to vector<2x1xf32>
    %649 = math.log %648 : vector<2x1xf32>
    %650 = vector.broadcast %649 : vector<2x1xf32> to vector<2x32xf32>
    %651 = arith.subf %645, %650 : vector<2x32xf32>
    %c6 = arith.constant 6 : index
    %652 = memref.load %arg0[%c6] : memref<7xi32, #tpu.memory_space<smem>>
    %c0_i32_284 = arith.constant 0 : i32
    %653 = arith.cmpi ne, %652, %c0_i32_284 : i32
    %cst_285 = arith.constant 0.000000e+00 : f32
    %654 = vector.broadcast %cst_285 : f32 to vector<2x32xf32>
    %655 = arith.select %653, %651, %654 : vector<2x32xf32>
    %c6_286 = arith.constant 6 : index
    %c0_287 = arith.constant 0 : index
    %c0_288 = arith.constant 0 : index
    %656 = vector.load %arg21[%c6_286, %c0_287, %c0_288] : memref<7x2x32xf32, #tpu.memory_space<vmem>>, vector<1x2x32xf32>
    %657 = vector.shape_cast %656 : vector<1x2x32xf32> to vector<2x32xf32>
    %658 = vector.shape_cast %655 : vector<2x32xf32> to vector<1x2x32xf32>
    tpu.vector_store %arg21[%c6_286, %c0_287, %c0_288], %658 {strides = array<i32>} : memref<7x2x32xf32, #tpu.memory_space<vmem>>, vector<1x2x32xf32>,
    return
  }
}

</mosaic_0001>

<llo_original>
// kernel: att_model_forward.1
$region0: #{att_model_forward.1}
  #allocation0 [shape = 'u32[]', space=smem, size = 0x4, offset = 0x4, fixed_abs, tag = 'smem constant byte address 0x4 - core index']
  #allocation1 [shape = 'u32[72,128]{1,0:T(1,128)}', space=vmem, size = 0x9000, scoped, tag = 'internal scratch']
  %s0 = inlined_call_operand.vmem [shape: s32[7], index: 0, kind: input, shape index: {}]
  %s1 = inlined_call_operand.vmem [shape: s32[14,1], index: 1, kind: input, shape index: {}]
  %s2 = inlined_call_operand.vmem [shape: f32[2,64], index: 2, kind: input, shape index: {}]
  %s3 = inlined_call_operand.vmem [shape: f32[16,64], index: 3, kind: input, shape index: {}]
  %s4 = inlined_call_operand.vmem [shape: f32[32,32], index: 4, kind: input, shape index: {}]
  %s5 = inlined_call_operand.vmem [shape: f32[64,32], index: 5, kind: input, shape index: {}]
  %s6 = inlined_call_operand.vmem [shape: f32[1,32], index: 6, kind: input, shape index: {}]
  %s7 = inlined_call_operand.vmem [shape: f32[64,32], index: 7, kind: input, shape index: {}]
  %s8 = inlined_call_operand.vmem [shape: f32[1,32], index: 8, kind: input, shape index: {}]
  %s9 = inlined_call_operand.vmem [shape: f32[32,32], index: 9, kind: input, shape index: {}]
  %s10 = inlined_call_operand.vmem [shape: f32[1,32], index: 10, kind: input, shape index: {}]
  %s11 = inlined_call_operand.vmem [shape: f32[32,32], index: 11, kind: input, shape index: {}]
  %s12 = inlined_call_operand.vmem [shape: f32[1,32], index: 12, kind: input, shape index: {}]
  %s13 = inlined_call_operand.vmem [shape: f32[1,32], index: 13, kind: input, shape index: {}]
  %s14 = inlined_call_operand.vmem [shape: f32[32,128], index: 14, kind: input, shape index: {}]
  %s15 = inlined_call_operand.vmem [shape: f32[32,128], index: 15, kind: input, shape index: {}]
  %s16 = inlined_call_operand.hbm [shape: f32[32,128], index: 16, kind: input, shape index: {}]
  %s17 = inlined_call_operand.hbm [shape: f32[32,128], index: 17, kind: input, shape index: {}]
  %s18 = inlined_call_operand.hbm [shape: f32[1,128], index: 18, kind: input, shape index: {}]
  %s19 = inlined_call_operand.hbm [shape: f32[32,32], index: 19, kind: input, shape index: {}]
  %s20 = inlined_call_operand.hbm [shape: f32[1,32], index: 20, kind: input, shape index: {}]
  %s21 = inlined_call_operand.hbm [shape: f32[7,2,32], index: 21, kind: output, shape index: {}]
  %s22 = sld [smem:[#allocation0]]
  $region118: #{att_model_forward.1} parent=0
    _
  %s24 = ssub.s32 1, %s22
  %s25 = scalar_select 0, %s24, %s22
  $region1: #{att_model_forward.1} parent=0
    #allocation2 [shape = 'u8[512]{0}', space=smem, size = 0x200, scoped, tag = 'input window, operand 0, single buffered']
    #allocation3 [shape = 's32[1]{0}', space=sflag, size = 0x4, scoped, tag = 'scoped memory for att_model_forward.1']
    #allocation4 [shape = 's32[1]{0}', space=sflag, size = 0x4, scoped, tag = 'scoped memory for att_model_forward.1']
    #allocation5 [shape = 's32[1]{0}', space=sflag, size = 0x4, scoped, tag = 'scoped memory for att_model_forward.1']
    #allocation6 [shape = 'u8[16384]{0}', space=vmem, size = 0x4000, scoped, tag = 'input window, operand 16, single buffered']
    #allocation7 [shape = 'u8[16384]{0}', space=vmem, size = 0x4000, scoped, tag = 'input window, operand 17, single buffered']
    #allocation8 [shape = 's32[1]{0}', space=sflag, size = 0x4, scoped, tag = 'scoped memory for att_model_forward.1']
    #allocation9 [shape = 'u8[512]{0}', space=vmem, size = 0x400, scoped, tag = 'input window, operand 18, single buffered']
    #allocation10 [shape = 'u8[16384]{0}', space=vmem, size = 0x4000, scoped, tag = 'input window, operand 19, single buffered']
    #allocation11 [shape = 's32[1]{0}', space=sflag, size = 0x4, scoped, tag = 'scoped memory for att_model_forward.1']
    #allocation12 [shape = 'u8[512]{0}', space=vmem, size = 0x400, scoped, tag = 'input window, operand 20, single buffered']
    #allocation13 [shape = 'u8[7168]{0}', space=vmem, size = 0x1c00, scoped, tag = 'output window, operand 0, single buffered']
    %26 = vsyncpa [#allocation5], 0
    %27 = vsyncpa [#allocation3], 0
    %28 = vsyncpa [#allocation8], 0
    %29 = vsyncpa [#allocation11], 0
    %30 = vsyncpa [#allocation4], 0
    // Predicated region
    $region2: #{att_model_forward.1} parent=1 // pred_check
      _
    $region3: #{att_model_forward.1} parent=1 // pred_check_branch
      %32 = sbr.rel (0) target = $region5
    $region4: #{att_model_forward.1} parent=1 // pred_region
      %34 = vsyncadd [#allocation5], 0
      %s36 = sshll.u32 %s0, 4
      %s37 = int_to_ptr.vmem [resolvable:$true] %s36
      %39 = dma.vmem_to_smem %s37, 16, [#allocation2], [#allocation5]
    $region5: #{att_model_forward.1} parent=1 // pred_fallthru
      _
    // Predicated region
    $region6: #{att_model_forward.1} parent=1 // pred_check
      _
    $region7: #{att_model_forward.1} parent=1 // pred_check_branch
      %41 = sbr.rel (0) target = $region9
    $region8: #{att_model_forward.1} parent=1 // pred_region
      _
    $region9: #{att_model_forward.1} parent=1 // pred_fallthru
      _
    // Predicated region
    $region10: #{att_model_forward.1} parent=1 // pred_check
      _
    $region11: #{att_model_forward.1} parent=1 // pred_check_branch
      %43 = sbr.rel (0) target = $region13
    $region12: #{att_model_forward.1} parent=1 // pred_region
      _
    $region13: #{att_model_forward.1} parent=1 // pred_fallthru
      _
    // Predicated region
    $region14: #{att_model_forward.1} parent=1 // pred_check
      _
    $region15: #{att_model_forward.1} parent=1 // pred_check_branch
      %45 = sbr.rel (0) target = $region17
    $region16: #{att_model_forward.1} parent=1 // pred_region
      _
    $region17: #{att_model_forward.1} parent=1 // pred_fallthru
      _
    // Predicated region
    $region18: #{att_model_forward.1} parent=1 // pred_check
      _
    $region19: #{att_model_forward.1} parent=1 // pred_check_branch
      %47 = sbr.rel (0) target = $region21
    $region20: #{att_model_forward.1} parent=1 // pred_region
      _
    $region21: #{att_model_forward.1} parent=1 // pred_fallthru
      _
    // Predicated region
    $region22: #{att_model_forward.1} parent=1 // pred_check
      _
    $region23: #{att_model_forward.1} parent=1 // pred_check_branch
      %49 = sbr.rel (0) target = $region25
    $region24: #{att_model_forward.1} parent=1 // pred_region
      _
    $region25: #{att_model_forward.1} parent=1 // pred_fallthru
      _
    // Predicated region
    $region26: #{att_model_forward.1} parent=1 // pred_check
      _
    $region27: #{att_model_forward.1} parent=1 // pred_check_branch
      %51 = sbr.rel (0) target = $region29
    $region28: #{att_model_forward.1} parent=1 // pred_region
      _
    $region29: #{att_model_forward.1} parent=1 // pred_fallthru
      _
    // Predicated region
    $region30: #{att_model_forward.1} parent=1 // pred_check
      _
    $region31: #{att_model_forward.1} parent=1 // pred_check_branch
      %53 = sbr.rel (0) target = $region33
    $region32: #{att_model_forward.1} parent=1 // pred_region
      _
    $region33: #{att_model_forward.1} parent=1 // pred_fallthru
      _
    // Predicated region
    $region34: #{att_model_forward.1} parent=1 // pred_check
      _
    $region35: #{att_model_forward.1} parent=1 // pred_check_branch
      %55 = sbr.rel (0) target = $region37
    $region36: #{att_model_forward.1} parent=1 // pred_region
      _
    $region37: #{att_model_forward.1} parent=1 // pred_fallthru
      _
    // Predicated region
    $region38: #{att_model_forward.1} parent=1 // pred_check
      _
    $region39: #{att_model_forward.1} parent=1 // pred_check_branch
      %57 = sbr.rel (0) target = $region41
    $region40: #{att_model_forward.1} parent=1 // pred_region
      _
    $region41: #{att_model_forward.1} parent=1 // pred_fallthru
      _
    // Predicated region
    $region42: #{att_model_forward.1} parent=1 // pred_check
      _
    $region43: #{att_model_forward.1} parent=1 // pred_check_branch
      %59 = sbr.rel (0) target = $region45
    $region44: #{att_model_forward.1} parent=1 // pred_region
      _
    $region45: #{att_model_forward.1} parent=1 // pred_fallthru
      _
    // Predicated region
    $region46: #{att_model_forward.1} parent=1 // pred_check
      _
    $region47: #{att_model_forward.1} parent=1 // pred_check_branch
      %61 = sbr.rel (0) target = $region49
    $region48: #{att_model_forward.1} parent=1 // pred_region
      _
    $region49: #{att_model_forward.1} parent=1 // pred_fallthru
      _
    // Predicated region
    $region50: #{att_model_forward.1} parent=1 // pred_check
      _
    $region51: #{att_model_forward.1} parent=1 // pred_check_branch
      %63 = sbr.rel (0) target = $region53
    $region52: #{att_model_forward.1} parent=1 // pred_region
      _
    $region53: #{att_model_forward.1} parent=1 // pred_fallthru
      _
    // Predicated region
    $region54: #{att_model_forward.1} parent=1 // pred_check
      _
    $region55: #{att_model_forward.1} parent=1 // pred_check_branch
      %65 = sbr.rel (0) target = $region57
    $region56: #{att_model_forward.1} parent=1 // pred_region
      _
    $region57: #{att_model_forward.1} parent=1 // pred_fallthru
      _
    // Predicated region
    $region58: #{att_model_forward.1} parent=1 // pred_check
      _
    $region59: #{att_model_forward.1} parent=1 // pred_check_branch
      %67 = sbr.rel (0) target = $region61
    $region60: #{att_model_forward.1} parent=1 // pred_region
      _
    $region61: #{att_model_forward.1} parent=1 // pred_fallthru
      _
    // Predicated region
    $region62: #{att_model_forward.1} parent=1 // pred_check
      _
    $region63: #{att_model_forward.1} parent=1 // pred_check_branch
      %69 = sbr.rel (0) target = $region65
    $region64: #{att_model_forward.1} parent=1 // pred_region
      _
    $region65: #{att_model_forward.1} parent=1 // pred_fallthru
      _
    // Predicated region
    $region66: #{att_model_forward.1} parent=1 // pred_check
      _
    $region67: #{att_model_forward.1} parent=1 // pred_check_branch
      %71 = sbr.rel (0) target = $region69
    $region68: #{att_model_forward.1} parent=1 // pred_region
      %73 = vsyncadd [#allocation3], 0
      %s74 = sshll.u32 %s16, 4
      %s75 = int_to_ptr.hbm [resolvable:$true] %s74
      %s76 = sshll.u32 [#allocation6], 4
      %s77 = int_to_ptr.vmem [resolvable:$true] %s76
      %82 = dma.hbm_to_vmem [thread:$0]  %s75, 512, %s77, [#allocation3], 128, 128, 8
    $region69: #{att_model_forward.1} parent=1 // pred_fallthru
      _
    // Predicated region
    $region70: #{att_model_forward.1} parent=1 // pred_check
      _
    $region71: #{att_model_forward.1} parent=1 // pred_check_branch
      %84 = sbr.rel (0) target = $region73
    $region72: #{att_model_forward.1} parent=1 // pred_region
      %86 = vsyncadd [#allocation8], 0
      %s87 = sshll.u32 %s17, 4
      %s88 = int_to_ptr.hbm [resolvable:$true] %s87
      %s89 = sshll.u32 [#allocation7], 4
      %s90 = int_to_ptr.vmem [resolvable:$true] %s89
      %95 = dma.hbm_to_vmem [thread:$0]  %s88, 512, %s90, [#allocation8], 128, 128, 8
    $region73: #{att_model_forward.1} parent=1 // pred_fallthru
      _
    // Predicated region
    $region74: #{att_model_forward.1} parent=1 // pred_check
      _
    $region75: #{att_model_forward.1} parent=1 // pred_check_branch
      %97 = sbr.rel (0) target = $region77
    $region76: #{att_model_forward.1} parent=1 // pred_region
      %99 = vsyncadd [#allocation8], 0
      %s101 = sshll.u32 %s18, 4
      %s102 = int_to_ptr.hbm [resolvable:$true] %s101
      %s103 = sshll.u32 [#allocation9], 4
      %s104 = int_to_ptr.vmem [resolvable:$true] %s103
      %106 = dma.hbm_to_vmem [thread:$0]  %s102, 16, %s104, [#allocation8]
    $region77: #{att_model_forward.1} parent=1 // pred_fallthru
      _
    // Predicated region
    $region78: #{att_model_forward.1} parent=1 // pred_check
      _
    $region79: #{att_model_forward.1} parent=1 // pred_check_branch
      %108 = sbr.rel (0) target = $region81
    $region80: #{att_model_forward.1} parent=1 // pred_region
      %110 = vsyncadd [#allocation11], 0
      %s111 = sshll.u32 %s19, 4
      %s112 = int_to_ptr.hbm [resolvable:$true] %s111
      %s113 = sshll.u32 [#allocation10], 4
      %s114 = int_to_ptr.vmem [resolvable:$true] %s113
      %119 = dma.hbm_to_vmem [thread:$0]  %s112, 512, %s114, [#allocation11], 128, 128, 8
    $region81: #{att_model_forward.1} parent=1 // pred_fallthru
      _
    // Predicated region
    $region82: #{att_model_forward.1} parent=1 // pred_check
      _
    $region83: #{att_model_forward.1} parent=1 // pred_check_branch
      %121 = sbr.rel (0) target = $region85
    $region84: #{att_model_forward.1} parent=1 // pred_region
      %123 = vsyncadd [#allocation11], 0
      %s125 = sshll.u32 %s20, 4
      %s126 = int_to_ptr.hbm [resolvable:$true] %s125
      %s127 = sshll.u32 [#allocation12], 4
      %s128 = int_to_ptr.vmem [resolvable:$true] %s127
      %130 = dma.hbm_to_vmem [thread:$0]  %s126, 16, %s128, [#allocation11]
    $region85: #{att_model_forward.1} parent=1 // pred_fallthru
      _
    // Predicated region
    $region86: #{att_model_forward.1} parent=1 // pred_check
      _
    $region87: #{att_model_forward.1} parent=1 // pred_check_branch
      %132 = sbr.rel (0) target = $region89
    $region88: #{att_model_forward.1} parent=1 // pred_region
      %134 = dma.done [#allocation5], 16
    $region89: #{att_model_forward.1} parent=1 // pred_fallthru
      _
    // Predicated region
    $region90: #{att_model_forward.1} parent=1 // pred_check
      _
    $region91: #{att_model_forward.1} parent=1 // pred_check_branch
      %136 = sbr.rel (0) target = $region93
    $region92: #{att_model_forward.1} parent=1 // pred_region
      %138 = dma.done [#allocation3], 512
    $region93: #{att_model_forward.1} parent=1 // pred_fallthru
      _
    // Predicated region
    $region94: #{att_model_forward.1} parent=1 // pred_check
      _
    $region95: #{att_model_forward.1} parent=1 // pred_check_branch
      %140 = sbr.rel (0) target = $region97
    $region96: #{att_model_forward.1} parent=1 // pred_region
      %142 = dma.done [#allocation8], 512
    $region97: #{att_model_forward.1} parent=1 // pred_fallthru
      _
    // Predicated region
    $region98: #{att_model_forward.1} parent=1 // pred_check
      _
    $region99: #{att_model_forward.1} parent=1 // pred_check_branch
      %144 = sbr.rel (0) target = $region101
    $region100: #{att_model_forward.1} parent=1 // pred_region
      %146 = dma.done [#allocation8], 16
    $region101: #{att_model_forward.1} parent=1 // pred_fallthru
      _
    // Predicated region
    $region102: #{att_model_forward.1} parent=1 // pred_check
      _
    $region103: #{att_model_forward.1} parent=1 // pred_check_branch
      %148 = sbr.rel (0) target = $region105
    $region104: #{att_model_forward.1} parent=1 // pred_region
      %150 = dma.done [#allocation11], 512
    $region105: #{att_model_forward.1} parent=1 // pred_fallthru
      _
    // Predicated region
    $region106: #{att_model_forward.1} parent=1 // pred_check
      _
    $region107: #{att_model_forward.1} parent=1 // pred_check_branch
      %152 = sbr.rel (0) target = $region109
    $region108: #{att_model_forward.1} parent=1 // pred_region
      %154 = dma.done [#allocation11], 16
    $region109: #{att_model_forward.1} parent=1 // pred_fallthru
      _
    %155 = sfence
    %v156 = vlaneseq
    %v157 = vand.u32 %v156, 127
    %v158 = vld [vmem:[%s1] sm:$0xff]
    %v159 = vld [vmem:[%s1 + $0x8] sm:$0x3f]
    %160 = vset.pattern.permute.xlu0 0
    %161 = vperm.xlu0 %160, %v158
    %v162 = vpop.permute.xlu0 %161
    %163 = vset.pattern.permute.xlu0 0
    %164 = vperm.xlu0 %163, %v159
    %v165 = vpop.permute.xlu0 %164
    %vm166 = vcmp.eq.s32.totalorder %v157, %v162
    %vm167 = vcmp.eq.s32.totalorder %v157, %v165
    %v168 = vsel %vm166, 1, 0
    %v169 = vsel %vm167, 1, 0
    %v170 = vcvt.s32.f32 %v168
    %v171 = vcvt.s32.f32 %v169
    %v172 = vld [vmem:[%s4] sm:$0xff]
    %v173 = vld [vmem:[%s4 + $0x8] sm:$0xff]
    %v174 = vld [vmem:[%s4 + $0x10] sm:$0xff]
    %v175 = vld [vmem:[%s4 + $0x18] sm:$0xff]
    %vm176 = vcmask 261120
    %v178 = vsel %vm176, %v170, 0
    %v181 = vsel %vm176, %v171, 0
    %183 = vmatpush.msra.mxu0 0.0
    %184 = vmatpush.msra.mxu0 0.0
    %185 = vmatpush.msra.mxu0 0.0
    %186 = vmatpush.msra.mxu0 0.0
    %187 = vmatpush.msra.mxu0 0.0
    %188 = vmatpush.msra.mxu0 0.0
    %189 = vmatpush.msra.mxu0 0.0
    %190 = vmatpush.msra.mxu0 0.0
    %191 = vmatpush.msra.mxu0 0.0
    %192 = vmatpush.msra.mxu0 0.0
    %193 = vmatpush.msra.mxu0 0.0
    %194 = vmatpush.msra.mxu0 0.0
    %195 = vmatpush.msra.mxu0 %v175
    %196 = vmatpush.msra.mxu0 %v174
    %197 = vmatpush.msra.mxu0 %v173
    %198 = vmatpush.msra.mxu0 %v172
    %199 = vmatmul.f32.gmra.mxu0 %v178
    %v200 = vpop.f32.mrf.mxu0
    %v201 = vadd.f32 0.0, %v200
    %202 = vmatmul.f32.gmra.mxu0 %v181
    %v203 = vpop.f32.mrf.mxu0
    %v204 = vadd.f32 0.0, %v203
    %205 = vdwg.mxu0
    %v206 = vmax.f32 %v201, 0.0
    %v207 = vmax.f32 %v204, 0.0
    %v208 = vld [vmem:[%s14] sm:$0xff]
    %v209 = vld [vmem:[%s14 + $0x8] sm:$0xff]
    %v210 = vld [vmem:[%s14 + $0x10] sm:$0xff]
    %v211 = vld [vmem:[%s14 + $0x18] sm:$0xff]
    %v213 = vsel %vm176, %v206, 0
    %v216 = vsel %vm176, %v207, 0
    %218 = vmatpush.msra.mxu0 0.0
    %219 = vmatpush.msra.mxu0 0.0
    %220 = vmatpush.msra.mxu0 0.0
    %221 = vmatpush.msra.mxu0 0.0
    %222 = vmatpush.msra.mxu0 0.0
    %223 = vmatpush.msra.mxu0 0.0
    %224 = vmatpush.msra.mxu0 0.0
    %225 = vmatpush.msra.mxu0 0.0
    %226 = vmatpush.msra.mxu0 0.0
    %227 = vmatpush.msra.mxu0 0.0
    %228 = vmatpush.msra.mxu0 0.0
    %229 = vmatpush.msra.mxu0 0.0
    %230 = vmatpush.msra.mxu0 %v211
    %231 = vmatpush.msra.mxu0 %v210
    %232 = vmatpush.msra.mxu0 %v209
    %233 = vmatpush.msra.mxu0 %v208
    %234 = vmatmul.f32.gmra.mxu0 %v213
    %v235 = vpop.f32.mrf.mxu0
    %v236 = vadd.f32 0.0, %v235
    %237 = vmatmul.f32.gmra.mxu0 %v216
    %v238 = vpop.f32.mrf.mxu0
    %v239 = vadd.f32 0.0, %v238
    %240 = vdwg.mxu0
    %v241 = vld [vmem:[%s2] sm:$0x3]
    %v242 = vld [vmem:[%s5] sm:$0xff]
    %v243 = vld [vmem:[%s5 + $0x8] sm:$0xff]
    %v244 = vld [vmem:[%s5 + $0x10] sm:$0xff]
    %v245 = vld [vmem:[%s5 + $0x18] sm:$0xff]
    %v246 = vld [vmem:[%s5 + $0x20] sm:$0xff]
    %v247 = vld [vmem:[%s5 + $0x28] sm:$0xff]
    %v248 = vld [vmem:[%s5 + $0x30] sm:$0xff]
    %v249 = vld [vmem:[%s5 + $0x38] sm:$0xff]
    %v250 = vld [vmem:[%s6] sm:$0x1]
    %v252 = vperm.slane %v250, 0
    %vm254 = vcmask 523264
    %v256 = vsel %vm254, %v241, 0
    %258 = vmatpush.msra.mxu0 0.0
    %259 = vmatpush.msra.mxu0 0.0
    %260 = vmatpush.msra.mxu0 0.0
    %261 = vmatpush.msra.mxu0 0.0
    %262 = vmatpush.msra.mxu0 0.0
    %263 = vmatpush.msra.mxu0 0.0
    %264 = vmatpush.msra.mxu0 0.0
    %265 = vmatpush.msra.mxu0 0.0
    %266 = vmatpush.msra.mxu0 %v249
    %267 = vmatpush.msra.mxu0 %v248
    %268 = vmatpush.msra.mxu0 %v247
    %269 = vmatpush.msra.mxu0 %v246
    %270 = vmatpush.msra.mxu0 %v245
    %271 = vmatpush.msra.mxu0 %v244
    %272 = vmatpush.msra.mxu0 %v243
    %273 = vmatpush.msra.mxu0 %v242
    %274 = vmatmul.f32.gmra.mxu0 %v256
    %v275 = vpop.f32.mrf.mxu0
    %v276 = vadd.f32 %v252, %v275
    %277 = vdwg.mxu0
    %v278 = vmax.f32 %v276, 0.0
    %v279 = vld [vmem:[%s15] sm:$0xff]
    %v280 = vld [vmem:[%s15 + $0x8] sm:$0xff]
    %v281 = vld [vmem:[%s15 + $0x10] sm:$0xff]
    %v282 = vld [vmem:[%s15 + $0x18] sm:$0xff]
    %v283 = vld [vmem:[#allocation9] sm:$0x1]
    %v285 = vperm.slane %v283, 0
    %v288 = vsel %vm176, %v278, 0
    %290 = vmatpush.msra.mxu0 0.0
    %291 = vmatpush.msra.mxu0 0.0
    %292 = vmatpush.msra.mxu0 0.0
    %293 = vmatpush.msra.mxu0 0.0
    %294 = vmatpush.msra.mxu0 0.0
    %295 = vmatpush.msra.mxu0 0.0
    %296 = vmatpush.msra.mxu0 0.0
    %297 = vmatpush.msra.mxu0 0.0
    %298 = vmatpush.msra.mxu0 0.0
    %299 = vmatpush.msra.mxu0 0.0
    %300 = vmatpush.msra.mxu0 0.0
    %301 = vmatpush.msra.mxu0 0.0
    %302 = vmatpush.msra.mxu0 %v282
    %303 = vmatpush.msra.mxu0 %v281
    %304 = vmatpush.msra.mxu0 %v280
    %305 = vmatpush.msra.mxu0 %v279
    %306 = vmatmul.f32.gmra.mxu0 %v288
    %v307 = vpop.f32.mrf.mxu0
    %v308 = vadd.f32 %v285, %v307
    %309 = vdwg.mxu0
    %v310 = vld [vmem:[%s3] sm:$0xff]
    %v311 = vld [vmem:[%s3 + $0x8] sm:$0xff]
    %v312 = vld [vmem:[%s7] sm:$0xff]
    %v313 = vld [vmem:[%s7 + $0x8] sm:$0xff]
    %v314 = vld [vmem:[%s7 + $0x10] sm:$0xff]
    %v315 = vld [vmem:[%s7 + $0x18] sm:$0xff]
    %v316 = vld [vmem:[%s7 + $0x20] sm:$0xff]
    %v317 = vld [vmem:[%s7 + $0x28] sm:$0xff]
    %v318 = vld [vmem:[%s7 + $0x30] sm:$0xff]
    %v319 = vld [vmem:[%s7 + $0x38] sm:$0xff]
    %v320 = vld [vmem:[%s8] sm:$0x1]
    %v322 = vperm.slane %v320, 0
    %v325 = vsel %vm254, %v310, 0
    %v328 = vsel %vm254, %v311, 0
    %330 = vmatpush.msra.mxu0 0.0
    %331 = vmatpush.msra.mxu0 0.0
    %332 = vmatpush.msra.mxu0 0.0
    %333 = vmatpush.msra.mxu0 0.0
    %334 = vmatpush.msra.mxu0 0.0
    %335 = vmatpush.msra.mxu0 0.0
    %336 = vmatpush.msra.mxu0 0.0
    %337 = vmatpush.msra.mxu0 0.0
    %338 = vmatpush.msra.mxu0 %v319
    %339 = vmatpush.msra.mxu0 %v318
    %340 = vmatpush.msra.mxu0 %v317
    %341 = vmatpush.msra.mxu0 %v316
    %342 = vmatpush.msra.mxu0 %v315
    %343 = vmatpush.msra.mxu0 %v314
    %344 = vmatpush.msra.mxu0 %v313
    %345 = vmatpush.msra.mxu0 %v312
    %346 = vmatmul.f32.gmra.mxu0 %v325
    %v347 = vpop.f32.mrf.mxu0
    %v348 = vadd.f32 %v322, %v347
    %349 = vmatmul.f32.gmra.mxu0 %v328
    %v350 = vpop.f32.mrf.mxu0
    %v351 = vadd.f32 %v322, %v350
    %352 = vdwg.mxu0
    %v353 = vmax.f32 %v348, 0.0
    %v354 = vmax.f32 %v351, 0.0
    %v355 = vld [vmem:[%s9] sm:$0xff]
    %v356 = vld [vmem:[%s9 + $0x8] sm:$0xff]
    %v357 = vld [vmem:[%s9 + $0x10] sm:$0xff]
    %v358 = vld [vmem:[%s9 + $0x18] sm:$0xff]
    %v359 = vld [vmem:[%s10] sm:$0x1]
    %v361 = vperm.slane %v359, 0
    %v364 = vsel %vm176, %v353, 0
    %v367 = vsel %vm176, %v354, 0
    %369 = vmatpush.msra.mxu0 0.0
    %370 = vmatpush.msra.mxu0 0.0
    %371 = vmatpush.msra.mxu0 0.0
    %372 = vmatpush.msra.mxu0 0.0
    %373 = vmatpush.msra.mxu0 0.0
    %374 = vmatpush.msra.mxu0 0.0
    %375 = vmatpush.msra.mxu0 0.0
    %376 = vmatpush.msra.mxu0 0.0
    %377 = vmatpush.msra.mxu0 0.0
    %378 = vmatpush.msra.mxu0 0.0
    %379 = vmatpush.msra.mxu0 0.0
    %380 = vmatpush.msra.mxu0 0.0
    %381 = vmatpush.msra.mxu0 %v358
    %382 = vmatpush.msra.mxu0 %v357
    %383 = vmatpush.msra.mxu0 %v356
    %384 = vmatpush.msra.mxu0 %v355
    %385 = vmatmul.f32.gmra.mxu0 %v364
    %v386 = vpop.f32.mrf.mxu0
    %v387 = vadd.f32 %v361, %v386
    %388 = vmatmul.f32.gmra.mxu0 %v367
    %v389 = vpop.f32.mrf.mxu0
    %v390 = vadd.f32 %v361, %v389
    %391 = vdwg.mxu0
    %v392 = vld [vmem:[%s13] sm:$0x1]
    %v393 = vld [vmem:[%s11] sm:$0xff]
    %v394 = vld [vmem:[%s11 + $0x8] sm:$0xff]
    %v395 = vld [vmem:[%s11 + $0x10] sm:$0xff]
    %v396 = vld [vmem:[%s11 + $0x18] sm:$0xff]
    %v397 = vld [vmem:[%s12] sm:$0x1]
    %v399 = vperm.slane %v397, 0
    %v402 = vsel %vm176, 0.0, 0
    %404 = vmatpush.msra.mxu0 0.0
    %405 = vmatpush.msra.mxu0 0.0
    %406 = vmatpush.msra.mxu0 0.0
    %407 = vmatpush.msra.mxu0 0.0
    %408 = vmatpush.msra.mxu0 0.0
    %409 = vmatpush.msra.mxu0 0.0
    %410 = vmatpush.msra.mxu0 0.0
    %411 = vmatpush.msra.mxu0 0.0
    %412 = vmatpush.msra.mxu0 0.0
    %413 = vmatpush.msra.mxu0 0.0
    %414 = vmatpush.msra.mxu0 0.0
    %415 = vmatpush.msra.mxu0 0.0
    %416 = vmatpush.msra.mxu0 %v396
    %417 = vmatpush.msra.mxu0 %v395
    %418 = vmatpush.msra.mxu0 %v394
    %419 = vmatpush.msra.mxu0 %v393
    %420 = vmatmul.f32.gmra.mxu0 %v402
    %v421 = vpop.f32.mrf.mxu0
    %v422 = vadd.f32 %v399, %v421
    %423 = vdwg.mxu0
    %v425 = vrot.slane %v422, 1
    %v426 = vperm.slane %v422, 0
    %v427 = vperm.slane %v425, 0
    %v430 = vadd.f32 %v387, %v426
    %v431 = vadd.f32 %v390, %v427
    %v432 = vtanh.pop %v430
    %v433 = vtanh.pop %v431
    %v435 = vperm.slane %v392, 0
    %v437 = vmul.f32 %v432, %v435
    %v438 = vmul.f32 %v433, %v435
    %v439 = vsel %vm176, %v437, 0.0
    %440 = vadd.xlane.f32.xlu0 %v439
    %v441 = vpop.xlane.xlu0 %440
    %v442 = vsel %vm176, %v438, 0.0
    %443 = vadd.xlane.f32.xlu0 %v442
    %v444 = vpop.xlane.xlu0 %443
    %v447 = vperm.slane %v441, %v157
    %v448 = vperm.slane %v444, %v157
    %vm449 = vcmask 1041409
    %v450 = vsel %vm449, %v448, %v447
    %vm452 = vcmask 58368
    %v453 = vsel %vm452, %v450, -inf
    %454 = vmax.xlane.f32.xlu0 %v453
    %v455 = vpop.xlane.xlu0 %454
    %v457 = vperm.slane %v455, 0
    %v458 = vperm.slane %v455, 1
    %v461 = vsub.f32 %v441, %v457
    %v462 = vsub.f32 %v444, %v458
    %v463 = vmul.f32 %v461, 1.442695
    %v464 = vpow.pop %v463
    %v465 = vmul.f32 %v462, 1.442695
    %v466 = vpow.pop %v465
    %469 = vset.pattern.permute.xlu0 0
    %470 = vperm.xlu0 %469, %v464
    %v471 = vpop.permute.xlu0 %470
    %472 = vset.pattern.permute.xlu0 0
    %473 = vperm.xlu0 %472, %v466
    %v474 = vpop.permute.xlu0 %473
    %v475 = vperm.slane %v471, %v157
    %v476 = vperm.slane %v474, %v157
    %v477 = vsel %vm449, %v476, %v475
    %v479 = vsel %vm452, %v477, 0.0
    %480 = vadd.xlane.f32.xlu0 %v479
    %v481 = vpop.xlane.xlu0 %480
    %v482 = vrcp.pop %v481
    %v484 = vperm.slane %v482, 0
    %v485 = vperm.slane %v482, 1
    %v488 = vmul.f32 %v464, %v484
    %v489 = vmul.f32 %v466, %v485
    %491 = vset.pattern.permute.xlu0 0
    %492 = vperm.xlu0 %491, %v488
    %v493 = vpop.permute.xlu0 %492
    %496 = vset.pattern.permute.xlu0 0
    %497 = vperm.xlu0 %496, %v489
    %v498 = vpop.permute.xlu0 %497
    %v500 = vmul.f32 %v493, %v353
    %v501 = vmul.f32 %v498, %v354
    %v502 = vsel %vm176, %v500, 0.0
    %v503 = vrot.slane %v502, 4
    %v504 = vadd.f32 %v502, %v503
    %v505 = vrot.slane %v504, 2
    %v506 = vadd.f32 %v504, %v505
    %v507 = vrot.slane %v506, 1
    %v508 = vadd.f32 %v506, %v507
    %v509 = vsel %vm176, %v501, 0.0
    %v510 = vrot.slane %v509, 4
    %v511 = vadd.f32 %v509, %v510
    %v512 = vrot.slane %v511, 2
    %v513 = vadd.f32 %v511, %v512
    %v514 = vrot.slane %v513, 1
    %v515 = vadd.f32 %v513, %v514
    %v516 = vadd.f32 %v236, %v308
    %v517 = vld [vmem:[#allocation6] sm:$0xff]
    %v518 = vld [vmem:[#allocation6 + $0x8] sm:$0xff]
    %v519 = vld [vmem:[#allocation6 + $0x10] sm:$0xff]
    %v520 = vld [vmem:[#allocation6 + $0x18] sm:$0xff]
    %v523 = vsel %vm449, %v515, %v508
    %v524 = vsel %vm176, %v523, 0
    %526 = vmatpush.msra.mxu0 0.0
    %527 = vmatpush.msra.mxu0 0.0
    %528 = vmatpush.msra.mxu0 0.0
    %529 = vmatpush.msra.mxu0 0.0
    %530 = vmatpush.msra.mxu0 0.0
    %531 = vmatpush.msra.mxu0 0.0
    %532 = vmatpush.msra.mxu0 0.0
    %533 = vmatpush.msra.mxu0 0.0
    %534 = vmatpush.msra.mxu0 0.0
    %535 = vmatpush.msra.mxu0 0.0
    %536 = vmatpush.msra.mxu0 0.0
    %537 = vmatpush.msra.mxu0 0.0
    %538 = vmatpush.msra.mxu0 %v520
    %539 = vmatpush.msra.mxu0 %v519
    %540 = vmatpush.msra.mxu0 %v518
    %541 = vmatpush.msra.mxu0 %v517
    %542 = vmatmul.f32.gmra.mxu0 %v524
    %v543 = vpop.f32.mrf.mxu0
    %v544 = vadd.f32 0.0, %v543
    %545 = vdwg.mxu0
    %v546 = vadd.f32 %v516, %v544
    %v547 = vld [vmem:[#allocation7] sm:$0xff]
    %v548 = vld [vmem:[#allocation7 + $0x8] sm:$0xff]
    %v549 = vld [vmem:[#allocation7 + $0x10] sm:$0xff]
    %v550 = vld [vmem:[#allocation7 + $0x18] sm:$0xff]
    %551 = vmatpush.msra.mxu0 0.0
    %552 = vmatpush.msra.mxu0 0.0
    %553 = vmatpush.msra.mxu0 0.0
    %554 = vmatpush.msra.mxu0 0.0
    %555 = vmatpush.msra.mxu0 0.0
    %556 = vmatpush.msra.mxu0 0.0
    %557 = vmatpush.msra.mxu0 0.0
    %558 = vmatpush.msra.mxu0 0.0
    %559 = vmatpush.msra.mxu0 0.0
    %560 = vmatpush.msra.mxu0 0.0
    %561 = vmatpush.msra.mxu0 0.0
    %562 = vmatpush.msra.mxu0 0.0
    %563 = vmatpush.msra.mxu0 %v550
    %564 = vmatpush.msra.mxu0 %v549
    %565 = vmatpush.msra.mxu0 %v548
    %566 = vmatpush.msra.mxu0 %v547
    %567 = vmatmul.f32.gmra.mxu0 %v402
    %v568 = vpop.f32.mrf.mxu0
    %v569 = vadd.f32 0.0, %v568
    %570 = vdwg.mxu0
    %v571 = vadd.f32 %v546, %v569
    %v572 = vmul.f32 %v571, 0.5
    %v573 = vtanh.pop %v572
    %v574 = vadd.f32 %v573, 1.0
    %v575 = vmul.f32 %v574, 0.5
    %v576 = vtanh.pop %v571
    %v577 = vmul.f32 %v575, 0.0
    %579 = vrot.lane.b32.xlu0 %v576, 64
    %v580 = vpop.permute.xlu0 %579
    %v582 = vmul.f32 %v575, %v580
    %584 = vrot.lane.b32.xlu0 %v582, 32
    %v585 = vpop.permute.xlu0 %584
    %v587 = vadd.f32 %v577, %v585
    %v588 = vtanh.pop %v587
    %590 = vrot.lane.b32.xlu0 %v588, 64
    %v591 = vpop.permute.xlu0 %590
    %v593 = vmul.f32 %v575, %v591
    %v594 = vld [vmem:[#allocation10] sm:$0xff]
    %v595 = vld [vmem:[#allocation10 + $0x8] sm:$0xff]
    %v596 = vld [vmem:[#allocation10 + $0x10] sm:$0xff]
    %v597 = vld [vmem:[#allocation10 + $0x18] sm:$0xff]
    %v598 = vld [vmem:[#allocation12] sm:$0x1]
    %v600 = vperm.slane %v598, 0
    %603 = vrot.lane.b32.xlu0 %v593, 32
    %v604 = vpop.permute.xlu0 %603
    %v605 = vsel %vm176, %v604, 0
    %607 = vmatpush.msra.mxu0 0.0
    %608 = vmatpush.msra.mxu0 0.0
    %609 = vmatpush.msra.mxu0 0.0
    %610 = vmatpush.msra.mxu0 0.0
    %611 = vmatpush.msra.mxu0 0.0
    %612 = vmatpush.msra.mxu0 0.0
    %613 = vmatpush.msra.mxu0 0.0
    %614 = vmatpush.msra.mxu0 0.0
    %615 = vmatpush.msra.mxu0 0.0
    %616 = vmatpush.msra.mxu0 0.0
    %617 = vmatpush.msra.mxu0 0.0
    %618 = vmatpush.msra.mxu0 0.0
    %619 = vmatpush.msra.mxu0 %v597
    %620 = vmatpush.msra.mxu0 %v596
    %621 = vmatpush.msra.mxu0 %v595
    %622 = vmatpush.msra.mxu0 %v594
    %623 = vmatmul.f32.gmra.mxu0 %v605
    %v624 = vpop.f32.mrf.mxu0
    %v625 = vadd.f32 %v600, %v624
    %626 = vdwg.mxu0
    %vm627 = vcmask 254976
    %v628 = vsel %vm627, %v625, -inf
    %629 = vmax.xlane.f32.xlu0 %v628
    %v630 = vpop.xlane.xlu0 %629
    %v631 = vsub.f32 %v625, %v630
    %v632 = vmul.f32 %v631, 1.442695
    %v633 = vpow.pop %v632
    %v634 = vsel %vm627, %v633, 0.0
    %635 = vadd.xlane.f32.xlu0 %v634
    %v636 = vpop.xlane.xlu0 %635
    %v637 = vlog2.pop %v636
    %v638 = vmul.f32 %v637, 0.6931472
    %v639 = vsub.f32 %v631, %v638
    %s640 = sld [smem:[#allocation2]]
    %p641 = scmp.ne.s32.totalorder %s640, 0
    %s642 = scalar_select %p641, 1, 0
    %v643 = vstv %s642
    %vm644 = vcmp.eq.s32.totalorder %v643, 1
    %v645 = vsel %vm644, %v639, 0.0
    %646 = vst.msk [vmem:[#allocation13] sm:$0x3] %vm627, %v645
    %v647 = vld [vmem:[%s11] sm:$0xff]
    %v648 = vld [vmem:[%s11 + $0x8] sm:$0xff]
    %v649 = vld [vmem:[%s11 + $0x10] sm:$0xff]
    %v650 = vld [vmem:[%s11 + $0x18] sm:$0xff]
    %v651 = vld [vmem:[%s12] sm:$0x1]
    %v653 = vperm.slane %v651, 0
    %655 = vmatpush.msra.mxu0 0.0
    %656 = vmatpush.msra.mxu0 0.0
    %657 = vmatpush.msra.mxu0 0.0
    %658 = vmatpush.msra.mxu0 0.0
    %659 = vmatpush.msra.mxu0 0.0
    %660 = vmatpush.msra.mxu0 0.0
    %661 = vmatpush.msra.mxu0 0.0
    %662 = vmatpush.msra.mxu0 0.0
    %663 = vmatpush.msra.mxu0 0.0
    %664 = vmatpush.msra.mxu0 0.0
    %665 = vmatpush.msra.mxu0 0.0
    %666 = vmatpush.msra.mxu0 0.0
    %667 = vmatpush.msra.mxu0 %v650
    %668 = vmatpush.msra.mxu0 %v649
    %669 = vmatpush.msra.mxu0 %v648
    %670 = vmatpush.msra.mxu0 %v647
    %671 = vmatmul.f32.gmra.mxu0 %v605
    %v672 = vpop.f32.mrf.mxu0
    %v673 = vadd.f32 %v653, %v672
    %674 = vdwg.mxu0
    %v676 = vrot.slane %v673, 1
    %v677 = vperm.slane %v673, 0
    %v678 = vperm.slane %v676, 0
    %v681 = vadd.f32 %v387, %v677
    %v682 = vadd.f32 %v390, %v678
    %v683 = vtanh.pop %v681
    %v684 = vtanh.pop %v682
    %v685 = vmul.f32 %v683, %v435
    %v686 = vmul.f32 %v684, %v435
    %v687 = vsel %vm176, %v685, 0.0
    %688 = vadd.xlane.f32.xlu0 %v687
    %v689 = vpop.xlane.xlu0 %688
    %v690 = vsel %vm176, %v686, 0.0
    %691 = vadd.xlane.f32.xlu0 %v690
    %v692 = vpop.xlane.xlu0 %691
    %v695 = vperm.slane %v689, %v157
    %v696 = vperm.slane %v692, %v157
    %v697 = vsel %vm449, %v696, %v695
    %v699 = vsel %vm452, %v697, -inf
    %700 = vmax.xlane.f32.xlu0 %v699
    %v701 = vpop.xlane.xlu0 %700
    %v703 = vperm.slane %v701, 0
    %v704 = vperm.slane %v701, 1
    %v707 = vsub.f32 %v689, %v703
    %v708 = vsub.f32 %v692, %v704
    %v709 = vmul.f32 %v707, 1.442695
    %v710 = vpow.pop %v709
    %v711 = vmul.f32 %v708, 1.442695
    %v712 = vpow.pop %v711
    %715 = vset.pattern.permute.xlu0 0
    %716 = vperm.xlu0 %715, %v710
    %v717 = vpop.permute.xlu0 %716
    %718 = vset.pattern.permute.xlu0 0
    %719 = vperm.xlu0 %718, %v712
    %v720 = vpop.permute.xlu0 %719
    %v721 = vperm.slane %v717, %v157
    %v722 = vperm.slane %v720, %v157
    %v723 = vsel %vm449, %v722, %v721
    %v725 = vsel %vm452, %v723, 0.0
    %726 = vadd.xlane.f32.xlu0 %v725
    %v727 = vpop.xlane.xlu0 %726
    %v728 = vrcp.pop %v727
    %v730 = vperm.slane %v728, 0
    %v731 = vperm.slane %v728, 1
    %v734 = vmul.f32 %v710, %v730
    %v735 = vmul.f32 %v712, %v731
    %737 = vset.pattern.permute.xlu0 0
    %738 = vperm.xlu0 %737, %v734
    %v739 = vpop.permute.xlu0 %738
    %742 = vset.pattern.permute.xlu0 0
    %743 = vperm.xlu0 %742, %v735
    %v744 = vpop.permute.xlu0 %743
    %v746 = vmul.f32 %v739, %v353
    %v747 = vmul.f32 %v744, %v354
    %v748 = vsel %vm176, %v746, 0.0
    %v749 = vrot.slane %v748, 4
    %v750 = vadd.f32 %v748, %v749
    %v751 = vrot.slane %v750, 2
    %v752 = vadd.f32 %v750, %v751
    %v753 = vrot.slane %v752, 1
    %v754 = vadd.f32 %v752, %v753
    %v755 = vsel %vm176, %v747, 0.0
    %v756 = vrot.slane %v755, 4
    %v757 = vadd.f32 %v755, %v756
    %v758 = vrot.slane %v757, 2
    %v759 = vadd.f32 %v757, %v758
    %v760 = vrot.slane %v759, 1
    %v761 = vadd.f32 %v759, %v760
    %v763 = vrot.slane %v308, 6
    %v765 = vadd.f32 %v236, %v763
    %v766 = vld [vmem:[#allocation6] sm:$0xff]
    %v767 = vld [vmem:[#allocation6 + $0x8] sm:$0xff]
    %v768 = vld [vmem:[#allocation6 + $0x10] sm:$0xff]
    %v769 = vld [vmem:[#allocation6 + $0x18] sm:$0xff]
    %v772 = vsel %vm449, %v761, %v754
    %v773 = vsel %vm176, %v772, 0
    %775 = vmatpush.msra.mxu0 0.0
    %776 = vmatpush.msra.mxu0 0.0
    %777 = vmatpush.msra.mxu0 0.0
    %778 = vmatpush.msra.mxu0 0.0
    %779 = vmatpush.msra.mxu0 0.0
    %780 = vmatpush.msra.mxu0 0.0
    %781 = vmatpush.msra.mxu0 0.0
    %782 = vmatpush.msra.mxu0 0.0
    %783 = vmatpush.msra.mxu0 0.0
    %784 = vmatpush.msra.mxu0 0.0
    %785 = vmatpush.msra.mxu0 0.0
    %786 = vmatpush.msra.mxu0 0.0
    %787 = vmatpush.msra.mxu0 %v769
    %788 = vmatpush.msra.mxu0 %v768
    %789 = vmatpush.msra.mxu0 %v767
    %790 = vmatpush.msra.mxu0 %v766
    %791 = vmatmul.f32.gmra.mxu0 %v773
    %v792 = vpop.f32.mrf.mxu0
    %v793 = vadd.f32 0.0, %v792
    %794 = vdwg.mxu0
    %v796 = vrot.slane %v793, 6
    %v798 = vadd.f32 %v765, %v796
    %v799 = vld [vmem:[#allocation7] sm:$0xff]
    %v800 = vld [vmem:[#allocation7 + $0x8] sm:$0xff]
    %v801 = vld [vmem:[#allocation7 + $0x10] sm:$0xff]
    %v802 = vld [vmem:[#allocation7 + $0x18] sm:$0xff]
    %803 = vmatpush.msra.mxu0 0.0
    %804 = vmatpush.msra.mxu0 0.0
    %805 = vmatpush.msra.mxu0 0.0
    %806 = vmatpush.msra.mxu0 0.0
    %807 = vmatpush.msra.mxu0 0.0
    %808 = vmatpush.msra.mxu0 0.0
    %809 = vmatpush.msra.mxu0 0.0
    %810 = vmatpush.msra.mxu0 0.0
    %811 = vmatpush.msra.mxu0 0.0
    %812 = vmatpush.msra.mxu0 0.0
    %813 = vmatpush.msra.mxu0 0.0
    %814 = vmatpush.msra.mxu0 0.0
    %815 = vmatpush.msra.mxu0 %v802
    %816 = vmatpush.msra.mxu0 %v801
    %817 = vmatpush.msra.mxu0 %v800
    %818 = vmatpush.msra.mxu0 %v799
    %819 = vmatmul.f32.gmra.mxu0 %v605
    %v820 = vpop.f32.mrf.mxu0
    %v821 = vadd.f32 0.0, %v820
    %822 = vdwg.mxu0
    %v824 = vrot.slane %v821, 6
    %v826 = vadd.f32 %v798, %v824
    %v827 = vmul.f32 %v826, 0.5
    %v828 = vtanh.pop %v827
    %v829 = vadd.f32 %v828, 1.0
    %v830 = vmul.f32 %v829, 0.5
    %v831 = vtanh.pop %v826
    %v833 = vrot.slane %v587, 6
    %v835 = vmul.f32 %v830, %v833
    %837 = vrot.lane.b32.xlu0 %v831, 64
    %v838 = vpop.permute.xlu0 %837
    %v840 = vmul.f32 %v830, %v838
    %842 = vrot.lane.b32.xlu0 %v840, 32
    %v843 = vpop.permute.xlu0 %842
    %v845 = vadd.f32 %v835, %v843
    %v846 = vtanh.pop %v845
    %848 = vrot.lane.b32.xlu0 %v846, 64
    %v849 = vpop.permute.xlu0 %848
    %v851 = vmul.f32 %v830, %v849
    %v852 = vld [vmem:[#allocation10] sm:$0xff]
    %v853 = vld [vmem:[#allocation10 + $0x8] sm:$0xff]
    %v854 = vld [vmem:[#allocation10 + $0x10] sm:$0xff]
    %v855 = vld [vmem:[#allocation10 + $0x18] sm:$0xff]
    %v856 = vld [vmem:[#allocation12] sm:$0x1]
    %v858 = vperm.slane %v856, 0
    %v861 = vrot.slane %v851, 2
    %862 = vrot.lane.b32.xlu0 %v861, 32
    %v863 = vpop.permute.xlu0 %862
    %v864 = vsel %vm176, %v863, 0
    %866 = vmatpush.msra.mxu0 0.0
    %867 = vmatpush.msra.mxu0 0.0
    %868 = vmatpush.msra.mxu0 0.0
    %869 = vmatpush.msra.mxu0 0.0
    %870 = vmatpush.msra.mxu0 0.0
    %871 = vmatpush.msra.mxu0 0.0
    %872 = vmatpush.msra.mxu0 0.0
    %873 = vmatpush.msra.mxu0 0.0
    %874 = vmatpush.msra.mxu0 0.0
    %875 = vmatpush.msra.mxu0 0.0
    %876 = vmatpush.msra.mxu0 0.0
    %877 = vmatpush.msra.mxu0 0.0
    %878 = vmatpush.msra.mxu0 %v855
    %879 = vmatpush.msra.mxu0 %v854
    %880 = vmatpush.msra.mxu0 %v853
    %881 = vmatpush.msra.mxu0 %v852
    %882 = vmatmul.f32.gmra.mxu0 %v864
    %v883 = vpop.f32.mrf.mxu0
    %v884 = vadd.f32 %v858, %v883
    %885 = vdwg.mxu0
    %v886 = vsel %vm627, %v884, -inf
    %887 = vmax.xlane.f32.xlu0 %v886
    %v888 = vpop.xlane.xlu0 %887
    %v889 = vsub.f32 %v884, %v888
    %v890 = vmul.f32 %v889, 1.442695
    %v891 = vpow.pop %v890
    %v892 = vsel %vm627, %v891, 0.0
    %893 = vadd.xlane.f32.xlu0 %v892
    %v894 = vpop.xlane.xlu0 %893
    %v895 = vlog2.pop %v894
    %v896 = vmul.f32 %v895, 0.6931472
    %v897 = vsub.f32 %v889, %v896
    %s898 = sld [smem:[#allocation2 + $0x1]]
    %p899 = scmp.ne.s32.totalorder %s898, 0
    %s900 = scalar_select %p899, 1, 0
    %v901 = vstv %s900
    %vm902 = vcmp.eq.s32.totalorder %v901, 1
    %v903 = vsel %vm902, %v897, 0.0
    %s904 = scalar_lea.vmem [#allocation13], 2
    %905 = vst.msk [vmem:[%s904] sm:$0x3] %vm627, %v903
    %v906 = vld [vmem:[%s11] sm:$0xff]
    %v907 = vld [vmem:[%s11 + $0x8] sm:$0xff]
    %v908 = vld [vmem:[%s11 + $0x10] sm:$0xff]
    %v909 = vld [vmem:[%s11 + $0x18] sm:$0xff]
    %v910 = vld [vmem:[%s12] sm:$0x1]
    %v912 = vperm.slane %v910, 0
    %914 = vmatpush.msra.mxu0 0.0
    %915 = vmatpush.msra.mxu0 0.0
    %916 = vmatpush.msra.mxu0 0.0
    %917 = vmatpush.msra.mxu0 0.0
    %918 = vmatpush.msra.mxu0 0.0
    %919 = vmatpush.msra.mxu0 0.0
    %920 = vmatpush.msra.mxu0 0.0
    %921 = vmatpush.msra.mxu0 0.0
    %922 = vmatpush.msra.mxu0 0.0
    %923 = vmatpush.msra.mxu0 0.0
    %924 = vmatpush.msra.mxu0 0.0
    %925 = vmatpush.msra.mxu0 0.0
    %926 = vmatpush.msra.mxu0 %v909
    %927 = vmatpush.msra.mxu0 %v908
    %928 = vmatpush.msra.mxu0 %v907
    %929 = vmatpush.msra.mxu0 %v906
    %930 = vmatmul.f32.gmra.mxu0 %v864
    %v931 = vpop.f32.mrf.mxu0
    %v932 = vadd.f32 %v912, %v931
    %933 = vdwg.mxu0
    %v935 = vrot.slane %v932, 1
    %v936 = vperm.slane %v932, 0
    %v937 = vperm.slane %v935, 0
    %v940 = vadd.f32 %v387, %v936
    %v941 = vadd.f32 %v390, %v937
    %v942 = vtanh.pop %v940
    %v943 = vtanh.pop %v941
    %v944 = vmul.f32 %v942, %v435
    %v945 = vmul.f32 %v943, %v435
    %v946 = vsel %vm176, %v944, 0.0
    %947 = vadd.xlane.f32.xlu0 %v946
    %v948 = vpop.xlane.xlu0 %947
    %v949 = vsel %vm176, %v945, 0.0
    %950 = vadd.xlane.f32.xlu0 %v949
    %v951 = vpop.xlane.xlu0 %950
    %v954 = vperm.slane %v948, %v157
    %v955 = vperm.slane %v951, %v157
    %v956 = vsel %vm449, %v955, %v954
    %v958 = vsel %vm452, %v956, -inf
    %959 = vmax.xlane.f32.xlu0 %v958
    %v960 = vpop.xlane.xlu0 %959
    %v962 = vperm.slane %v960, 0
    %v963 = vperm.slane %v960, 1
    %v966 = vsub.f32 %v948, %v962
    %v967 = vsub.f32 %v951, %v963
    %v968 = vmul.f32 %v966, 1.442695
    %v969 = vpow.pop %v968
    %v970 = vmul.f32 %v967, 1.442695
    %v971 = vpow.pop %v970
    %974 = vset.pattern.permute.xlu0 0
    %975 = vperm.xlu0 %974, %v969
    %v976 = vpop.permute.xlu0 %975
    %977 = vset.pattern.permute.xlu0 0
    %978 = vperm.xlu0 %977, %v971
    %v979 = vpop.permute.xlu0 %978
    %v980 = vperm.slane %v976, %v157
    %v981 = vperm.slane %v979, %v157
    %v982 = vsel %vm449, %v981, %v980
    %v984 = vsel %vm452, %v982, 0.0
    %985 = vadd.xlane.f32.xlu0 %v984
    %v986 = vpop.xlane.xlu0 %985
    %v987 = vrcp.pop %v986
    %v989 = vperm.slane %v987, 0
    %v990 = vperm.slane %v987, 1
    %v993 = vmul.f32 %v969, %v989
    %v994 = vmul.f32 %v971, %v990
    %996 = vset.pattern.permute.xlu0 0
    %997 = vperm.xlu0 %996, %v993
    %v998 = vpop.permute.xlu0 %997
    %1001 = vset.pattern.permute.xlu0 0
    %1002 = vperm.xlu0 %1001, %v994
    %v1003 = vpop.permute.xlu0 %1002
    %v1005 = vmul.f32 %v998, %v353
    %v1006 = vmul.f32 %v1003, %v354
    %v1007 = vsel %vm176, %v1005, 0.0
    %v1008 = vrot.slane %v1007, 4
    %v1009 = vadd.f32 %v1007, %v1008
    %v1010 = vrot.slane %v1009, 2
    %v1011 = vadd.f32 %v1009, %v1010
    %v1012 = vrot.slane %v1011, 1
    %v1013 = vadd.f32 %v1011, %v1012
    %v1014 = vsel %vm176, %v1006, 0.0
    %v1015 = vrot.slane %v1014, 4
    %v1016 = vadd.f32 %v1014, %v1015
    %v1017 = vrot.slane %v1016, 2
    %v1018 = vadd.f32 %v1016, %v1017
    %v1019 = vrot.slane %v1018, 1
    %v1020 = vadd.f32 %v1018, %v1019
    %v1021 = vrot.slane %v308, 4
    %v1023 = vadd.f32 %v236, %v1021
    %v1024 = vld [vmem:[#allocation6] sm:$0xff]
    %v1025 = vld [vmem:[#allocation6 + $0x8] sm:$0xff]
    %v1026 = vld [vmem:[#allocation6 + $0x10] sm:$0xff]
    %v1027 = vld [vmem:[#allocation6 + $0x18] sm:$0xff]
    %v1030 = vsel %vm449, %v1020, %v1013
    %v1031 = vsel %vm176, %v1030, 0
    %1033 = vmatpush.msra.mxu0 0.0
    %1034 = vmatpush.msra.mxu0 0.0
    %1035 = vmatpush.msra.mxu0 0.0
    %1036 = vmatpush.msra.mxu0 0.0
    %1037 = vmatpush.msra.mxu0 0.0
    %1038 = vmatpush.msra.mxu0 0.0
    %1039 = vmatpush.msra.mxu0 0.0
    %1040 = vmatpush.msra.mxu0 0.0
    %1041 = vmatpush.msra.mxu0 0.0
    %1042 = vmatpush.msra.mxu0 0.0
    %1043 = vmatpush.msra.mxu0 0.0
    %1044 = vmatpush.msra.mxu0 0.0
    %1045 = vmatpush.msra.mxu0 %v1027
    %1046 = vmatpush.msra.mxu0 %v1026
    %1047 = vmatpush.msra.mxu0 %v1025
    %1048 = vmatpush.msra.mxu0 %v1024
    %1049 = vmatmul.f32.gmra.mxu0 %v1031
    %v1050 = vpop.f32.mrf.mxu0
    %v1051 = vadd.f32 0.0, %v1050
    %1052 = vdwg.mxu0
    %v1054 = vrot.slane %v1051, 4
    %v1056 = vadd.f32 %v1023, %v1054
    %v1057 = vld [vmem:[#allocation7] sm:$0xff]
    %v1058 = vld [vmem:[#allocation7 + $0x8] sm:$0xff]
    %v1059 = vld [vmem:[#allocation7 + $0x10] sm:$0xff]
    %v1060 = vld [vmem:[#allocation7 + $0x18] sm:$0xff]
    %1061 = vmatpush.msra.mxu0 0.0
    %1062 = vmatpush.msra.mxu0 0.0
    %1063 = vmatpush.msra.mxu0 0.0
    %1064 = vmatpush.msra.mxu0 0.0
    %1065 = vmatpush.msra.mxu0 0.0
    %1066 = vmatpush.msra.mxu0 0.0
    %1067 = vmatpush.msra.mxu0 0.0
    %1068 = vmatpush.msra.mxu0 0.0
    %1069 = vmatpush.msra.mxu0 0.0
    %1070 = vmatpush.msra.mxu0 0.0
    %1071 = vmatpush.msra.mxu0 0.0
    %1072 = vmatpush.msra.mxu0 0.0
    %1073 = vmatpush.msra.mxu0 %v1060
    %1074 = vmatpush.msra.mxu0 %v1059
    %1075 = vmatpush.msra.mxu0 %v1058
    %1076 = vmatpush.msra.mxu0 %v1057
    %1077 = vmatmul.f32.gmra.mxu0 %v864
    %v1078 = vpop.f32.mrf.mxu0
    %v1079 = vadd.f32 0.0, %v1078
    %1080 = vdwg.mxu0
    %v1082 = vrot.slane %v1079, 4
    %v1084 = vadd.f32 %v1056, %v1082
    %v1085 = vmul.f32 %v1084, 0.5
    %v1086 = vtanh.pop %v1085
    %v1087 = vadd.f32 %v1086, 1.0
    %v1088 = vmul.f32 %v1087, 0.5
    %v1089 = vtanh.pop %v1084
    %v1091 = vrot.slane %v845, 6
    %v1093 = vmul.f32 %v1088, %v1091
    %1095 = vrot.lane.b32.xlu0 %v1089, 64
    %v1096 = vpop.permute.xlu0 %1095
    %v1098 = vmul.f32 %v1088, %v1096
    %1100 = vrot.lane.b32.xlu0 %v1098, 32
    %v1101 = vpop.permute.xlu0 %1100
    %v1103 = vadd.f32 %v1093, %v1101
    %v1104 = vtanh.pop %v1103
    %1106 = vrot.lane.b32.xlu0 %v1104, 64
    %v1107 = vpop.permute.xlu0 %1106
    %v1109 = vmul.f32 %v1088, %v1107
    %v1110 = vld [vmem:[#allocation10] sm:$0xff]
    %v1111 = vld [vmem:[#allocation10 + $0x8] sm:$0xff]
    %v1112 = vld [vmem:[#allocation10 + $0x10] sm:$0xff]
    %v1113 = vld [vmem:[#allocation10 + $0x18] sm:$0xff]
    %v1114 = vld [vmem:[#allocation12] sm:$0x1]
    %v1116 = vperm.slane %v1114, 0
    %v1119 = vrot.slane %v1109, 4
    %1120 = vrot.lane.b32.xlu0 %v1119, 32
    %v1121 = vpop.permute.xlu0 %1120
    %v1122 = vsel %vm176, %v1121, 0
    %1124 = vmatpush.msra.mxu0 0.0
    %1125 = vmatpush.msra.mxu0 0.0
    %1126 = vmatpush.msra.mxu0 0.0
    %1127 = vmatpush.msra.mxu0 0.0
    %1128 = vmatpush.msra.mxu0 0.0
    %1129 = vmatpush.msra.mxu0 0.0
    %1130 = vmatpush.msra.mxu0 0.0
    %1131 = vmatpush.msra.mxu0 0.0
    %1132 = vmatpush.msra.mxu0 0.0
    %1133 = vmatpush.msra.mxu0 0.0
    %1134 = vmatpush.msra.mxu0 0.0
    %1135 = vmatpush.msra.mxu0 0.0
    %1136 = vmatpush.msra.mxu0 %v1113
    %1137 = vmatpush.msra.mxu0 %v1112
    %1138 = vmatpush.msra.mxu0 %v1111
    %1139 = vmatpush.msra.mxu0 %v1110
    %1140 = vmatmul.f32.gmra.mxu0 %v1122
    %v1141 = vpop.f32.mrf.mxu0
    %v1142 = vadd.f32 %v1116, %v1141
    %1143 = vdwg.mxu0
    %v1144 = vsel %vm627, %v1142, -inf
    %1145 = vmax.xlane.f32.xlu0 %v1144
    %v1146 = vpop.xlane.xlu0 %1145
    %v1147 = vsub.f32 %v1142, %v1146
    %v1148 = vmul.f32 %v1147, 1.442695
    %v1149 = vpow.pop %v1148
    %v1150 = vsel %vm627, %v1149, 0.0
    %1151 = vadd.xlane.f32.xlu0 %v1150
    %v1152 = vpop.xlane.xlu0 %1151
    %v1153 = vlog2.pop %v1152
    %v1154 = vmul.f32 %v1153, 0.6931472
    %v1155 = vsub.f32 %v1147, %v1154
    %s1156 = sld [smem:[#allocation2 + $0x2]]
    %p1157 = scmp.ne.s32.totalorder %s1156, 0
    %s1158 = scalar_select %p1157, 1, 0
    %v1159 = vstv %s1158
    %vm1160 = vcmp.eq.s32.totalorder %v1159, 1
    %v1161 = vsel %vm1160, %v1155, 0.0
    %s1162 = scalar_lea.vmem [#allocation13], 4
    %1163 = vst.msk [vmem:[%s1162] sm:$0x3] %vm627, %v1161
    %v1164 = vld [vmem:[%s11] sm:$0xff]
    %v1165 = vld [vmem:[%s11 + $0x8] sm:$0xff]
    %v1166 = vld [vmem:[%s11 + $0x10] sm:$0xff]
    %v1167 = vld [vmem:[%s11 + $0x18] sm:$0xff]
    %v1168 = vld [vmem:[%s12] sm:$0x1]
    %v1170 = vperm.slane %v1168, 0
    %1172 = vmatpush.msra.mxu0 0.0
    %1173 = vmatpush.msra.mxu0 0.0
    %1174 = vmatpush.msra.mxu0 0.0
    %1175 = vmatpush.msra.mxu0 0.0
    %1176 = vmatpush.msra.mxu0 0.0
    %1177 = vmatpush.msra.mxu0 0.0
    %1178 = vmatpush.msra.mxu0 0.0
    %1179 = vmatpush.msra.mxu0 0.0
    %1180 = vmatpush.msra.mxu0 0.0
    %1181 = vmatpush.msra.mxu0 0.0
    %1182 = vmatpush.msra.mxu0 0.0
    %1183 = vmatpush.msra.mxu0 0.0
    %1184 = vmatpush.msra.mxu0 %v1167
    %1185 = vmatpush.msra.mxu0 %v1166
    %1186 = vmatpush.msra.mxu0 %v1165
    %1187 = vmatpush.msra.mxu0 %v1164
    %1188 = vmatmul.f32.gmra.mxu0 %v1122
    %v1189 = vpop.f32.mrf.mxu0
    %v1190 = vadd.f32 %v1170, %v1189
    %1191 = vdwg.mxu0
    %v1193 = vrot.slane %v1190, 1
    %v1194 = vperm.slane %v1190, 0
    %v1195 = vperm.slane %v1193, 0
    %v1198 = vadd.f32 %v387, %v1194
    %v1199 = vadd.f32 %v390, %v1195
    %v1200 = vtanh.pop %v1198
    %v1201 = vtanh.pop %v1199
    %v1202 = vmul.f32 %v1200, %v435
    %v1203 = vmul.f32 %v1201, %v435
    %v1204 = vsel %vm176, %v1202, 0.0
    %1205 = vadd.xlane.f32.xlu0 %v1204
    %v1206 = vpop.xlane.xlu0 %1205
    %v1207 = vsel %vm176, %v1203, 0.0
    %1208 = vadd.xlane.f32.xlu0 %v1207
    %v1209 = vpop.xlane.xlu0 %1208
    %v1212 = vperm.slane %v1206, %v157
    %v1213 = vperm.slane %v1209, %v157
    %v1214 = vsel %vm449, %v1213, %v1212
    %v1216 = vsel %vm452, %v1214, -inf
    %1217 = vmax.xlane.f32.xlu0 %v1216
    %v1218 = vpop.xlane.xlu0 %1217
    %v1220 = vperm.slane %v1218, 0
    %v1221 = vperm.slane %v1218, 1
    %v1224 = vsub.f32 %v1206, %v1220
    %v1225 = vsub.f32 %v1209, %v1221
    %v1226 = vmul.f32 %v1224, 1.442695
    %v1227 = vpow.pop %v1226
    %v1228 = vmul.f32 %v1225, 1.442695
    %v1229 = vpow.pop %v1228
    %1232 = vset.pattern.permute.xlu0 0
    %1233 = vperm.xlu0 %1232, %v1227
    %v1234 = vpop.permute.xlu0 %1233
    %1235 = vset.pattern.permute.xlu0 0
    %1236 = vperm.xlu0 %1235, %v1229
    %v1237 = vpop.permute.xlu0 %1236
    %v1238 = vperm.slane %v1234, %v157
    %v1239 = vperm.slane %v1237, %v157
    %v1240 = vsel %vm449, %v1239, %v1238
    %v1242 = vsel %vm452, %v1240, 0.0
    %1243 = vadd.xlane.f32.xlu0 %v1242
    %v1244 = vpop.xlane.xlu0 %1243
    %v1245 = vrcp.pop %v1244
    %v1247 = vperm.slane %v1245, 0
    %v1248 = vperm.slane %v1245, 1
    %v1251 = vmul.f32 %v1227, %v1247
    %v1252 = vmul.f32 %v1229, %v1248
    %1254 = vset.pattern.permute.xlu0 0
    %1255 = vperm.xlu0 %1254, %v1251
    %v1256 = vpop.permute.xlu0 %1255
    %1259 = vset.pattern.permute.xlu0 0
    %1260 = vperm.xlu0 %1259, %v1252
    %v1261 = vpop.permute.xlu0 %1260
    %v1263 = vmul.f32 %v1256, %v353
    %v1264 = vmul.f32 %v1261, %v354
    %v1265 = vsel %vm176, %v1263, 0.0
    %v1266 = vrot.slane %v1265, 4
    %v1267 = vadd.f32 %v1265, %v1266
    %v1268 = vrot.slane %v1267, 2
    %v1269 = vadd.f32 %v1267, %v1268
    %v1270 = vrot.slane %v1269, 1
    %v1271 = vadd.f32 %v1269, %v1270
    %v1272 = vsel %vm176, %v1264, 0.0
    %v1273 = vrot.slane %v1272, 4
    %v1274 = vadd.f32 %v1272, %v1273
    %v1275 = vrot.slane %v1274, 2
    %v1276 = vadd.f32 %v1274, %v1275
    %v1277 = vrot.slane %v1276, 1
    %v1278 = vadd.f32 %v1276, %v1277
    %v1279 = vrot.slane %v308, 2
    %v1281 = vadd.f32 %v236, %v1279
    %v1282 = vld [vmem:[#allocation6] sm:$0xff]
    %v1283 = vld [vmem:[#allocation6 + $0x8] sm:$0xff]
    %v1284 = vld [vmem:[#allocation6 + $0x10] sm:$0xff]
    %v1285 = vld [vmem:[#allocation6 + $0x18] sm:$0xff]
    %v1288 = vsel %vm449, %v1278, %v1271
    %v1289 = vsel %vm176, %v1288, 0
    %1291 = vmatpush.msra.mxu0 0.0
    %1292 = vmatpush.msra.mxu0 0.0
    %1293 = vmatpush.msra.mxu0 0.0
    %1294 = vmatpush.msra.mxu0 0.0
    %1295 = vmatpush.msra.mxu0 0.0
    %1296 = vmatpush.msra.mxu0 0.0
    %1297 = vmatpush.msra.mxu0 0.0
    %1298 = vmatpush.msra.mxu0 0.0
    %1299 = vmatpush.msra.mxu0 0.0
    %1300 = vmatpush.msra.mxu0 0.0
    %1301 = vmatpush.msra.mxu0 0.0
    %1302 = vmatpush.msra.mxu0 0.0
    %1303 = vmatpush.msra.mxu0 %v1285
    %1304 = vmatpush.msra.mxu0 %v1284
    %1305 = vmatpush.msra.mxu0 %v1283
    %1306 = vmatpush.msra.mxu0 %v1282
    %1307 = vmatmul.f32.gmra.mxu0 %v1289
    %v1308 = vpop.f32.mrf.mxu0
    %v1309 = vadd.f32 0.0, %v1308
    %1310 = vdwg.mxu0
    %v1312 = vrot.slane %v1309, 2
    %v1314 = vadd.f32 %v1281, %v1312
    %v1315 = vld [vmem:[#allocation7] sm:$0xff]
    %v1316 = vld [vmem:[#allocation7 + $0x8] sm:$0xff]
    %v1317 = vld [vmem:[#allocation7 + $0x10] sm:$0xff]
    %v1318 = vld [vmem:[#allocation7 + $0x18] sm:$0xff]
    %1319 = vmatpush.msra.mxu0 0.0
    %1320 = vmatpush.msra.mxu0 0.0
    %1321 = vmatpush.msra.mxu0 0.0
    %1322 = vmatpush.msra.mxu0 0.0
    %1323 = vmatpush.msra.mxu0 0.0
    %1324 = vmatpush.msra.mxu0 0.0
    %1325 = vmatpush.msra.mxu0 0.0
    %1326 = vmatpush.msra.mxu0 0.0
    %1327 = vmatpush.msra.mxu0 0.0
    %1328 = vmatpush.msra.mxu0 0.0
    %1329 = vmatpush.msra.mxu0 0.0
    %1330 = vmatpush.msra.mxu0 0.0
    %1331 = vmatpush.msra.mxu0 %v1318
    %1332 = vmatpush.msra.mxu0 %v1317
    %1333 = vmatpush.msra.mxu0 %v1316
    %1334 = vmatpush.msra.mxu0 %v1315
    %1335 = vmatmul.f32.gmra.mxu0 %v1122
    %v1336 = vpop.f32.mrf.mxu0
    %v1337 = vadd.f32 0.0, %v1336
    %1338 = vdwg.mxu0
    %v1340 = vrot.slane %v1337, 2
    %v1342 = vadd.f32 %v1314, %v1340
    %v1343 = vmul.f32 %v1342, 0.5
    %v1344 = vtanh.pop %v1343
    %v1345 = vadd.f32 %v1344, 1.0
    %v1346 = vmul.f32 %v1345, 0.5
    %v1347 = vtanh.pop %v1342
    %v1349 = vrot.slane %v1103, 6
    %v1351 = vmul.f32 %v1346, %v1349
    %1353 = vrot.lane.b32.xlu0 %v1347, 64
    %v1354 = vpop.permute.xlu0 %1353
    %v1356 = vmul.f32 %v1346, %v1354
    %1358 = vrot.lane.b32.xlu0 %v1356, 32
    %v1359 = vpop.permute.xlu0 %1358
    %v1361 = vadd.f32 %v1351, %v1359
    %v1362 = vtanh.pop %v1361
    %1364 = vrot.lane.b32.xlu0 %v1362, 64
    %v1365 = vpop.permute.xlu0 %1364
    %v1367 = vmul.f32 %v1346, %v1365
    %v1368 = vld [vmem:[#allocation10] sm:$0xff]
    %v1369 = vld [vmem:[#allocation10 + $0x8] sm:$0xff]
    %v1370 = vld [vmem:[#allocation10 + $0x10] sm:$0xff]
    %v1371 = vld [vmem:[#allocation10 + $0x18] sm:$0xff]
    %v1372 = vld [vmem:[#allocation12] sm:$0x1]
    %v1374 = vperm.slane %v1372, 0
    %v1377 = vrot.slane %v1367, 6
    %1378 = vrot.lane.b32.xlu0 %v1377, 32
    %v1379 = vpop.permute.xlu0 %1378
    %v1380 = vsel %vm176, %v1379, 0
    %1382 = vmatpush.msra.mxu0 0.0
    %1383 = vmatpush.msra.mxu0 0.0
    %1384 = vmatpush.msra.mxu0 0.0
    %1385 = vmatpush.msra.mxu0 0.0
    %1386 = vmatpush.msra.mxu0 0.0
    %1387 = vmatpush.msra.mxu0 0.0
    %1388 = vmatpush.msra.mxu0 0.0
    %1389 = vmatpush.msra.mxu0 0.0
    %1390 = vmatpush.msra.mxu0 0.0
    %1391 = vmatpush.msra.mxu0 0.0
    %1392 = vmatpush.msra.mxu0 0.0
    %1393 = vmatpush.msra.mxu0 0.0
    %1394 = vmatpush.msra.mxu0 %v1371
    %1395 = vmatpush.msra.mxu0 %v1370
    %1396 = vmatpush.msra.mxu0 %v1369
    %1397 = vmatpush.msra.mxu0 %v1368
    %1398 = vmatmul.f32.gmra.mxu0 %v1380
    %v1399 = vpop.f32.mrf.mxu0
    %v1400 = vadd.f32 %v1374, %v1399
    %1401 = vdwg.mxu0
    %v1402 = vsel %vm627, %v1400, -inf
    %1403 = vmax.xlane.f32.xlu0 %v1402
    %v1404 = vpop.xlane.xlu0 %1403
    %v1405 = vsub.f32 %v1400, %v1404
    %v1406 = vmul.f32 %v1405, 1.442695
    %v1407 = vpow.pop %v1406
    %v1408 = vsel %vm627, %v1407, 0.0
    %1409 = vadd.xlane.f32.xlu0 %v1408
    %v1410 = vpop.xlane.xlu0 %1409
    %v1411 = vlog2.pop %v1410
    %v1412 = vmul.f32 %v1411, 0.6931472
    %v1413 = vsub.f32 %v1405, %v1412
    %s1414 = sld [smem:[#allocation2 + $0x3]]
    %p1415 = scmp.ne.s32.totalorder %s1414, 0
    %s1416 = scalar_select %p1415, 1, 0
    %v1417 = vstv %s1416
    %vm1418 = vcmp.eq.s32.totalorder %v1417, 1
    %v1419 = vsel %vm1418, %v1413, 0.0
    %s1420 = scalar_lea.vmem [#allocation13], 6
    %1421 = vst.msk [vmem:[%s1420] sm:$0x3] %vm627, %v1419
    %v1422 = vld [vmem:[%s11] sm:$0xff]
    %v1423 = vld [vmem:[%s11 + $0x8] sm:$0xff]
    %v1424 = vld [vmem:[%s11 + $0x10] sm:$0xff]
    %v1425 = vld [vmem:[%s11 + $0x18] sm:$0xff]
    %v1426 = vld [vmem:[%s12] sm:$0x1]
    %v1428 = vperm.slane %v1426, 0
    %1430 = vmatpush.msra.mxu0 0.0
    %1431 = vmatpush.msra.mxu0 0.0
    %1432 = vmatpush.msra.mxu0 0.0
    %1433 = vmatpush.msra.mxu0 0.0
    %1434 = vmatpush.msra.mxu0 0.0
    %1435 = vmatpush.msra.mxu0 0.0
    %1436 = vmatpush.msra.mxu0 0.0
    %1437 = vmatpush.msra.mxu0 0.0
    %1438 = vmatpush.msra.mxu0 0.0
    %1439 = vmatpush.msra.mxu0 0.0
    %1440 = vmatpush.msra.mxu0 0.0
    %1441 = vmatpush.msra.mxu0 0.0
    %1442 = vmatpush.msra.mxu0 %v1425
    %1443 = vmatpush.msra.mxu0 %v1424
    %1444 = vmatpush.msra.mxu0 %v1423
    %1445 = vmatpush.msra.mxu0 %v1422
    %1446 = vmatmul.f32.gmra.mxu0 %v1380
    %v1447 = vpop.f32.mrf.mxu0
    %v1448 = vadd.f32 %v1428, %v1447
    %1449 = vdwg.mxu0
    %v1451 = vrot.slane %v1448, 1
    %v1452 = vperm.slane %v1448, 0
    %v1453 = vperm.slane %v1451, 0
    %v1456 = vadd.f32 %v387, %v1452
    %v1457 = vadd.f32 %v390, %v1453
    %v1458 = vtanh.pop %v1456
    %v1459 = vtanh.pop %v1457
    %v1460 = vmul.f32 %v1458, %v435
    %v1461 = vmul.f32 %v1459, %v435
    %v1462 = vsel %vm176, %v1460, 0.0
    %1463 = vadd.xlane.f32.xlu0 %v1462
    %v1464 = vpop.xlane.xlu0 %1463
    %v1465 = vsel %vm176, %v1461, 0.0
    %1466 = vadd.xlane.f32.xlu0 %v1465
    %v1467 = vpop.xlane.xlu0 %1466
    %v1470 = vperm.slane %v1464, %v157
    %v1471 = vperm.slane %v1467, %v157
    %v1472 = vsel %vm449, %v1471, %v1470
    %v1474 = vsel %vm452, %v1472, -inf
    %1475 = vmax.xlane.f32.xlu0 %v1474
    %v1476 = vpop.xlane.xlu0 %1475
    %v1478 = vperm.slane %v1476, 0
    %v1479 = vperm.slane %v1476, 1
    %v1482 = vsub.f32 %v1464, %v1478
    %v1483 = vsub.f32 %v1467, %v1479
    %v1484 = vmul.f32 %v1482, 1.442695
    %v1485 = vpow.pop %v1484
    %v1486 = vmul.f32 %v1483, 1.442695
    %v1487 = vpow.pop %v1486
    %1490 = vset.pattern.permute.xlu0 0
    %1491 = vperm.xlu0 %1490, %v1485
    %v1492 = vpop.permute.xlu0 %1491
    %1493 = vset.pattern.permute.xlu0 0
    %1494 = vperm.xlu0 %1493, %v1487
    %v1495 = vpop.permute.xlu0 %1494
    %v1496 = vperm.slane %v1492, %v157
    %v1497 = vperm.slane %v1495, %v157
    %v1498 = vsel %vm449, %v1497, %v1496
    %v1500 = vsel %vm452, %v1498, 0.0
    %1501 = vadd.xlane.f32.xlu0 %v1500
    %v1502 = vpop.xlane.xlu0 %1501
    %v1503 = vrcp.pop %v1502
    %v1505 = vperm.slane %v1503, 0
    %v1506 = vperm.slane %v1503, 1
    %v1509 = vmul.f32 %v1485, %v1505
    %v1510 = vmul.f32 %v1487, %v1506
    %1512 = vset.pattern.permute.xlu0 0
    %1513 = vperm.xlu0 %1512, %v1509
    %v1514 = vpop.permute.xlu0 %1513
    %1517 = vset.pattern.permute.xlu0 0
    %1518 = vperm.xlu0 %1517, %v1510
    %v1519 = vpop.permute.xlu0 %1518
    %v1521 = vmul.f32 %v1514, %v353
    %v1522 = vmul.f32 %v1519, %v354
    %v1523 = vsel %vm176, %v1521, 0.0
    %v1524 = vrot.slane %v1523, 4
    %v1525 = vadd.f32 %v1523, %v1524
    %v1526 = vrot.slane %v1525, 2
    %v1527 = vadd.f32 %v1525, %v1526
    %v1528 = vrot.slane %v1527, 1
    %v1529 = vadd.f32 %v1527, %v1528
    %v1530 = vsel %vm176, %v1522, 0.0
    %v1531 = vrot.slane %v1530, 4
    %v1532 = vadd.f32 %v1530, %v1531
    %v1533 = vrot.slane %v1532, 2
    %v1534 = vadd.f32 %v1532, %v1533
    %v1535 = vrot.slane %v1534, 1
    %v1536 = vadd.f32 %v1534, %v1535
    %v1537 = vadd.f32 %v239, %v308
    %v1538 = vld [vmem:[#allocation6] sm:$0xff]
    %v1539 = vld [vmem:[#allocation6 + $0x8] sm:$0xff]
    %v1540 = vld [vmem:[#allocation6 + $0x10] sm:$0xff]
    %v1541 = vld [vmem:[#allocation6 + $0x18] sm:$0xff]
    %v1544 = vsel %vm449, %v1536, %v1529
    %v1545 = vsel %vm176, %v1544, 0
    %1547 = vmatpush.msra.mxu0 0.0
    %1548 = vmatpush.msra.mxu0 0.0
    %1549 = vmatpush.msra.mxu0 0.0
    %1550 = vmatpush.msra.mxu0 0.0
    %1551 = vmatpush.msra.mxu0 0.0
    %1552 = vmatpush.msra.mxu0 0.0
    %1553 = vmatpush.msra.mxu0 0.0
    %1554 = vmatpush.msra.mxu0 0.0
    %1555 = vmatpush.msra.mxu0 0.0
    %1556 = vmatpush.msra.mxu0 0.0
    %1557 = vmatpush.msra.mxu0 0.0
    %1558 = vmatpush.msra.mxu0 0.0
    %1559 = vmatpush.msra.mxu0 %v1541
    %1560 = vmatpush.msra.mxu0 %v1540
    %1561 = vmatpush.msra.mxu0 %v1539
    %1562 = vmatpush.msra.mxu0 %v1538
    %1563 = vmatmul.f32.gmra.mxu0 %v1545
    %v1564 = vpop.f32.mrf.mxu0
    %v1565 = vadd.f32 0.0, %v1564
    %1566 = vdwg.mxu0
    %v1567 = vadd.f32 %v1537, %v1565
    %v1568 = vld [vmem:[#allocation7] sm:$0xff]
    %v1569 = vld [vmem:[#allocation7 + $0x8] sm:$0xff]
    %v1570 = vld [vmem:[#allocation7 + $0x10] sm:$0xff]
    %v1571 = vld [vmem:[#allocation7 + $0x18] sm:$0xff]
    %1572 = vmatpush.msra.mxu0 0.0
    %1573 = vmatpush.msra.mxu0 0.0
    %1574 = vmatpush.msra.mxu0 0.0
    %1575 = vmatpush.msra.mxu0 0.0
    %1576 = vmatpush.msra.mxu0 0.0
    %1577 = vmatpush.msra.mxu0 0.0
    %1578 = vmatpush.msra.mxu0 0.0
    %1579 = vmatpush.msra.mxu0 0.0
    %1580 = vmatpush.msra.mxu0 0.0
    %1581 = vmatpush.msra.mxu0 0.0
    %1582 = vmatpush.msra.mxu0 0.0
    %1583 = vmatpush.msra.mxu0 0.0
    %1584 = vmatpush.msra.mxu0 %v1571
    %1585 = vmatpush.msra.mxu0 %v1570
    %1586 = vmatpush.msra.mxu0 %v1569
    %1587 = vmatpush.msra.mxu0 %v1568
    %1588 = vmatmul.f32.gmra.mxu0 %v1380
    %v1589 = vpop.f32.mrf.mxu0
    %v1590 = vadd.f32 0.0, %v1589
    %1591 = vdwg.mxu0
    %v1592 = vadd.f32 %v1567, %v1590
    %v1593 = vmul.f32 %v1592, 0.5
    %v1594 = vtanh.pop %v1593
    %v1595 = vadd.f32 %v1594, 1.0
    %v1596 = vmul.f32 %v1595, 0.5
    %v1597 = vtanh.pop %v1592
    %v1599 = vrot.slane %v1361, 6
    %v1601 = vmul.f32 %v1596, %v1599
    %1603 = vrot.lane.b32.xlu0 %v1597, 64
    %v1604 = vpop.permute.xlu0 %1603
    %v1606 = vmul.f32 %v1596, %v1604
    %1608 = vrot.lane.b32.xlu0 %v1606, 32
    %v1609 = vpop.permute.xlu0 %1608
    %v1611 = vadd.f32 %v1601, %v1609
    %v1612 = vtanh.pop %v1611
    %1614 = vrot.lane.b32.xlu0 %v1612, 64
    %v1615 = vpop.permute.xlu0 %1614
    %v1617 = vmul.f32 %v1596, %v1615
    %v1618 = vld [vmem:[#allocation10] sm:$0xff]
    %v1619 = vld [vmem:[#allocation10 + $0x8] sm:$0xff]
    %v1620 = vld [vmem:[#allocation10 + $0x10] sm:$0xff]
    %v1621 = vld [vmem:[#allocation10 + $0x18] sm:$0xff]
    %v1622 = vld [vmem:[#allocation12] sm:$0x1]
    %v1624 = vperm.slane %v1622, 0
    %1627 = vrot.lane.b32.xlu0 %v1617, 32
    %v1628 = vpop.permute.xlu0 %1627
    %v1629 = vsel %vm176, %v1628, 0
    %1631 = vmatpush.msra.mxu0 0.0
    %1632 = vmatpush.msra.mxu0 0.0
    %1633 = vmatpush.msra.mxu0 0.0
    %1634 = vmatpush.msra.mxu0 0.0
    %1635 = vmatpush.msra.mxu0 0.0
    %1636 = vmatpush.msra.mxu0 0.0
    %1637 = vmatpush.msra.mxu0 0.0
    %1638 = vmatpush.msra.mxu0 0.0
    %1639 = vmatpush.msra.mxu0 0.0
    %1640 = vmatpush.msra.mxu0 0.0
    %1641 = vmatpush.msra.mxu0 0.0
    %1642 = vmatpush.msra.mxu0 0.0
    %1643 = vmatpush.msra.mxu0 %v1621
    %1644 = vmatpush.msra.mxu0 %v1620
    %1645 = vmatpush.msra.mxu0 %v1619
    %1646 = vmatpush.msra.mxu0 %v1618
    %1647 = vmatmul.f32.gmra.mxu0 %v1629
    %v1648 = vpop.f32.mrf.mxu0
    %v1649 = vadd.f32 %v1624, %v1648
    %1650 = vdwg.mxu0
    %v1651 = vsel %vm627, %v1649, -inf
    %1652 = vmax.xlane.f32.xlu0 %v1651
    %v1653 = vpop.xlane.xlu0 %1652
    %v1654 = vsub.f32 %v1649, %v1653
    %v1655 = vmul.f32 %v1654, 1.442695
    %v1656 = vpow.pop %v1655
    %v1657 = vsel %vm627, %v1656, 0.0
    %1658 = vadd.xlane.f32.xlu0 %v1657
    %v1659 = vpop.xlane.xlu0 %1658
    %v1660 = vlog2.pop %v1659
    %v1661 = vmul.f32 %v1660, 0.6931472
    %v1662 = vsub.f32 %v1654, %v1661
    %s1663 = sld [smem:[#allocation2 + $0x4]]
    %p1664 = scmp.ne.s32.totalorder %s1663, 0
    %s1665 = scalar_select %p1664, 1, 0
    %v1666 = vstv %s1665
    %vm1667 = vcmp.eq.s32.totalorder %v1666, 1
    %v1668 = vsel %vm1667, %v1662, 0.0
    %s1669 = scalar_lea.vmem [#allocation13], 8
    %1670 = vst.msk [vmem:[%s1669] sm:$0x3] %vm627, %v1668
    %v1671 = vld [vmem:[%s11] sm:$0xff]
    %v1672 = vld [vmem:[%s11 + $0x8] sm:$0xff]
    %v1673 = vld [vmem:[%s11 + $0x10] sm:$0xff]
    %v1674 = vld [vmem:[%s11 + $0x18] sm:$0xff]
    %v1675 = vld [vmem:[%s12] sm:$0x1]
    %v1677 = vperm.slane %v1675, 0
    %1679 = vmatpush.msra.mxu0 0.0
    %1680 = vmatpush.msra.mxu0 0.0
    %1681 = vmatpush.msra.mxu0 0.0
    %1682 = vmatpush.msra.mxu0 0.0
    %1683 = vmatpush.msra.mxu0 0.0
    %1684 = vmatpush.msra.mxu0 0.0
    %1685 = vmatpush.msra.mxu0 0.0
    %1686 = vmatpush.msra.mxu0 0.0
    %1687 = vmatpush.msra.mxu0 0.0
    %1688 = vmatpush.msra.mxu0 0.0
    %1689 = vmatpush.msra.mxu0 0.0
    %1690 = vmatpush.msra.mxu0 0.0
    %1691 = vmatpush.msra.mxu0 %v1674
    %1692 = vmatpush.msra.mxu0 %v1673
    %1693 = vmatpush.msra.mxu0 %v1672
    %1694 = vmatpush.msra.mxu0 %v1671
    %1695 = vmatmul.f32.gmra.mxu0 %v1629
    %v1696 = vpop.f32.mrf.mxu0
    %v1697 = vadd.f32 %v1677, %v1696
    %1698 = vdwg.mxu0
    %v1700 = vrot.slane %v1697, 1
    %v1701 = vperm.slane %v1697, 0
    %v1702 = vperm.slane %v1700, 0
    %v1705 = vadd.f32 %v387, %v1701
    %v1706 = vadd.f32 %v390, %v1702
    %v1707 = vtanh.pop %v1705
    %v1708 = vtanh.pop %v1706
    %v1709 = vmul.f32 %v1707, %v435
    %v1710 = vmul.f32 %v1708, %v435
    %v1711 = vsel %vm176, %v1709, 0.0
    %1712 = vadd.xlane.f32.xlu0 %v1711
    %v1713 = vpop.xlane.xlu0 %1712
    %v1714 = vsel %vm176, %v1710, 0.0
    %1715 = vadd.xlane.f32.xlu0 %v1714
    %v1716 = vpop.xlane.xlu0 %1715
    %v1719 = vperm.slane %v1713, %v157
    %v1720 = vperm.slane %v1716, %v157
    %v1721 = vsel %vm449, %v1720, %v1719
    %v1723 = vsel %vm452, %v1721, -inf
    %1724 = vmax.xlane.f32.xlu0 %v1723
    %v1725 = vpop.xlane.xlu0 %1724
    %v1727 = vperm.slane %v1725, 0
    %v1728 = vperm.slane %v1725, 1
    %v1731 = vsub.f32 %v1713, %v1727
    %v1732 = vsub.f32 %v1716, %v1728
    %v1733 = vmul.f32 %v1731, 1.442695
    %v1734 = vpow.pop %v1733
    %v1735 = vmul.f32 %v1732, 1.442695
    %v1736 = vpow.pop %v1735
    %1739 = vset.pattern.permute.xlu0 0
    %1740 = vperm.xlu0 %1739, %v1734
    %v1741 = vpop.permute.xlu0 %1740
    %1742 = vset.pattern.permute.xlu0 0
    %1743 = vperm.xlu0 %1742, %v1736
    %v1744 = vpop.permute.xlu0 %1743
    %v1745 = vperm.slane %v1741, %v157
    %v1746 = vperm.slane %v1744, %v157
    %v1747 = vsel %vm449, %v1746, %v1745
    %v1749 = vsel %vm452, %v1747, 0.0
    %1750 = vadd.xlane.f32.xlu0 %v1749
    %v1751 = vpop.xlane.xlu0 %1750
    %v1752 = vrcp.pop %v1751
    %v1754 = vperm.slane %v1752, 0
    %v1755 = vperm.slane %v1752, 1
    %v1758 = vmul.f32 %v1734, %v1754
    %v1759 = vmul.f32 %v1736, %v1755
    %1761 = vset.pattern.permute.xlu0 0
    %1762 = vperm.xlu0 %1761, %v1758
    %v1763 = vpop.permute.xlu0 %1762
    %1766 = vset.pattern.permute.xlu0 0
    %1767 = vperm.xlu0 %1766, %v1759
    %v1768 = vpop.permute.xlu0 %1767
    %v1770 = vmul.f32 %v1763, %v353
    %v1771 = vmul.f32 %v1768, %v354
    %v1772 = vsel %vm176, %v1770, 0.0
    %v1773 = vrot.slane %v1772, 4
    %v1774 = vadd.f32 %v1772, %v1773
    %v1775 = vrot.slane %v1774, 2
    %v1776 = vadd.f32 %v1774, %v1775
    %v1777 = vrot.slane %v1776, 1
    %v1778 = vadd.f32 %v1776, %v1777
    %v1779 = vsel %vm176, %v1771, 0.0
    %v1780 = vrot.slane %v1779, 4
    %v1781 = vadd.f32 %v1779, %v1780
    %v1782 = vrot.slane %v1781, 2
    %v1783 = vadd.f32 %v1781, %v1782
    %v1784 = vrot.slane %v1783, 1
    %v1785 = vadd.f32 %v1783, %v1784
    %v1786 = vadd.f32 %v239, %v763
    %v1787 = vld [vmem:[#allocation6] sm:$0xff]
    %v1788 = vld [vmem:[#allocation6 + $0x8] sm:$0xff]
    %v1789 = vld [vmem:[#allocation6 + $0x10] sm:$0xff]
    %v1790 = vld [vmem:[#allocation6 + $0x18] sm:$0xff]
    %v1793 = vsel %vm449, %v1785, %v1778
    %v1794 = vsel %vm176, %v1793, 0
    %1796 = vmatpush.msra.mxu0 0.0
    %1797 = vmatpush.msra.mxu0 0.0
    %1798 = vmatpush.msra.mxu0 0.0
    %1799 = vmatpush.msra.mxu0 0.0
    %1800 = vmatpush.msra.mxu0 0.0
    %1801 = vmatpush.msra.mxu0 0.0
    %1802 = vmatpush.msra.mxu0 0.0
    %1803 = vmatpush.msra.mxu0 0.0
    %1804 = vmatpush.msra.mxu0 0.0
    %1805 = vmatpush.msra.mxu0 0.0
    %1806 = vmatpush.msra.mxu0 0.0
    %1807 = vmatpush.msra.mxu0 0.0
    %1808 = vmatpush.msra.mxu0 %v1790
    %1809 = vmatpush.msra.mxu0 %v1789
    %1810 = vmatpush.msra.mxu0 %v1788
    %1811 = vmatpush.msra.mxu0 %v1787
    %1812 = vmatmul.f32.gmra.mxu0 %v1794
    %v1813 = vpop.f32.mrf.mxu0
    %v1814 = vadd.f32 0.0, %v1813
    %1815 = vdwg.mxu0
    %v1817 = vrot.slane %v1814, 6
    %v1819 = vadd.f32 %v1786, %v1817
    %v1820 = vld [vmem:[#allocation7] sm:$0xff]
    %v1821 = vld [vmem:[#allocation7 + $0x8] sm:$0xff]
    %v1822 = vld [vmem:[#allocation7 + $0x10] sm:$0xff]
    %v1823 = vld [vmem:[#allocation7 + $0x18] sm:$0xff]
    %1824 = vmatpush.msra.mxu0 0.0
    %1825 = vmatpush.msra.mxu0 0.0
    %1826 = vmatpush.msra.mxu0 0.0
    %1827 = vmatpush.msra.mxu0 0.0
    %1828 = vmatpush.msra.mxu0 0.0
    %1829 = vmatpush.msra.mxu0 0.0
    %1830 = vmatpush.msra.mxu0 0.0
    %1831 = vmatpush.msra.mxu0 0.0
    %1832 = vmatpush.msra.mxu0 0.0
    %1833 = vmatpush.msra.mxu0 0.0
    %1834 = vmatpush.msra.mxu0 0.0
    %1835 = vmatpush.msra.mxu0 0.0
    %1836 = vmatpush.msra.mxu0 %v1823
    %1837 = vmatpush.msra.mxu0 %v1822
    %1838 = vmatpush.msra.mxu0 %v1821
    %1839 = vmatpush.msra.mxu0 %v1820
    %1840 = vmatmul.f32.gmra.mxu0 %v1629
    %v1841 = vpop.f32.mrf.mxu0
    %v1842 = vadd.f32 0.0, %v1841
    %1843 = vdwg.mxu0
    %v1845 = vrot.slane %v1842, 6
    %v1847 = vadd.f32 %v1819, %v1845
    %v1848 = vmul.f32 %v1847, 0.5
    %v1849 = vtanh.pop %v1848
    %v1850 = vadd.f32 %v1849, 1.0
    %v1851 = vmul.f32 %v1850, 0.5
    %v1852 = vtanh.pop %v1847
    %v1854 = vrot.slane %v1611, 6
    %v1856 = vmul.f32 %v1851, %v1854
    %1858 = vrot.lane.b32.xlu0 %v1852, 64
    %v1859 = vpop.permute.xlu0 %1858
    %v1861 = vmul.f32 %v1851, %v1859
    %1863 = vrot.lane.b32.xlu0 %v1861, 32
    %v1864 = vpop.permute.xlu0 %1863
    %v1866 = vadd.f32 %v1856, %v1864
    %v1867 = vtanh.pop %v1866
    %1869 = vrot.lane.b32.xlu0 %v1867, 64
    %v1870 = vpop.permute.xlu0 %1869
    %v1872 = vmul.f32 %v1851, %v1870
    %v1873 = vld [vmem:[#allocation10] sm:$0xff]
    %v1874 = vld [vmem:[#allocation10 + $0x8] sm:$0xff]
    %v1875 = vld [vmem:[#allocation10 + $0x10] sm:$0xff]
    %v1876 = vld [vmem:[#allocation10 + $0x18] sm:$0xff]
    %v1877 = vld [vmem:[#allocation12] sm:$0x1]
    %v1879 = vperm.slane %v1877, 0
    %v1882 = vrot.slane %v1872, 2
    %1883 = vrot.lane.b32.xlu0 %v1882, 32
    %v1884 = vpop.permute.xlu0 %1883
    %v1885 = vsel %vm176, %v1884, 0
    %1887 = vmatpush.msra.mxu0 0.0
    %1888 = vmatpush.msra.mxu0 0.0
    %1889 = vmatpush.msra.mxu0 0.0
    %1890 = vmatpush.msra.mxu0 0.0
    %1891 = vmatpush.msra.mxu0 0.0
    %1892 = vmatpush.msra.mxu0 0.0
    %1893 = vmatpush.msra.mxu0 0.0
    %1894 = vmatpush.msra.mxu0 0.0
    %1895 = vmatpush.msra.mxu0 0.0
    %1896 = vmatpush.msra.mxu0 0.0
    %1897 = vmatpush.msra.mxu0 0.0
    %1898 = vmatpush.msra.mxu0 0.0
    %1899 = vmatpush.msra.mxu0 %v1876
    %1900 = vmatpush.msra.mxu0 %v1875
    %1901 = vmatpush.msra.mxu0 %v1874
    %1902 = vmatpush.msra.mxu0 %v1873
    %1903 = vmatmul.f32.gmra.mxu0 %v1885
    %v1904 = vpop.f32.mrf.mxu0
    %v1905 = vadd.f32 %v1879, %v1904
    %1906 = vdwg.mxu0
    %v1907 = vsel %vm627, %v1905, -inf
    %1908 = vmax.xlane.f32.xlu0 %v1907
    %v1909 = vpop.xlane.xlu0 %1908
    %v1910 = vsub.f32 %v1905, %v1909
    %v1911 = vmul.f32 %v1910, 1.442695
    %v1912 = vpow.pop %v1911
    %v1913 = vsel %vm627, %v1912, 0.0
    %1914 = vadd.xlane.f32.xlu0 %v1913
    %v1915 = vpop.xlane.xlu0 %1914
    %v1916 = vlog2.pop %v1915
    %v1917 = vmul.f32 %v1916, 0.6931472
    %v1918 = vsub.f32 %v1910, %v1917
    %s1919 = sld [smem:[#allocation2 + $0x5]]
    %p1920 = scmp.ne.s32.totalorder %s1919, 0
    %s1921 = scalar_select %p1920, 1, 0
    %v1922 = vstv %s1921
    %vm1923 = vcmp.eq.s32.totalorder %v1922, 1
    %v1924 = vsel %vm1923, %v1918, 0.0
    %s1925 = scalar_lea.vmem [#allocation13], 10
    %1926 = vst.msk [vmem:[%s1925] sm:$0x3] %vm627, %v1924
    %v1927 = vld [vmem:[%s11] sm:$0xff]
    %v1928 = vld [vmem:[%s11 + $0x8] sm:$0xff]
    %v1929 = vld [vmem:[%s11 + $0x10] sm:$0xff]
    %v1930 = vld [vmem:[%s11 + $0x18] sm:$0xff]
    %v1931 = vld [vmem:[%s12] sm:$0x1]
    %v1933 = vperm.slane %v1931, 0
    %1935 = vmatpush.msra.mxu0 0.0
    %1936 = vmatpush.msra.mxu0 0.0
    %1937 = vmatpush.msra.mxu0 0.0
    %1938 = vmatpush.msra.mxu0 0.0
    %1939 = vmatpush.msra.mxu0 0.0
    %1940 = vmatpush.msra.mxu0 0.0
    %1941 = vmatpush.msra.mxu0 0.0
    %1942 = vmatpush.msra.mxu0 0.0
    %1943 = vmatpush.msra.mxu0 0.0
    %1944 = vmatpush.msra.mxu0 0.0
    %1945 = vmatpush.msra.mxu0 0.0
    %1946 = vmatpush.msra.mxu0 0.0
    %1947 = vmatpush.msra.mxu0 %v1930
    %1948 = vmatpush.msra.mxu0 %v1929
    %1949 = vmatpush.msra.mxu0 %v1928
    %1950 = vmatpush.msra.mxu0 %v1927
    %1951 = vmatmul.f32.gmra.mxu0 %v1885
    %v1952 = vpop.f32.mrf.mxu0
    %v1953 = vadd.f32 %v1933, %v1952
    %1954 = vdwg.mxu0
    %v1956 = vrot.slane %v1953, 1
    %v1957 = vperm.slane %v1953, 0
    %v1958 = vperm.slane %v1956, 0
    %v1961 = vadd.f32 %v387, %v1957
    %v1962 = vadd.f32 %v390, %v1958
    %v1963 = vtanh.pop %v1961
    %v1964 = vtanh.pop %v1962
    %v1965 = vmul.f32 %v1963, %v435
    %v1966 = vmul.f32 %v1964, %v435
    %v1967 = vsel %vm176, %v1965, 0.0
    %1968 = vadd.xlane.f32.xlu0 %v1967
    %v1969 = vpop.xlane.xlu0 %1968
    %v1970 = vsel %vm176, %v1966, 0.0
    %1971 = vadd.xlane.f32.xlu0 %v1970
    %v1972 = vpop.xlane.xlu0 %1971
    %v1975 = vperm.slane %v1969, %v157
    %v1976 = vperm.slane %v1972, %v157
    %v1977 = vsel %vm449, %v1976, %v1975
    %v1979 = vsel %vm452, %v1977, -inf
    %1980 = vmax.xlane.f32.xlu0 %v1979
    %v1981 = vpop.xlane.xlu0 %1980
    %v1983 = vperm.slane %v1981, 0
    %v1984 = vperm.slane %v1981, 1
    %v1987 = vsub.f32 %v1969, %v1983
    %v1988 = vsub.f32 %v1972, %v1984
    %v1989 = vmul.f32 %v1987, 1.442695
    %v1990 = vpow.pop %v1989
    %v1991 = vmul.f32 %v1988, 1.442695
    %v1992 = vpow.pop %v1991
    %1995 = vset.pattern.permute.xlu0 0
    %1996 = vperm.xlu0 %1995, %v1990
    %v1997 = vpop.permute.xlu0 %1996
    %1998 = vset.pattern.permute.xlu0 0
    %1999 = vperm.xlu0 %1998, %v1992
    %v2000 = vpop.permute.xlu0 %1999
    %v2001 = vperm.slane %v1997, %v157
    %v2002 = vperm.slane %v2000, %v157
    %v2003 = vsel %vm449, %v2002, %v2001
    %v2005 = vsel %vm452, %v2003, 0.0
    %2006 = vadd.xlane.f32.xlu0 %v2005
    %v2007 = vpop.xlane.xlu0 %2006
    %v2008 = vrcp.pop %v2007
    %v2010 = vperm.slane %v2008, 0
    %v2011 = vperm.slane %v2008, 1
    %v2014 = vmul.f32 %v1990, %v2010
    %v2015 = vmul.f32 %v1992, %v2011
    %2017 = vset.pattern.permute.xlu0 0
    %2018 = vperm.xlu0 %2017, %v2014
    %v2019 = vpop.permute.xlu0 %2018
    %2022 = vset.pattern.permute.xlu0 0
    %2023 = vperm.xlu0 %2022, %v2015
    %v2024 = vpop.permute.xlu0 %2023
    %v2026 = vmul.f32 %v2019, %v353
    %v2027 = vmul.f32 %v2024, %v354
    %v2028 = vsel %vm176, %v2026, 0.0
    %v2029 = vrot.slane %v2028, 4
    %v2030 = vadd.f32 %v2028, %v2029
    %v2031 = vrot.slane %v2030, 2
    %v2032 = vadd.f32 %v2030, %v2031
    %v2033 = vrot.slane %v2032, 1
    %v2034 = vadd.f32 %v2032, %v2033
    %v2035 = vsel %vm176, %v2027, 0.0
    %v2036 = vrot.slane %v2035, 4
    %v2037 = vadd.f32 %v2035, %v2036
    %v2038 = vrot.slane %v2037, 2
    %v2039 = vadd.f32 %v2037, %v2038
    %v2040 = vrot.slane %v2039, 1
    %v2041 = vadd.f32 %v2039, %v2040
    %v2042 = vadd.f32 %v239, %v1021
    %v2043 = vld [vmem:[#allocation6] sm:$0xff]
    %v2044 = vld [vmem:[#allocation6 + $0x8] sm:$0xff]
    %v2045 = vld [vmem:[#allocation6 + $0x10] sm:$0xff]
    %v2046 = vld [vmem:[#allocation6 + $0x18] sm:$0xff]
    %v2049 = vsel %vm449, %v2041, %v2034
    %v2050 = vsel %vm176, %v2049, 0
    %2052 = vmatpush.msra.mxu0 0.0
    %2053 = vmatpush.msra.mxu0 0.0
    %2054 = vmatpush.msra.mxu0 0.0
    %2055 = vmatpush.msra.mxu0 0.0
    %2056 = vmatpush.msra.mxu0 0.0
    %2057 = vmatpush.msra.mxu0 0.0
    %2058 = vmatpush.msra.mxu0 0.0
    %2059 = vmatpush.msra.mxu0 0.0
    %2060 = vmatpush.msra.mxu0 0.0
    %2061 = vmatpush.msra.mxu0 0.0
    %2062 = vmatpush.msra.mxu0 0.0
    %2063 = vmatpush.msra.mxu0 0.0
    %2064 = vmatpush.msra.mxu0 %v2046
    %2065 = vmatpush.msra.mxu0 %v2045
    %2066 = vmatpush.msra.mxu0 %v2044
    %2067 = vmatpush.msra.mxu0 %v2043
    %2068 = vmatmul.f32.gmra.mxu0 %v2050
    %v2069 = vpop.f32.mrf.mxu0
    %v2070 = vadd.f32 0.0, %v2069
    %2071 = vdwg.mxu0
    %v2073 = vrot.slane %v2070, 4
    %v2075 = vadd.f32 %v2042, %v2073
    %v2076 = vld [vmem:[#allocation7] sm:$0xff]
    %v2077 = vld [vmem:[#allocation7 + $0x8] sm:$0xff]
    %v2078 = vld [vmem:[#allocation7 + $0x10] sm:$0xff]
    %v2079 = vld [vmem:[#allocation7 + $0x18] sm:$0xff]
    %2080 = vmatpush.msra.mxu0 0.0
    %2081 = vmatpush.msra.mxu0 0.0
    %2082 = vmatpush.msra.mxu0 0.0
    %2083 = vmatpush.msra.mxu0 0.0
    %2084 = vmatpush.msra.mxu0 0.0
    %2085 = vmatpush.msra.mxu0 0.0
    %2086 = vmatpush.msra.mxu0 0.0
    %2087 = vmatpush.msra.mxu0 0.0
    %2088 = vmatpush.msra.mxu0 0.0
    %2089 = vmatpush.msra.mxu0 0.0
    %2090 = vmatpush.msra.mxu0 0.0
    %2091 = vmatpush.msra.mxu0 0.0
    %2092 = vmatpush.msra.mxu0 %v2079
    %2093 = vmatpush.msra.mxu0 %v2078
    %2094 = vmatpush.msra.mxu0 %v2077
    %2095 = vmatpush.msra.mxu0 %v2076
    %2096 = vmatmul.f32.gmra.mxu0 %v1885
    %v2097 = vpop.f32.mrf.mxu0
    %v2098 = vadd.f32 0.0, %v2097
    %2099 = vdwg.mxu0
    %v2101 = vrot.slane %v2098, 4
    %v2103 = vadd.f32 %v2075, %v2101
    %v2104 = vmul.f32 %v2103, 0.5
    %v2105 = vtanh.pop %v2104
    %v2106 = vadd.f32 %v2105, 1.0
    %v2107 = vmul.f32 %v2106, 0.5
    %v2108 = vtanh.pop %v2103
    %v2110 = vrot.slane %v1866, 6
    %v2112 = vmul.f32 %v2107, %v2110
    %2114 = vrot.lane.b32.xlu0 %v2108, 64
    %v2115 = vpop.permute.xlu0 %2114
    %v2117 = vmul.f32 %v2107, %v2115
    %2119 = vrot.lane.b32.xlu0 %v2117, 32
    %v2120 = vpop.permute.xlu0 %2119
    %v2122 = vadd.f32 %v2112, %v2120
    %v2123 = vtanh.pop %v2122
    %2125 = vrot.lane.b32.xlu0 %v2123, 64
    %v2126 = vpop.permute.xlu0 %2125
    %v2128 = vmul.f32 %v2107, %v2126
    %v2129 = vld [vmem:[#allocation10] sm:$0xff]
    %v2130 = vld [vmem:[#allocation10 + $0x8] sm:$0xff]
    %v2131 = vld [vmem:[#allocation10 + $0x10] sm:$0xff]
    %v2132 = vld [vmem:[#allocation10 + $0x18] sm:$0xff]
    %v2133 = vld [vmem:[#allocation12] sm:$0x1]
    %v2135 = vperm.slane %v2133, 0
    %v2138 = vrot.slane %v2128, 4
    %2139 = vrot.lane.b32.xlu0 %v2138, 32
    %v2140 = vpop.permute.xlu0 %2139
    %v2141 = vsel %vm176, %v2140, 0
    %2143 = vmatpush.msra.mxu0 0.0
    %2144 = vmatpush.msra.mxu0 0.0
    %2145 = vmatpush.msra.mxu0 0.0
    %2146 = vmatpush.msra.mxu0 0.0
    %2147 = vmatpush.msra.mxu0 0.0
    %2148 = vmatpush.msra.mxu0 0.0
    %2149 = vmatpush.msra.mxu0 0.0
    %2150 = vmatpush.msra.mxu0 0.0
    %2151 = vmatpush.msra.mxu0 0.0
    %2152 = vmatpush.msra.mxu0 0.0
    %2153 = vmatpush.msra.mxu0 0.0
    %2154 = vmatpush.msra.mxu0 0.0
    %2155 = vmatpush.msra.mxu0 %v2132
    %2156 = vmatpush.msra.mxu0 %v2131
    %2157 = vmatpush.msra.mxu0 %v2130
    %2158 = vmatpush.msra.mxu0 %v2129
    %2159 = vmatmul.f32.gmra.mxu0 %v2141
    %v2160 = vpop.f32.mrf.mxu0
    %v2161 = vadd.f32 %v2135, %v2160
    %2162 = vdwg.mxu0
    %v2163 = vsel %vm627, %v2161, -inf
    %2164 = vmax.xlane.f32.xlu0 %v2163
    %v2165 = vpop.xlane.xlu0 %2164
    %v2166 = vsub.f32 %v2161, %v2165
    %v2167 = vmul.f32 %v2166, 1.442695
    %v2168 = vpow.pop %v2167
    %v2169 = vsel %vm627, %v2168, 0.0
    %2170 = vadd.xlane.f32.xlu0 %v2169
    %v2171 = vpop.xlane.xlu0 %2170
    %v2172 = vlog2.pop %v2171
    %v2173 = vmul.f32 %v2172, 0.6931472
    %v2174 = vsub.f32 %v2166, %v2173
    %s2175 = sld [smem:[#allocation2 + $0x6]]
    %p2176 = scmp.ne.s32.totalorder %s2175, 0
    %s2177 = scalar_select %p2176, 1, 0
    %v2178 = vstv %s2177
    %vm2179 = vcmp.eq.s32.totalorder %v2178, 1
    %v2180 = vsel %vm2179, %v2174, 0.0
    %s2181 = scalar_lea.vmem [#allocation13], 12
    %2182 = vst.msk [vmem:[%s2181] sm:$0x3] %vm627, %v2180
    // Predicated region
    $region110: #{att_model_forward.1} parent=1 // pred_check
      _
    $region111: #{att_model_forward.1} parent=1 // pred_check_branch
      %2184 = sbr.rel (0) target = $region113
    $region112: #{att_model_forward.1} parent=1 // pred_region
      %2186 = vsyncadd [#allocation4], 0
      %s2187 = sshll.u32 [#allocation13], 4
      %s2188 = int_to_ptr.vmem [resolvable:$true] %s2187
      %s2189 = sshll.u32 %s21, 4
      %s2190 = int_to_ptr.hbm [resolvable:$true] %s2189
      %2195 = dma.vmem_to_hbm [thread:$0]  %s2188, 224, %s2190, [#allocation4], 32, 32, 2
    $region113: #{att_model_forward.1} parent=1 // pred_fallthru
      _
    // Predicated region
    $region114: #{att_model_forward.1} parent=1 // pred_check
      _
    $region115: #{att_model_forward.1} parent=1 // pred_check_branch
      %2197 = sbr.rel (0) target = $region117
    $region116: #{att_model_forward.1} parent=1 // pred_region
      %2199 = dma.done [#allocation4], 224
    $region117: #{att_model_forward.1} parent=1 // pred_fallthru
      _
    %2200 = vsyncpa [#allocation3], 1
    %2201 = vsyncpa [#allocation8], 1
    %2202 = vsyncpa [#allocation11], 1
    %2203 = vsyncpa [#allocation4], 1
    %2204 = vsyncpa [#allocation5], 1

</llo_original>
